<compile_context>
chip_gen: v6e
topology: v6e:2x2x1
jax: 0.10.0
libtpu: 0.0.40
codegen_flags: <defaults>
</compile_context>

<pallas_src>
import jax
import jax.numpy as jnp
from jax import lax
from jax.experimental import pallas as pl
from jax.experimental.pallas import tpu as pltpu

EPS = 1e-8

# Set to jnp.bfloat16 on v6e / v7x for ~2x MXU throughput on the speaker distance
# matmul (and optionally cast spk_vector to bf16 in the wrapper to halve its HBM
# traffic).  Keep f32 here for bit-accurate comparison against the f32 reference.
# On v5e, keep all elementwise / logsumexp math in f32 regardless (no bf16 VPU/EUP);
# only the matmul operands may be bf16.
_MATMUL_DTYPE = jnp.float32


def _round_up(x, m):
    return ((x + m - 1) // m) * m


# ----------------------------------------------------------------------------- #
# Kernel 1: negative SI-SDR on a (rows = B*S padded to 8, T) layout.
#   grid = (rows / RB  [parallel],  ceil(T / TB)  [arbitrary reduction])
#   Accumulate sum(x*x), sum(x*t), sum(t*t) per row; finalize SI-SDR from moments.
#   The last T tile may be partial; out-of-range columns are masked in-kernel.
# ----------------------------------------------------------------------------- #
def _pick_time_tile(T):
    if T >= 2048:
        return 2048
    if T >= 128:
        return (T // 128) * 128
    return T


def _pick_row_block(r_pad):
    # r_pad is a multiple of 8.  Prefer the largest block that still leaves >= 2
    # blocks on the parallel axis (both TensorCores busy on v7x).
    for rb in (64, 32, 16, 8):
        if r_pad % rb == 0 and r_pad // rb >= 2:
            return rb
    return 8


def _make_sisdr_kernel(t_total, tile_t, mask_time):
    def kernel(x_ref, t_ref, o_ref, xx_sc, xt_sc, tt_sc):
        ti = pl.program_id(1)

        @pl.when(ti == 0)
        def _():
            xx_sc[...] = jnp.zeros_like(xx_sc)
            xt_sc[...] = jnp.zeros_like(xt_sc)
            tt_sc[...] = jnp.zeros_like(tt_sc)

        x = x_ref[...]                                           # (RB, TB)
        t = t_ref[...]                                           # (RB, TB)
        if mask_time:
            # Partial last tile: zero the out-of-range columns (NaN-safe select).
            col = ti * tile_t + lax.broadcasted_iota(jnp.int32, x.shape, 1)
            valid = col < t_total
            x = jnp.where(valid, x, 0.0)
            t = jnp.where(valid, t, 0.0)

        xx_sc[...] += jnp.sum(x * x, axis=-1, keepdims=True)     # (RB, 1)
        xt_sc[...] += jnp.sum(x * t, axis=-1, keepdims=True)
        tt_sc[...] += jnp.sum(t * t, axis=-1, keepdims=True)

        @pl.when(ti == pl.num_programs(1) - 1)
        def _():
            xx = xx_sc[...]
            xt = xt_sc[...]
            tt = tt_sc[...]
            alpha = xt / (tt + EPS)
            num = alpha * alpha * tt                 # ||alpha * t||^2
            den = xx - 2.0 * alpha * xt + num        # ||x - alpha * t||^2 (from moments)
            o_ref[...] = -10.0 * jnp.log10((num + EPS) / (den + EPS))

    return kernel


def neg_sisdr_per_source(x, t):
    """x, t: (B, S, T) float32 -> (B, S) negative SI-SDR."""
    B, S, T = x.shape
    R = B * S
    x2 = x.reshape(R, T)                 # metadata-only (merges leading dims)
    t2 = t.reshape(R, T)

    # Sublane packing: pad rows to a multiple of 8.  No copy when B*S is already
    # a multiple of 8 (the common training case); padded rows produce a finite 0
    # and are sliced off below.
    R_pad = _round_up(R, 8)
    if R_pad != R:
        x2 = jnp.pad(x2, ((0, R_pad - R), (0, 0)))
        t2 = jnp.pad(t2, ((0, R_pad - R), (0, 0)))

    RB = _pick_row_block(R_pad)
    TB = _pick_time_tile(T)
    n_t = pl.cdiv(T, TB)                 # last tile may be partial -> masked in-kernel
    mask_time = (T % TB) != 0

    cost = pl.CostEstimate(
        flops=6 * R_pad * T,
        transcendentals=R_pad,
        bytes_accessed=2 * R_pad * T * 4 + R_pad * 4)

    out = pl.pallas_call(
        _make_sisdr_kernel(T, TB, mask_time),
        out_shape=jax.ShapeDtypeStruct((R_pad, 1), jnp.float32),
        grid_spec=pltpu.PrefetchScalarGridSpec(
            num_scalar_prefetch=0,
            grid=(R_pad // RB, n_t),
            in_specs=[
                pl.BlockSpec((RB, TB), lambda r, ti: (r, ti)),
                pl.BlockSpec((RB, TB), lambda r, ti: (r, ti)),
            ],
            out_specs=pl.BlockSpec((RB, 1), lambda r, ti: (r, 0)),
            scratch_shapes=[pltpu.VMEM((RB, 1), jnp.float32)] * 3,
        ),
        compiler_params=pltpu.CompilerParams(
            dimension_semantics=("parallel", "arbitrary")),
        cost_estimate=cost,
    )(x2, t2)
    return out[:R, 0].reshape(B, S)


# ----------------------------------------------------------------------------- #
# Kernel 2: Wavesplit speaker loss.
#   loss[b, s] = mean_t [ ||v[b,s,t] - e[b,s]||^2 + logsumexp_n(-||v[b,s,t] - E_n||^2) ]
#              = mean_t [ ||e||^2 - 2 v.e + logsumexp_n(2 v.E_n - ||E_n||^2) ]
#   (the ||v||^2 terms cancel).  spk_vector is consumed feature-first (B,S,D,Tf).
#   Per row r = (b,s), the RHS table W_r = [E_1..E_N | e_r | 0...]  (D, N_pad), so one
#   MXU matmul per chunk yields both 2 v.E_n and v.e; the e / pad columns are masked
#   out of the logsumexp with ||.||^2 = +inf.
# ----------------------------------------------------------------------------- #
def _pick_frame_tile(Tf):
    if Tf >= 1024:
        return 1024
    if Tf >= 512:
        return 512
    if Tf >= 128:
        return (Tf // 128) * 128
    return Tf


def _make_speaker_kernel(tile, chunk, tf_total, n_real, matmul_dtype):
    inv_tf = 1.0 / float(tf_total)
    n_chunks = tile // chunk
    mask_frames = (tf_total % tile) != 0

    def kernel(v_ref, w_ref, e2_ref, d2_ref, o_ref, acc_ref):
        tf_idx = pl.program_id(1)

        @pl.when(tf_idx == 0)
        def _():
            acc_ref[...] = jnp.zeros_like(acc_ref)

        W = w_ref[0]                        # (D, N_pad) row table, already matmul dtype
        D2 = d2_ref[...]                    # (1, N_pad) f32: ||E_n||^2, +inf for e/pad cols
        e2 = e2_ref[...].reshape(1, 1)      # ||e_r||^2 (f32)
        frame_base = tf_idx * tile

        def chunk_body(c, carry):
            start = pl.multiple_of(c * chunk, chunk)
            v_c = v_ref[0, :, pl.ds(start, chunk)].astype(matmul_dtype)   # (D, CHUNK)

            # One MXU matmul (transposed-lhs contraction over D, no transpose op):
            # columns 0..N-1 give v.E_n, column N gives v.e.
            cross = lax.dot_general(
                v_c, W, (((0,), (0,)), ((), ())),
                preferred_element_type=jnp.float32)                        # (CHUNK, N_pad)
            ve = cross[:, n_real:n_real + 1]                               # (CHUNK, 1) v.e

            logits = 2.0 * cross - D2          # e / padded speakers -> -inf
            m = jnp.max(logits, axis=-1, keepdims=True)                    # (CHUNK, 1)
            lse = m + jnp.log(
                jnp.sum(jnp.exp(logits - m), axis=-1, keepdims=True))      # (CHUNK, 1)

            loss = e2 - 2.0 * ve + lse                                     # per-frame loss
            if mask_frames:
                fidx = (frame_base + start
                        + lax.broadcasted_iota(jnp.int32, (chunk, 1), 0))
                loss = jnp.where(fidx < tf_total, loss, 0.0)               # NaN-safe select
            return carry + jnp.sum(loss)

        total = lax.fori_loop(0, n_chunks, chunk_body,
                              jnp.zeros((), jnp.float32), unroll=True)
        acc_ref[...] += total

        @pl.when(tf_idx == pl.num_programs(1) - 1)
        def _():
            o_ref[...] = (acc_ref[...] * inv_tf).reshape(1, 1, 1)

    return kernel


def speaker_loss_per_source(spk_vector, spk_embedding, all_spk_embedding,
                            matmul_dtype=_MATMUL_DTYPE):
    """
    spk_vector        : (B, S, D, Tf)  (feature_last=False, consumed directly)
    spk_embedding     : (B, S, D)
    all_spk_embedding : (N, D)
    returns           : (B, S) per-source speaker loss (mean over frames)
    """
    B, S, D, Tf = spk_vector.shape
    R = B * S
    N = all_spk_embedding.shape[0]
    N_pad = _round_up(N + 1, 128)        # always >= 1 free column for e_r

    # Hoisted speaker-table work (done once by XLA, including the matmul-dtype cast).
    E_T = jnp.transpose(all_spk_embedding).astype(jnp.float32)            # (D, N)
    tbl_sq = jnp.sum(all_spk_embedding.astype(jnp.float32) ** 2, axis=-1)  # (N,)
    D2 = jnp.concatenate(
        [tbl_sq, jnp.full((N_pad - N,), jnp.inf, jnp.float32)]).reshape(1, N_pad)

    # Per-row RHS table: columns [0, N) = speaker table, column N = e_r, rest zero.
    e2d = spk_embedding.reshape(R, D).astype(jnp.float32)                  # (R, D)
    W = jnp.zeros((R, D, N_pad), jnp.float32)
    W = W.at[:, :, :N].set(E_T[None, :, :])
    W = W.at[:, :, N].set(e2d)
    W = W.astype(matmul_dtype)

    e2_arr = jnp.sum(e2d * e2d, axis=-1).reshape(R, 1, 1)                  # ||e_r||^2

    # S folded into the grid: metadata-only reshape of the big tensor.
    v3 = spk_vector.reshape(R, D, Tf)                                      # (R, D, Tf)

    TILE = _pick_frame_tile(Tf)          # big DMA block (amortizes per-step overhead)
    CHUNK = min(128, TILE)               # small-live-range inner chunks (vreg pressure)
    n_tf = pl.cdiv(Tf, TILE)             # last tile may be partial -> masked in-kernel

    cost = pl.CostEstimate(
        flops=2 * R * n_tf * TILE * D * N_pad,
        transcendentals=R * n_tf * TILE * (N_pad + 1),
        bytes_accessed=(R * D * Tf * spk_vector.dtype.itemsize
                        + R * D * N_pad * jnp.dtype(matmul_dtype).itemsize
                        + N_pad * 4 + R * 8))

    out = pl.pallas_call(
        _make_speaker_kernel(TILE, CHUNK, Tf, N, matmul_dtype),
        out_shape=jax.ShapeDtypeStruct((R, 1, 1), jnp.float32),
        grid_spec=pltpu.PrefetchScalarGridSpec(
            num_scalar_prefetch=0,
            grid=(R, n_tf),
            in_specs=[
                pl.BlockSpec((1, D, TILE), lambda r, tf: (r, 0, tf)),
                pl.BlockSpec((1, D, N_pad), lambda r, tf: (r, 0, 0)),
                pl.BlockSpec((1, 1, 1), lambda r, tf: (r, 0, 0)),
                pl.BlockSpec((1, N_pad), lambda r, tf: (0, 0)),
            ],
            out_specs=pl.BlockSpec((1, 1, 1), lambda r, tf: (r, 0, 0)),
            scratch_shapes=[pltpu.VMEM((1, 1), jnp.float32)],
        ),
        compiler_params=pltpu.CompilerParams(
            dimension_semantics=("parallel", "arbitrary")),
        cost_estimate=cost,
    )(v3, W, e2_arr, D2)
    return out[:, 0, 0].reshape(B, S)


# ----------------------------------------------------------------------------- #
# MultiDomainLoss forward (glue)
# ----------------------------------------------------------------------------- #
def multi_domain_loss(input, target, spk_vector, spk_embedding, all_spk_embedding,
                      batch_mean=True):
    """
    input, target     : (B, S, T)
    spk_vector        : (B, S, D, Tf)   (feature_last=False, as in the PyTorch call)
    spk_embedding     : (B, S, D)
    all_spk_embedding : (N, D)
    """
    loss_reconst = jnp.mean(neg_sisdr_per_source(input, target), axis=-1)           # (B,)
    loss_speaker = jnp.mean(
        speaker_loss_per_source(spk_vector, spk_embedding, all_spk_embedding),
        axis=-1)                                                                     # (B,)
    loss = loss_reconst + loss_speaker
    # TODO(synk): reg_criterion is None in the wavesplit recipe -> no regularization term.
    if batch_mean:
        loss = jnp.mean(loss)
    return loss


# ----------------------------------------------------------------------------- #
# Pure-JAX reference for sanity checking
# ----------------------------------------------------------------------------- #
def _reference(input, target, spk_vector, spk_embedding, all_spk_embedding):
    dot = jnp.sum(input * target, axis=-1, keepdims=True)
    alpha = dot / (jnp.sum(target * target, axis=-1, keepdims=True) + EPS)
    proj = alpha * target
    noise = input - proj
    sisdr = 10.0 * jnp.log10(
        (jnp.sum(proj**2, -1) + EPS) / (jnp.sum(noise**2, -1) + EPS))
    l_rec = jnp.mean(-sisdr, axis=-1)

    v = jnp.transpose(spk_vector, (0, 1, 3, 2))                  # (B,S,Tf,D)
    d_correct = jnp.sum((v - spk_embedding[:, :, None, :])**2, -1)
    d_all = jnp.sum(
        (v[:, :, :, None, :] - all_spk_embedding[None, None, None, :, :])**2, -1)
    lse = jax.scipy.special.logsumexp(-d_all, axis=-1)
    l_spk = jnp.mean(d_correct + lse, axis=(-1, -2))
    return jnp.mean(l_rec + l_spk)


if __name__ == "__main__":
    key = jax.random.PRNGKey(0)
    # Small but representative: T and Tf deliberately NOT tile multiples so the
    # partial-block masking paths are exercised.
    B, S, T = 2, 2, 8000       # batch, sources, waveform length
    Tf, D, N = 1000, 64, 16    # speaker-stack frames, latent dim, # speakers in table

    k1, k2, k3, k4, k5 = jax.random.split(key, 5)
    input_ = jax.random.normal(k1, (B, S, T), dtype=jnp.float32)
    target = jax.random.normal(k2, (B, S, T), dtype=jnp.float32)
    spk_vector = jax.random.normal(k3, (B, S, D, Tf), dtype=jnp.float32)
    spk_embedding = jax.random.normal(k4, (B, S, D), dtype=jnp.float32)
    all_spk_embedding = jax.random.normal(k5, (N, D), dtype=jnp.float32)

    loss = jax.jit(multi_domain_loss)(
        input_, target, spk_vector, spk_embedding, all_spk_embedding)
    loss = jax.block_until_ready(loss)

    ref = _reference(input_, target, spk_vector, spk_embedding, all_spk_embedding)
    assert jnp.allclose(loss, ref, rtol=1e-4, atol=1e-3), (loss, ref)

    print("KERNEL_OK")
</pallas_src>

<mosaic_0001>
module attributes {stable_mosaic.version = 11 : i64} {
  func.func @kernel(%arg0: i32, %arg1: i32, %arg2: memref<8x2048xf32, #tpu.memory_space<vmem>>, %arg3: memref<8x2048xf32, #tpu.memory_space<vmem>>, %arg4: memref<8x1xf32, #tpu.memory_space<vmem>>, %arg5: memref<8x1xf32, #tpu.memory_space<vmem>>, %arg6: memref<8x1xf32, #tpu.memory_space<vmem>>, %arg7: memref<8x1xf32, #tpu.memory_space<vmem>>) attributes {dimension_semantics = [#tpu.dimension_semantics<parallel>, #tpu.dimension_semantics<arbitrary>], iteration_bounds = array<i64: 1, 4>, scalar_prefetch = 0 : i64, scratch_operands = 3 : i64, tpu.core_type = #tpu.core_type<tc>, window_params = [{transform_indices = @transform_0, window_bounds = array<i64: 8, 2048>}, {transform_indices = @transform_1, window_bounds = array<i64: 8, 2048>}, {transform_indices = @transform_2, window_bounds = array<i64: 8, 1>}]} {
    %c0_i32 = arith.constant 0 : i32
    %0 = arith.cmpi eq, %arg1, %c0_i32 : i32
    %1 = arith.extui %0 : i1 to i32
    %c0_i32_0 = arith.constant 0 : i32
    %2 = arith.cmpi ne, %1, %c0_i32_0 : i32
    scf.if %2 {
      %cst_21 = arith.constant 0.000000e+00 : f32
      %36 = vector.broadcast %cst_21 : f32 to vector<8x1xf32>
      %c0_22 = arith.constant 0 : index
      %c0_23 = arith.constant 0 : index
      %37 = vector.load %arg5[%c0_22, %c0_23] : memref<8x1xf32, #tpu.memory_space<vmem>>, vector<8x1xf32>
      tpu.vector_store %arg5[%c0_22, %c0_23], %36 {strides = array<i32>} : memref<8x1xf32, #tpu.memory_space<vmem>>, vector<8x1xf32>,
      %cst_24 = arith.constant 0.000000e+00 : f32
      %38 = vector.broadcast %cst_24 : f32 to vector<8x1xf32>
      %c0_25 = arith.constant 0 : index
      %c0_26 = arith.constant 0 : index
      %39 = vector.load %arg6[%c0_25, %c0_26] : memref<8x1xf32, #tpu.memory_space<vmem>>, vector<8x1xf32>
      tpu.vector_store %arg6[%c0_25, %c0_26], %38 {strides = array<i32>} : memref<8x1xf32, #tpu.memory_space<vmem>>, vector<8x1xf32>,
      %cst_27 = arith.constant 0.000000e+00 : f32
      %40 = vector.broadcast %cst_27 : f32 to vector<8x1xf32>
      %c0_28 = arith.constant 0 : index
      %c0_29 = arith.constant 0 : index
      %41 = vector.load %arg7[%c0_28, %c0_29] : memref<8x1xf32, #tpu.memory_space<vmem>>, vector<8x1xf32>
      tpu.vector_store %arg7[%c0_28, %c0_29], %40 {strides = array<i32>} : memref<8x1xf32, #tpu.memory_space<vmem>>, vector<8x1xf32>,
    } else {
    }
    %c0 = arith.constant 0 : index
    %c0_1 = arith.constant 0 : index
    %3 = vector.load %arg2[%c0, %c0_1] : memref<8x2048xf32, #tpu.memory_space<vmem>>, vector<8x2048xf32>
    %c0_2 = arith.constant 0 : index
    %c0_3 = arith.constant 0 : index
    %4 = vector.load %arg3[%c0_2, %c0_3] : memref<8x2048xf32, #tpu.memory_space<vmem>>, vector<8x2048xf32>
    %c2048_i32 = arith.constant 2048 : i32
    %5 = arith.muli %arg1, %c2048_i32 : i32
    %6 = tpu.iota {dimensions = array<i32: 1>} : vector<8x2048xi32>
    %7 = vector.broadcast %5 : i32 to vector<8x2048xi32>
    %8 = arith.addi %7, %6 : vector<8x2048xi32>
    %c8000_i32 = arith.constant 8000 : i32
    %9 = vector.broadcast %c8000_i32 : i32 to vector<8x2048xi32>
    %10 = arith.cmpi slt, %8, %9 : vector<8x2048xi32>
    %cst = arith.constant 0.000000e+00 : f32
    %11 = vector.broadcast %cst : f32 to vector<8x2048xf32>
    %12 = arith.select %10, %3, %11 : vector<8x2048xi1>, vector<8x2048xf32>
    %cst_4 = arith.constant 0.000000e+00 : f32
    %13 = vector.broadcast %cst_4 : f32 to vector<8x2048xf32>
    %14 = arith.select %10, %4, %13 : vector<8x2048xi1>, vector<8x2048xf32>
    %c0_5 = arith.constant 0 : index
    %c0_6 = arith.constant 0 : index
    %15 = vector.load %arg5[%c0_5, %c0_6] : memref<8x1xf32, #tpu.memory_space<vmem>>, vector<8x1xf32>
    %16 = arith.mulf %12, %12 : vector<8x2048xf32>
    %cst_7 = arith.constant dense<0.000000e+00> : vector<8xf32>
    %17 = vector.multi_reduction <add>, %16, %cst_7 [1] : vector<8x2048xf32> to vector<8xf32>
    %18 = vector.shape_cast %17 : vector<8xf32> to vector<8x1xf32>
    %19 = arith.addf %15, %18 : vector<8x1xf32>
    %c0_8 = arith.constant 0 : index
    %c0_9 = arith.constant 0 : index
    %20 = vector.load %arg5[%c0_8, %c0_9] : memref<8x1xf32, #tpu.memory_space<vmem>>, vector<8x1xf32>
    tpu.vector_store %arg5[%c0_8, %c0_9], %19 {strides = array<i32>} : memref<8x1xf32, #tpu.memory_space<vmem>>, vector<8x1xf32>,
    %c0_10 = arith.constant 0 : index
    %c0_11 = arith.constant 0 : index
    %21 = vector.load %arg6[%c0_10, %c0_11] : memref<8x1xf32, #tpu.memory_space<vmem>>, vector<8x1xf32>
    %22 = arith.mulf %12, %14 : vector<8x2048xf32>
    %cst_12 = arith.constant dense<0.000000e+00> : vector<8xf32>
    %23 = vector.multi_reduction <add>, %22, %cst_12 [1] : vector<8x2048xf32> to vector<8xf32>
    %24 = vector.shape_cast %23 : vector<8xf32> to vector<8x1xf32>
    %25 = arith.addf %21, %24 : vector<8x1xf32>
    %c0_13 = arith.constant 0 : index
    %c0_14 = arith.constant 0 : index
    %26 = vector.load %arg6[%c0_13, %c0_14] : memref<8x1xf32, #tpu.memory_space<vmem>>, vector<8x1xf32>
    tpu.vector_store %arg6[%c0_13, %c0_14], %25 {strides = array<i32>} : memref<8x1xf32, #tpu.memory_space<vmem>>, vector<8x1xf32>,
    %c0_15 = arith.constant 0 : index
    %c0_16 = arith.constant 0 : index
    %27 = vector.load %arg7[%c0_15, %c0_16] : memref<8x1xf32, #tpu.memory_space<vmem>>, vector<8x1xf32>
    %28 = arith.mulf %14, %14 : vector<8x2048xf32>
    %cst_17 = arith.constant dense<0.000000e+00> : vector<8xf32>
    %29 = vector.multi_reduction <add>, %28, %cst_17 [1] : vector<8x2048xf32> to vector<8xf32>
    %30 = vector.shape_cast %29 : vector<8xf32> to vector<8x1xf32>
    %31 = arith.addf %27, %30 : vector<8x1xf32>
    %c0_18 = arith.constant 0 : index
    %c0_19 = arith.constant 0 : index
    %32 = vector.load %arg7[%c0_18, %c0_19] : memref<8x1xf32, #tpu.memory_space<vmem>>, vector<8x1xf32>
    tpu.vector_store %arg7[%c0_18, %c0_19], %31 {strides = array<i32>} : memref<8x1xf32, #tpu.memory_space<vmem>>, vector<8x1xf32>,
    %c3_i32 = arith.constant 3 : i32
    %33 = arith.cmpi eq, %arg1, %c3_i32 : i32
    %34 = arith.extui %33 : i1 to i32
    %c0_i32_20 = arith.constant 0 : i32
    %35 = arith.cmpi ne, %34, %c0_i32_20 : i32
    scf.if %35 {
      %c0_21 = arith.constant 0 : index
      %c0_22 = arith.constant 0 : index
      %36 = vector.load %arg5[%c0_21, %c0_22] : memref<8x1xf32, #tpu.memory_space<vmem>>, vector<8x1xf32>
      %c0_23 = arith.constant 0 : index
      %c0_24 = arith.constant 0 : index
      %37 = vector.load %arg6[%c0_23, %c0_24] : memref<8x1xf32, #tpu.memory_space<vmem>>, vector<8x1xf32>
      %c0_25 = arith.constant 0 : index
      %c0_26 = arith.constant 0 : index
      %38 = vector.load %arg7[%c0_25, %c0_26] : memref<8x1xf32, #tpu.memory_space<vmem>>, vector<8x1xf32>
      %cst_27 = arith.constant 9.99999993E-9 : f32
      %39 = vector.broadcast %cst_27 : f32 to vector<8x1xf32>
      %40 = arith.addf %38, %39 : vector<8x1xf32>
      %41 = arith.divf %37, %40 : vector<8x1xf32>
      %42 = arith.mulf %41, %41 : vector<8x1xf32>
      %43 = arith.mulf %42, %38 : vector<8x1xf32>
      %cst_28 = arith.constant 2.000000e+00 : f32
      %44 = vector.broadcast %cst_28 : f32 to vector<8x1xf32>
      %45 = arith.mulf %44, %41 : vector<8x1xf32>
      %46 = arith.mulf %45, %37 : vector<8x1xf32>
      %47 = arith.subf %36, %46 : vector<8x1xf32>
      %48 = arith.addf %47, %43 : vector<8x1xf32>
      %cst_29 = arith.constant 9.99999993E-9 : f32
      %49 = vector.broadcast %cst_29 : f32 to vector<8x1xf32>
      %50 = arith.addf %43, %49 : vector<8x1xf32>
      %cst_30 = arith.constant 9.99999993E-9 : f32
      %51 = vector.broadcast %cst_30 : f32 to vector<8x1xf32>
      %52 = arith.addf %48, %51 : vector<8x1xf32>
      %53 = arith.divf %50, %52 : vector<8x1xf32>
      %54 = math.log %53 : vector<8x1xf32>
      %cst_31 = arith.constant 0.434294492 : f32
      %55 = vector.broadcast %cst_31 : f32 to vector<8x1xf32>
      %56 = arith.mulf %54, %55 : vector<8x1xf32>
      %cst_32 = arith.constant -1.000000e+01 : f32
      %57 = vector.broadcast %cst_32 : f32 to vector<8x1xf32>
      %58 = arith.mulf %57, %56 : vector<8x1xf32>
      %c0_33 = arith.constant 0 : index
      %c0_34 = arith.constant 0 : index
      %59 = vector.load %arg4[%c0_33, %c0_34] : memref<8x1xf32, #tpu.memory_space<vmem>>, vector<8x1xf32>
      tpu.vector_store %arg4[%c0_33, %c0_34], %58 {strides = array<i32>} : memref<8x1xf32, #tpu.memory_space<vmem>>, vector<8x1xf32>,
    } else {
    }
    return
  }
  func.func @transform_0(%arg0: i32, %arg1: i32) -> (i32, i32) {
    %c0_i32 = arith.constant 0 : i32
    return %arg0, %arg1 : i32, i32
  }
  func.func @transform_1(%arg0: i32, %arg1: i32) -> (i32, i32) {
    %c0_i32 = arith.constant 0 : i32
    return %arg0, %arg1 : i32, i32
  }
  func.func @transform_2(%arg0: i32, %arg1: i32) -> (i32, i32) {
    %c0_i32 = arith.constant 0 : i32
    %c0_i32_0 = arith.constant 0 : i32
    return %arg0, %c0_i32 : i32, i32
  }
}

module attributes {stable_mosaic.version = 11 : i64} {
  func.func @kernel(%arg0: i32, %arg1: i32, %arg2: memref<1x64x512xf32, #tpu.memory_space<vmem>>, %arg3: memref<1x64x128xf32, #tpu.memory_space<vmem>>, %arg4: memref<1x1x1xf32, #tpu.memory_space<vmem>>, %arg5: memref<1x128xf32, #tpu.memory_space<vmem>>, %arg6: memref<1x1x1xf32, #tpu.memory_space<vmem>>, %arg7: memref<1x1xf32, #tpu.memory_space<vmem>>) attributes {dimension_semantics = [#tpu.dimension_semantics<parallel>, #tpu.dimension_semantics<arbitrary>], iteration_bounds = array<i64: 4, 2>, scalar_prefetch = 0 : i64, scratch_operands = 1 : i64, tpu.core_type = #tpu.core_type<tc>, window_params = [{transform_indices = @transform_0, window_bounds = array<i64: 1, 64, 512>}, {transform_indices = @transform_1, window_bounds = array<i64: 1, 64, 128>}, {transform_indices = @transform_2, window_bounds = array<i64: 1, 1, 1>}, {pipeline_mode = #tpu.pipeline_mode<synchronous>, transform_indices = @transform_3, window_bounds = array<i64: 1, 128>}, {transform_indices = @transform_4, window_bounds = array<i64: 1, 1, 1>}]} {
    %c0_i32 = arith.constant 0 : i32
    %0 = arith.cmpi eq, %arg1, %c0_i32 : i32
    %1 = arith.extui %0 : i1 to i32
    %c0_i32_0 = arith.constant 0 : i32
    %2 = arith.cmpi ne, %1, %c0_i32_0 : i32
    scf.if %2 {
      %cst_57 = arith.constant 0.000000e+00 : f32
      %168 = vector.broadcast %cst_57 : f32 to vector<1x1xf32>
      %c0_58 = arith.constant 0 : index
      %c0_59 = arith.constant 0 : index
      %169 = vector.load %arg7[%c0_58, %c0_59] : memref<1x1xf32, #tpu.memory_space<vmem>>, vector<1x1xf32>
      tpu.vector_store %arg7[%c0_58, %c0_59], %168 {strides = array<i32>} : memref<1x1xf32, #tpu.memory_space<vmem>>, vector<1x1xf32>,
    } else {
    }
    %c0 = arith.constant 0 : index
    %c0_1 = arith.constant 0 : index
    %c0_2 = arith.constant 0 : index
    %3 = vector.load %arg3[%c0, %c0_1, %c0_2] : memref<1x64x128xf32, #tpu.memory_space<vmem>>, vector<1x64x128xf32>
    %4 = vector.shape_cast %3 : vector<1x64x128xf32> to vector<64x128xf32>
    %c0_3 = arith.constant 0 : index
    %c0_4 = arith.constant 0 : index
    %5 = vector.load %arg5[%c0_3, %c0_4] : memref<1x128xf32, #tpu.memory_space<vmem>>, vector<1x128xf32>
    %c0_5 = arith.constant 0 : index
    %c0_6 = arith.constant 0 : index
    %c0_7 = arith.constant 0 : index
    %6 = vector.load %arg4[%c0_5, %c0_6, %c0_7] : memref<1x1x1xf32, #tpu.memory_space<vmem>>, vector<1x1x1xf32>
    %7 = vector.shape_cast %6 : vector<1x1x1xf32> to vector<1x1xf32>
    %c512_i32 = arith.constant 512 : i32
    %8 = arith.muli %arg1, %c512_i32 : i32
    %cst = arith.constant 0.000000e+00 : f32
    %c0_i32_8 = arith.constant 0 : i32
    %c128_i32 = arith.constant 128 : i32
    %9 = arith.muli %c0_i32_8, %c128_i32 : i32
    %10 = tpu.assume_multiple %9, 128 : i32
    %c0_9 = arith.constant 0 : index
    %c0_10 = arith.constant 0 : index
    %11 = arith.index_cast %10 : i32 to index
    %12 = vector.load %arg2[%c0_9, %c0_10, %11] : memref<1x64x512xf32, #tpu.memory_space<vmem>>, vector<1x64x128xf32>
    %13 = vector.shape_cast %12 : vector<1x64x128xf32> to vector<64x128xf32>
    %cst_11 = arith.constant dense<0.000000e+00> : vector<128x128xf32>
    %14 = tpu.matmul %13, %4, %cst_11 {dimension_numbers = #tpu.dot_dimension_numbers<[0], [0], [1], [1], [0, 1, 1, 1], [], []>} : vector<64x128xf32>, vector<64x128xf32>, vector<128x128xf32> -> vector<128x128xf32>
    %15 = vector.extract_strided_slice %14 {offsets = [0, 16], sizes = [128, 1], strides = [1, 1]} : vector<128x128xf32> to vector<128x1xf32>
    %cst_12 = arith.constant 2.000000e+00 : f32
    %16 = vector.broadcast %cst_12 : f32 to vector<128x128xf32>
    %17 = arith.mulf %16, %14 : vector<128x128xf32>
    %18 = vector.broadcast %5 : vector<1x128xf32> to vector<128x128xf32>
    %19 = arith.subf %17, %18 : vector<128x128xf32>
    %cst_13 = arith.constant dense<0xFF800000> : vector<128xf32>
    %20 = vector.multi_reduction <maximumf>, %19, %cst_13 [1] : vector<128x128xf32> to vector<128xf32>
    %21 = vector.shape_cast %20 : vector<128xf32> to vector<128x1xf32>
    %22 = vector.broadcast %21 : vector<128x1xf32> to vector<128x128xf32>
    %23 = arith.subf %19, %22 : vector<128x128xf32>
    %24 = math.exp %23 : vector<128x128xf32>
    %cst_14 = arith.constant dense<0.000000e+00> : vector<128xf32>
    %25 = vector.multi_reduction <add>, %24, %cst_14 [1] : vector<128x128xf32> to vector<128xf32>
    %26 = vector.shape_cast %25 : vector<128xf32> to vector<128x1xf32>
    %27 = math.log %26 : vector<128x1xf32>
    %28 = arith.addf %21, %27 : vector<128x1xf32>
    %cst_15 = arith.constant 2.000000e+00 : f32
    %29 = vector.broadcast %cst_15 : f32 to vector<128x1xf32>
    %30 = arith.mulf %29, %15 : vector<128x1xf32>
    %31 = vector.broadcast %7 : vector<1x1xf32> to vector<128x1xf32>
    %32 = arith.subf %31, %30 : vector<128x1xf32>
    %33 = arith.addf %32, %28 : vector<128x1xf32>
    %34 = arith.addi %8, %10 : i32
    %35 = tpu.iota {dimensions = array<i32: 0>} : vector<128x1xi32>
    %36 = vector.broadcast %34 : i32 to vector<128x1xi32>
    %37 = arith.addi %36, %35 : vector<128x1xi32>
    %c1000_i32 = arith.constant 1000 : i32
    %38 = vector.broadcast %c1000_i32 : i32 to vector<128x1xi32>
    %39 = arith.cmpi slt, %37, %38 : vector<128x1xi32>
    %cst_16 = arith.constant 0.000000e+00 : f32
    %40 = vector.broadcast %cst_16 : f32 to vector<128x1xf32>
    %41 = arith.select %39, %33, %40 : vector<128x1xi1>, vector<128x1xf32>
    %42 = vector.shape_cast %41 : vector<128x1xf32> to vector<1x128x1xf32>
    %cst_17 = arith.constant dense<0.000000e+00> : vector<1xf32>
    %43 = vector.multi_reduction <add>, %42, %cst_17 [1, 2] : vector<1x128x1xf32> to vector<1xf32>
    %44 = vector.shape_cast %43 : vector<1xf32> to vector<1x1x1xf32>
    %45 = vector.extract %44[0, 0, 0] : f32 from vector<1x1x1xf32>
    %46 = arith.addf %cst, %45 : f32
    %c1_i32 = arith.constant 1 : i32
    %c128_i32_18 = arith.constant 128 : i32
    %47 = arith.muli %c1_i32, %c128_i32_18 : i32
    %48 = tpu.assume_multiple %47, 128 : i32
    %c0_19 = arith.constant 0 : index
    %c0_20 = arith.constant 0 : index
    %49 = arith.index_cast %48 : i32 to index
    %50 = vector.load %arg2[%c0_19, %c0_20, %49] : memref<1x64x512xf32, #tpu.memory_space<vmem>>, vector<1x64x128xf32>
    %51 = vector.shape_cast %50 : vector<1x64x128xf32> to vector<64x128xf32>
    %cst_21 = arith.constant dense<0.000000e+00> : vector<128x128xf32>
    %52 = tpu.matmul %51, %4, %cst_21 {dimension_numbers = #tpu.dot_dimension_numbers<[0], [0], [1], [1], [0, 1, 1, 1], [], []>} : vector<64x128xf32>, vector<64x128xf32>, vector<128x128xf32> -> vector<128x128xf32>
    %53 = vector.extract_strided_slice %52 {offsets = [0, 16], sizes = [128, 1], strides = [1, 1]} : vector<128x128xf32> to vector<128x1xf32>
    %cst_22 = arith.constant 2.000000e+00 : f32
    %54 = vector.broadcast %cst_22 : f32 to vector<128x128xf32>
    %55 = arith.mulf %54, %52 : vector<128x128xf32>
    %56 = vector.broadcast %5 : vector<1x128xf32> to vector<128x128xf32>
    %57 = arith.subf %55, %56 : vector<128x128xf32>
    %cst_23 = arith.constant dense<0xFF800000> : vector<128xf32>
    %58 = vector.multi_reduction <maximumf>, %57, %cst_23 [1] : vector<128x128xf32> to vector<128xf32>
    %59 = vector.shape_cast %58 : vector<128xf32> to vector<128x1xf32>
    %60 = vector.broadcast %59 : vector<128x1xf32> to vector<128x128xf32>
    %61 = arith.subf %57, %60 : vector<128x128xf32>
    %62 = math.exp %61 : vector<128x128xf32>
    %cst_24 = arith.constant dense<0.000000e+00> : vector<128xf32>
    %63 = vector.multi_reduction <add>, %62, %cst_24 [1] : vector<128x128xf32> to vector<128xf32>
    %64 = vector.shape_cast %63 : vector<128xf32> to vector<128x1xf32>
    %65 = math.log %64 : vector<128x1xf32>
    %66 = arith.addf %59, %65 : vector<128x1xf32>
    %cst_25 = arith.constant 2.000000e+00 : f32
    %67 = vector.broadcast %cst_25 : f32 to vector<128x1xf32>
    %68 = arith.mulf %67, %53 : vector<128x1xf32>
    %69 = vector.broadcast %7 : vector<1x1xf32> to vector<128x1xf32>
    %70 = arith.subf %69, %68 : vector<128x1xf32>
    %71 = arith.addf %70, %66 : vector<128x1xf32>
    %72 = arith.addi %8, %48 : i32
    %73 = tpu.iota {dimensions = array<i32: 0>} : vector<128x1xi32>
    %74 = vector.broadcast %72 : i32 to vector<128x1xi32>
    %75 = arith.addi %74, %73 : vector<128x1xi32>
    %c1000_i32_26 = arith.constant 1000 : i32
    %76 = vector.broadcast %c1000_i32_26 : i32 to vector<128x1xi32>
    %77 = arith.cmpi slt, %75, %76 : vector<128x1xi32>
    %cst_27 = arith.constant 0.000000e+00 : f32
    %78 = vector.broadcast %cst_27 : f32 to vector<128x1xf32>
    %79 = arith.select %77, %71, %78 : vector<128x1xi1>, vector<128x1xf32>
    %80 = vector.shape_cast %79 : vector<128x1xf32> to vector<1x128x1xf32>
    %cst_28 = arith.constant dense<0.000000e+00> : vector<1xf32>
    %81 = vector.multi_reduction <add>, %80, %cst_28 [1, 2] : vector<1x128x1xf32> to vector<1xf32>
    %82 = vector.shape_cast %81 : vector<1xf32> to vector<1x1x1xf32>
    %83 = vector.extract %82[0, 0, 0] : f32 from vector<1x1x1xf32>
    %84 = arith.addf %46, %83 : f32
    %c2_i32 = arith.constant 2 : i32
    %c128_i32_29 = arith.constant 128 : i32
    %85 = arith.muli %c2_i32, %c128_i32_29 : i32
    %86 = tpu.assume_multiple %85, 128 : i32
    %c0_30 = arith.constant 0 : index
    %c0_31 = arith.constant 0 : index
    %87 = arith.index_cast %86 : i32 to index
    %88 = vector.load %arg2[%c0_30, %c0_31, %87] : memref<1x64x512xf32, #tpu.memory_space<vmem>>, vector<1x64x128xf32>
    %89 = vector.shape_cast %88 : vector<1x64x128xf32> to vector<64x128xf32>
    %cst_32 = arith.constant dense<0.000000e+00> : vector<128x128xf32>
    %90 = tpu.matmul %89, %4, %cst_32 {dimension_numbers = #tpu.dot_dimension_numbers<[0], [0], [1], [1], [0, 1, 1, 1], [], []>} : vector<64x128xf32>, vector<64x128xf32>, vector<128x128xf32> -> vector<128x128xf32>
    %91 = vector.extract_strided_slice %90 {offsets = [0, 16], sizes = [128, 1], strides = [1, 1]} : vector<128x128xf32> to vector<128x1xf32>
    %cst_33 = arith.constant 2.000000e+00 : f32
    %92 = vector.broadcast %cst_33 : f32 to vector<128x128xf32>
    %93 = arith.mulf %92, %90 : vector<128x128xf32>
    %94 = vector.broadcast %5 : vector<1x128xf32> to vector<128x128xf32>
    %95 = arith.subf %93, %94 : vector<128x128xf32>
    %cst_34 = arith.constant dense<0xFF800000> : vector<128xf32>
    %96 = vector.multi_reduction <maximumf>, %95, %cst_34 [1] : vector<128x128xf32> to vector<128xf32>
    %97 = vector.shape_cast %96 : vector<128xf32> to vector<128x1xf32>
    %98 = vector.broadcast %97 : vector<128x1xf32> to vector<128x128xf32>
    %99 = arith.subf %95, %98 : vector<128x128xf32>
    %100 = math.exp %99 : vector<128x128xf32>
    %cst_35 = arith.constant dense<0.000000e+00> : vector<128xf32>
    %101 = vector.multi_reduction <add>, %100, %cst_35 [1] : vector<128x128xf32> to vector<128xf32>
    %102 = vector.shape_cast %101 : vector<128xf32> to vector<128x1xf32>
    %103 = math.log %102 : vector<128x1xf32>
    %104 = arith.addf %97, %103 : vector<128x1xf32>
    %cst_36 = arith.constant 2.000000e+00 : f32
    %105 = vector.broadcast %cst_36 : f32 to vector<128x1xf32>
    %106 = arith.mulf %105, %91 : vector<128x1xf32>
    %107 = vector.broadcast %7 : vector<1x1xf32> to vector<128x1xf32>
    %108 = arith.subf %107, %106 : vector<128x1xf32>
    %109 = arith.addf %108, %104 : vector<128x1xf32>
    %110 = arith.addi %8, %86 : i32
    %111 = tpu.iota {dimensions = array<i32: 0>} : vector<128x1xi32>
    %112 = vector.broadcast %110 : i32 to vector<128x1xi32>
    %113 = arith.addi %112, %111 : vector<128x1xi32>
    %c1000_i32_37 = arith.constant 1000 : i32
    %114 = vector.broadcast %c1000_i32_37 : i32 to vector<128x1xi32>
    %115 = arith.cmpi slt, %113, %114 : vector<128x1xi32>
    %cst_38 = arith.constant 0.000000e+00 : f32
    %116 = vector.broadcast %cst_38 : f32 to vector<128x1xf32>
    %117 = arith.select %115, %109, %116 : vector<128x1xi1>, vector<128x1xf32>
    %118 = vector.shape_cast %117 : vector<128x1xf32> to vector<1x128x1xf32>
    %cst_39 = arith.constant dense<0.000000e+00> : vector<1xf32>
    %119 = vector.multi_reduction <add>, %118, %cst_39 [1, 2] : vector<1x128x1xf32> to vector<1xf32>
    %120 = vector.shape_cast %119 : vector<1xf32> to vector<1x1x1xf32>
    %121 = vector.extract %120[0, 0, 0] : f32 from vector<1x1x1xf32>
    %122 = arith.addf %84, %121 : f32
    %c3_i32 = arith.constant 3 : i32
    %c128_i32_40 = arith.constant 128 : i32
    %123 = arith.muli %c3_i32, %c128_i32_40 : i32
    %124 = tpu.assume_multiple %123, 128 : i32
    %c0_41 = arith.constant 0 : index
    %c0_42 = arith.constant 0 : index
    %125 = arith.index_cast %124 : i32 to index
    %126 = vector.load %arg2[%c0_41, %c0_42, %125] : memref<1x64x512xf32, #tpu.memory_space<vmem>>, vector<1x64x128xf32>
    %127 = vector.shape_cast %126 : vector<1x64x128xf32> to vector<64x128xf32>
    %cst_43 = arith.constant dense<0.000000e+00> : vector<128x128xf32>
    %128 = tpu.matmul %127, %4, %cst_43 {dimension_numbers = #tpu.dot_dimension_numbers<[0], [0], [1], [1], [0, 1, 1, 1], [], []>} : vector<64x128xf32>, vector<64x128xf32>, vector<128x128xf32> -> vector<128x128xf32>
    %129 = vector.extract_strided_slice %128 {offsets = [0, 16], sizes = [128, 1], strides = [1, 1]} : vector<128x128xf32> to vector<128x1xf32>
    %cst_44 = arith.constant 2.000000e+00 : f32
    %130 = vector.broadcast %cst_44 : f32 to vector<128x128xf32>
    %131 = arith.mulf %130, %128 : vector<128x128xf32>
    %132 = vector.broadcast %5 : vector<1x128xf32> to vector<128x128xf32>
    %133 = arith.subf %131, %132 : vector<128x128xf32>
    %cst_45 = arith.constant dense<0xFF800000> : vector<128xf32>
    %134 = vector.multi_reduction <maximumf>, %133, %cst_45 [1] : vector<128x128xf32> to vector<128xf32>
    %135 = vector.shape_cast %134 : vector<128xf32> to vector<128x1xf32>
    %136 = vector.broadcast %135 : vector<128x1xf32> to vector<128x128xf32>
    %137 = arith.subf %133, %136 : vector<128x128xf32>
    %138 = math.exp %137 : vector<128x128xf32>
    %cst_46 = arith.constant dense<0.000000e+00> : vector<128xf32>
    %139 = vector.multi_reduction <add>, %138, %cst_46 [1] : vector<128x128xf32> to vector<128xf32>
    %140 = vector.shape_cast %139 : vector<128xf32> to vector<128x1xf32>
    %141 = math.log %140 : vector<128x1xf32>
    %142 = arith.addf %135, %141 : vector<128x1xf32>
    %cst_47 = arith.constant 2.000000e+00 : f32
    %143 = vector.broadcast %cst_47 : f32 to vector<128x1xf32>
    %144 = arith.mulf %143, %129 : vector<128x1xf32>
    %145 = vector.broadcast %7 : vector<1x1xf32> to vector<128x1xf32>
    %146 = arith.subf %145, %144 : vector<128x1xf32>
    %147 = arith.addf %146, %142 : vector<128x1xf32>
    %148 = arith.addi %8, %124 : i32
    %149 = tpu.iota {dimensions = array<i32: 0>} : vector<128x1xi32>
    %150 = vector.broadcast %148 : i32 to vector<128x1xi32>
    %151 = arith.addi %150, %149 : vector<128x1xi32>
    %c1000_i32_48 = arith.constant 1000 : i32
    %152 = vector.broadcast %c1000_i32_48 : i32 to vector<128x1xi32>
    %153 = arith.cmpi slt, %151, %152 : vector<128x1xi32>
    %cst_49 = arith.constant 0.000000e+00 : f32
    %154 = vector.broadcast %cst_49 : f32 to vector<128x1xf32>
    %155 = arith.select %153, %147, %154 : vector<128x1xi1>, vector<128x1xf32>
    %156 = vector.shape_cast %155 : vector<128x1xf32> to vector<1x128x1xf32>
    %cst_50 = arith.constant dense<0.000000e+00> : vector<1xf32>
    %157 = vector.multi_reduction <add>, %156, %cst_50 [1, 2] : vector<1x128x1xf32> to vector<1xf32>
    %158 = vector.shape_cast %157 : vector<1xf32> to vector<1x1x1xf32>
    %159 = vector.extract %158[0, 0, 0] : f32 from vector<1x1x1xf32>
    %160 = arith.addf %122, %159 : f32
    %c4_i32 = arith.constant 4 : i32
    %c0_51 = arith.constant 0 : index
    %c0_52 = arith.constant 0 : index
    %161 = vector.load %arg7[%c0_51, %c0_52] : memref<1x1xf32, #tpu.memory_space<vmem>>, vector<1x1xf32>
    %162 = vector.broadcast %160 : f32 to vector<1x1xf32>
    %163 = arith.addf %161, %162 : vector<1x1xf32>
    %c0_53 = arith.constant 0 : index
    %c0_54 = arith.constant 0 : index
    %164 = vector.load %arg7[%c0_53, %c0_54] : memref<1x1xf32, #tpu.memory_space<vmem>>, vector<1x1xf32>
    tpu.vector_store %arg7[%c0_53, %c0_54], %163 {strides = array<i32>} : memref<1x1xf32, #tpu.memory_space<vmem>>, vector<1x1xf32>,
    %c1_i32_55 = arith.constant 1 : i32
    %165 = arith.cmpi eq, %arg1, %c1_i32_55 : i32
    %166 = arith.extui %165 : i1 to i32
    %c0_i32_56 = arith.constant 0 : i32
    %167 = arith.cmpi ne, %166, %c0_i32_56 : i32
    scf.if %167 {
      %c0_57 = arith.constant 0 : index
      %c0_58 = arith.constant 0 : index
      %168 = vector.load %arg7[%c0_57, %c0_58] : memref<1x1xf32, #tpu.memory_space<vmem>>, vector<1x1xf32>
      %cst_59 = arith.constant 1.000000e-03 : f32
      %169 = vector.broadcast %cst_59 : f32 to vector<1x1xf32>
      %170 = arith.mulf %168, %169 : vector<1x1xf32>
      %171 = vector.shape_cast %170 : vector<1x1xf32> to vector<1x1x1xf32>
      %c0_60 = arith.constant 0 : index
      %c0_61 = arith.constant 0 : index
      %c0_62 = arith.constant 0 : index
      %172 = vector.load %arg6[%c0_60, %c0_61, %c0_62] : memref<1x1x1xf32, #tpu.memory_space<vmem>>, vector<1x1x1xf32>
      tpu.vector_store %arg6[%c0_60, %c0_61, %c0_62], %171 {strides = array<i32>} : memref<1x1x1xf32, #tpu.memory_space<vmem>>, vector<1x1x1xf32>,
    } else {
    }
    return
  }
  func.func @transform_0(%arg0: i32, %arg1: i32) -> (i32, i32, i32) {
    %c0_i32 = arith.constant 0 : i32
    %c0_i32_0 = arith.constant 0 : i32
    return %arg0, %c0_i32, %arg1 : i32, i32, i32
  }
  func.func @transform_1(%arg0: i32, %arg1: i32) -> (i32, i32, i32) {
    %c0_i32 = arith.constant 0 : i32
    %c0_i32_0 = arith.constant 0 : i32
    %c0_i32_1 = arith.constant 0 : i32
    return %arg0, %c0_i32, %c0_i32_0 : i32, i32, i32
  }
  func.func @transform_2(%arg0: i32, %arg1: i32) -> (i32, i32, i32) {
    %c0_i32 = arith.constant 0 : i32
    %c0_i32_0 = arith.constant 0 : i32
    %c0_i32_1 = arith.constant 0 : i32
    return %arg0, %c0_i32, %c0_i32_0 : i32, i32, i32
  }
  func.func @transform_3(%arg0: i32, %arg1: i32) -> (i32, i32) {
    %c0_i32 = arith.constant 0 : i32
    %c0_i32_0 = arith.constant 0 : i32
    %c0_i32_1 = arith.constant 0 : i32
    return %c0_i32, %c0_i32_0 : i32, i32
  }
  func.func @transform_4(%arg0: i32, %arg1: i32) -> (i32, i32, i32) {
    %c0_i32 = arith.constant 0 : i32
    %c0_i32_0 = arith.constant 0 : i32
    %c0_i32_1 = arith.constant 0 : i32
    return %arg0, %c0_i32, %c0_i32_0 : i32, i32, i32
  }
}

</mosaic_0001>

<llo_original>
// kernel: squeeze.2
$region0: #{squeeze.2}
  %s0 = inlined_call_operand.vmem [shape: f32[4], index: 0, kind: input, shape index: {}]
  %s1 = inlined_call_operand.vmem [shape: f32[2,2], index: 1, kind: output, shape index: {}]
  $region1: #{squeeze.2} parent=0
    #allocation0 [shape = 'u8[4096]{0}', space=vmem, size = 0x1000, scoped, tag = 'scoped mem for output reshape']
    #allocation1 [shape = 'u8[4096]{0}', space=vmem, size = 0x1000, scoped, tag = 'scoped mem for input reshape']
    %s3 = sshll.u32 1, 1
    %s4 = ssub.s32 %s3, 1
    %v5 = vld [vmem:[%s0] sm:%s4]
    %6 = vst [vmem:[#allocation1] sm:%s4] %v5
    %v7 = vld [vmem:[#allocation1] sm:$0x1]
    %vm8 = vcmask 15360
    %9 = vst.msk [vmem:[#allocation0] sm:$0x1] %vm8, %v7
    %v10 = vld [vmem:[#allocation1] sm:$0x1]
    %11 = vrot.lane.b32.xlu0 %v10, 126
    %v12 = vpop.permute.xlu0 %11
    %vm13 = vcmask 15360
    %s14 = scalar_lea.vmem [#allocation0], 1
    %15 = vst.msk [vmem:[%s14] sm:$0x1] %vm13, %v12
    %s17 = sshll.u32 1, 2
    %s18 = ssub.s32 %s17, 1
    %v20 = vld [vmem:[#allocation0] sm:%s18]
    %s21 = sshll.u32 1, 2
    %s22 = ssub.s32 %s21, 1
    %23 = vst [vmem:[%s1] sm:%s22] %v20

// kernel: multi_domain_loss.2
$region0: #{multi_domain_loss.2}
  #allocation0 [shape = 'u32[]', space=smem, size = 0x4, offset = 0x4, fixed_abs, tag = 'smem constant byte address 0x4 - core index']
  #allocation1 [shape = 'u32[144,128]{1,0:T(1,128)}', space=vmem, size = 0x12000, scoped, tag = 'internal scratch']
  #allocation2 [shape = 'f32[8,1]{1,0:T(8,128)}', space=vmem, size = 0x1000, scoped, tag = 'scratch operand']
  #allocation3 [shape = 'f32[8,1]{1,0:T(8,128)}', space=vmem, size = 0x1000, scoped, tag = 'scratch operand']
  #allocation4 [shape = 'f32[8,1]{1,0:T(8,128)}', space=vmem, size = 0x1000, scoped, tag = 'scratch operand']
  %s0 = inlined_call_operand.vmem [shape: f32[8,8000], index: 0, kind: input, shape index: {}]
  %s1 = inlined_call_operand.vmem [shape: f32[8,8000], index: 1, kind: input, shape index: {}]
  %s2 = inlined_call_operand.vmem [shape: f32[8,1], index: 2, kind: output, shape index: {}]
  %s3 = sld [smem:[#allocation0]]
  $region49: #{multi_domain_loss.2} parent=0
    _
  %s5 = ssub.s32 1, %s3
  %s6 = scalar_select 0, %s5, %s3
  loop: start=0, step=1, limit=6
  $region2: #{multi_domain_loss.2} parent=0 // loop_pre_header
    _
  $region3: #{multi_domain_loss.2} parent=0 // loop_header
    %s8 = sphi 0, %s12
    %p9 = scmp.ge.s32.totalorder %s8, 6
    %s15 = sphi 0, %s27
    %s16 = sphi 0, %s23
    %s17 = sphi 0, %s15
    %s18 = sphi 0, %s16
    %s19 = sphi 0, %s17
    %s20 = sphi 0, %s18
    %s32 = sphi 0, %s34
    %s35 = sphi 0, %s32
    %s36 = sphi 0, %s35
    %s52 = sphi 0, %s36
    %s60 = sphi 0, %s62
    %s63 = sphi 0, %s60
    %s64 = sphi 0, %s63
    %s80 = sphi 0, %s64
    %s86 = sphi 0, %s88
    %s89 = sphi 0, %s86
    %s90 = sphi 0, %s89
    %s106 = sphi 0, %s90
  $region4: #{multi_domain_loss.2} parent=0 // loop_header_branch
    %11 = sbr.rel (%p9) target = $region8
  $region5: #{multi_domain_loss.2} parent=0 // loop_body
    %s13 = ssub.s32 %s8, 1
    %s14 = ssub.s32 %s8, 2
    %s21 = sadd.s32 1, %s16
    %p22 = scmp.ge.s32.totalorder %s21, 4
    %s23 = scalar_select %p22, 0, %s21
    %s24 = sadd.s32 1, %s15
    %s25 = scalar_select %p22, %s24, %s15
    %p26 = scmp.ge.s32.totalorder %s25, 1
    %s27 = scalar_select %p26, 0, %s25
    %s28 = ssub.s32 %s15, %s27
    %s29 = ssub.s32 %s16, %s23
    %s30 = sor.u32 %s28, %s29
    %p31 = scmp.eq.s32.totalorder %s30, 0
    %s33 = sadd.s32 %s32, 1
    %s34 = scalar_select %p31, %s32, %s33
    %p37 = pneg %p31
    %p38 = scmp.eq.s32.totalorder %s8, 3
    %p39 = por %p37, %p38
    %p40 = scmp.ne.s32.totalorder %s32, %s35
    %p41 = scmp.eq.s32.totalorder %s8, 0
    %p42 = por %p40, %p41
    %p43 = scmp.ne.s32.totalorder %s32, %s35
    %p44 = scmp.eq.s32.totalorder %s13, 3
    %p45 = por %p43, %p44
    %p46 = scmp.ne.s32.totalorder %s35, %s36
    %p47 = scmp.eq.s32.totalorder %s13, 0
    %p48 = por %p46, %p47
    %p49 = scmp.ne.s32.totalorder %s35, %s36
    %p50 = scmp.eq.s32.totalorder %s14, 3
    %p51 = por %p49, %p50
    %p53 = scmp.ne.s32.totalorder %s36, %s52
    %p54 = scmp.eq.s32.totalorder %s14, 0
    %p55 = por %p53, %p54
    %s56 = ssub.s32 %s15, %s27
    %s57 = ssub.s32 %s16, %s23
    %s58 = sor.u32 %s56, %s57
    %p59 = scmp.eq.s32.totalorder %s58, 0
    %s61 = sadd.s32 %s60, 1
    %s62 = scalar_select %p59, %s60, %s61
    %p65 = pneg %p59
    %p66 = scmp.eq.s32.totalorder %s8, 3
    %p67 = por %p65, %p66
    %p68 = scmp.ne.s32.totalorder %s60, %s63
    %p69 = scmp.eq.s32.totalorder %s8, 0
    %p70 = por %p68, %p69
    %p71 = scmp.ne.s32.totalorder %s60, %s63
    %p72 = scmp.eq.s32.totalorder %s13, 3
    %p73 = por %p71, %p72
    %p74 = scmp.ne.s32.totalorder %s63, %s64
    %p75 = scmp.eq.s32.totalorder %s13, 0
    %p76 = por %p74, %p75
    %p77 = scmp.ne.s32.totalorder %s63, %s64
    %p78 = scmp.eq.s32.totalorder %s14, 3
    %p79 = por %p77, %p78
    %p81 = scmp.ne.s32.totalorder %s64, %s80
    %p82 = scmp.eq.s32.totalorder %s14, 0
    %p83 = por %p81, %p82
    %s84 = ssub.s32 %s15, %s27
    %p85 = scmp.eq.s32.totalorder %s84, 0
    %s87 = sadd.s32 %s86, 1
    %s88 = scalar_select %p85, %s86, %s87
    %p91 = pneg %p85
    %p92 = scmp.eq.s32.totalorder %s8, 3
    %p93 = por %p91, %p92
    %p94 = scmp.ne.s32.totalorder %s86, %s89
    %p95 = scmp.eq.s32.totalorder %s8, 0
    %p96 = por %p94, %p95
    %p97 = scmp.ne.s32.totalorder %s86, %s89
    %p98 = scmp.eq.s32.totalorder %s13, 3
    %p99 = por %p97, %p98
    %p100 = scmp.ne.s32.totalorder %s89, %s90
    %p101 = scmp.eq.s32.totalorder %s13, 0
    %p102 = por %p100, %p101
    %p103 = scmp.ne.s32.totalorder %s89, %s90
    %p104 = scmp.eq.s32.totalorder %s14, 3
    %p105 = por %p103, %p104
    %p107 = scmp.ne.s32.totalorder %s90, %s106
    %p108 = scmp.eq.s32.totalorder %s14, 0
    %p109 = por %p107, %p108
    %p110 = scmp.le.s32.totalorder 1, %s8
    %p111 = scmp.lt.s32.totalorder %s8, 5
    %p112 = pnand %p110, %p111
    %p113 = pneg %p112
    // Predicated region
    $region9: #{multi_domain_loss.2} parent=5 // pred_check
      _
    $region10: #{multi_domain_loss.2} parent=5 // pred_check_branch
      %115 = sbr.rel (%p112) target = $region12
    $region11: #{multi_domain_loss.2} parent=5 // pred_region
      %s116 = ssub.s32 %s8, 1
    $region12: #{multi_domain_loss.2} parent=5 // pred_fallthru
      _
    %p117 = scmp.lt.s32.totalorder %s8, 4
    // Predicated region
    $region13: #{multi_domain_loss.2} parent=5 // pred_check
      %p118 = pneg %p117
    $region14: #{multi_domain_loss.2} parent=5 // pred_check_branch
      %120 = sbr.rel (%p118) target = $region16
    $region15: #{multi_domain_loss.2} parent=5 // pred_region
      // Predicated region
      $region17: #{multi_domain_loss.2} parent=15 // pred_check
        %p121 = pneg %p42
      $region18: #{multi_domain_loss.2} parent=15 // pred_check_branch
        %123 = sbr.rel (%p121) target = $region20
      $region19: #{multi_domain_loss.2} parent=15 // pred_region
        %s124 = smul.u32 16, %s16
        %s125 = ssub.s32 63, %s124
        %p126 = scmp.lt.s32.totalorder %s125, 16
        %s127 = scalar_select %p126, %s125, 16
        %s128 = smul.u32 128, %s127
        %p129 = scmp.lt.s32.totalorder %s15, 0
        %s130 = scalar_select %p129, %s15, 0
        %p131 = scmp.lt.s32.totalorder %s124, 62
        %s132 = scalar_select %p131, %s124, 62
        %s133 = smul.addr %s130, 63
        %s134 = sadd.s32 %s132, %s133
        %s135 = smul.addr %s134, 8
        %s136 = scalar_lea.vmem %s0, %s135
        %s137 = smul.u32 16, %s16
        %s138 = ssub.s32 63, %s137
        %p139 = scmp.lt.s32.totalorder %s138, 16
        %s140 = scalar_select %p139, %s138, 16
        %s141 = smul.u32 128, %s140
      $region20: #{multi_domain_loss.2} parent=15 // pred_fallthru
        _
      // Predicated region
      $region21: #{multi_domain_loss.2} parent=15 // pred_check
        %p142 = pneg %p70
      $region22: #{multi_domain_loss.2} parent=15 // pred_check_branch
        %144 = sbr.rel (%p142) target = $region24
      $region23: #{multi_domain_loss.2} parent=15 // pred_region
        %s145 = smul.u32 16, %s16
        %s146 = ssub.s32 63, %s145
        %p147 = scmp.lt.s32.totalorder %s146, 16
        %s148 = scalar_select %p147, %s146, 16
        %s149 = smul.u32 128, %s148
        %p150 = scmp.lt.s32.totalorder %s15, 0
        %s151 = scalar_select %p150, %s15, 0
        %p152 = scmp.lt.s32.totalorder %s145, 62
        %s153 = scalar_select %p152, %s145, 62
        %s154 = smul.addr %s151, 63
        %s155 = sadd.s32 %s153, %s154
        %s156 = smul.addr %s155, 8
        %s157 = scalar_lea.vmem %s1, %s156
        %s158 = smul.u32 16, %s16
        %s159 = ssub.s32 63, %s158
        %p160 = scmp.lt.s32.totalorder %s159, 16
        %s161 = scalar_select %p160, %s159, 16
        %s162 = smul.u32 128, %s161
      $region24: #{multi_domain_loss.2} parent=15 // pred_fallthru
        _
    $region16: #{multi_domain_loss.2} parent=5 // pred_fallthru
      _
    %p163 = scmp.le.s32.totalorder 1, %s8
    %p164 = scmp.lt.s32.totalorder %s8, 5
    %p165 = pnand %p163, %p164
    %p166 = pneg %p165
    // Predicated region
    $region25: #{multi_domain_loss.2} parent=5 // pred_check
      _
    $region26: #{multi_domain_loss.2} parent=5 // pred_check_branch
      %168 = sbr.rel (%p165) target = $region28
    $region27: #{multi_domain_loss.2} parent=5 // pred_region
      %s169 = ssub.s32 %s8, 1
      %s170 = smul.u32 16, %s18
      %s171 = ssub.s32 63, %s170
      %p172 = scmp.lt.s32.totalorder %s171, 16
      %s173 = scalar_select %p172, %s171, 16
      %s174 = smul.u32 128, %s173
      %p175 = scmp.lt.s32.totalorder %s17, 0
      %s176 = scalar_select %p175, %s17, 0
      %p177 = scmp.lt.s32.totalorder %s170, 62
      %s178 = scalar_select %p177, %s170, 62
      %s179 = smul.addr %s176, 63
      %s180 = sadd.s32 %s178, %s179
      %s181 = smul.addr %s180, 8
      %s182 = scalar_lea.vmem %s0, %s181
      %p183 = pneg %p48
      %p184 = pneg %p45
      %s185 = smul.u32 16, %s18
      %s186 = ssub.s32 63, %s185
      %p187 = scmp.lt.s32.totalorder %s186, 16
      %s188 = scalar_select %p187, %s186, 16
      %s189 = smul.u32 128, %s188
      %p190 = scmp.lt.s32.totalorder %s17, 0
      %s191 = scalar_select %p190, %s17, 0
      %p192 = scmp.lt.s32.totalorder %s185, 62
      %s193 = scalar_select %p192, %s185, 62
      %s194 = smul.addr %s191, 63
      %s195 = sadd.s32 %s193, %s194
      %s196 = smul.addr %s195, 8
      %s197 = scalar_lea.vmem %s1, %s196
      %p198 = pneg %p76
      %p199 = pneg %p73
      %p200 = pneg %p102
      %p201 = pneg %p99
      %p202 = scmp.lt.s32.totalorder %s17, 0
      %s203 = scalar_select %p202, %s17, 0
      %s204 = smul.addr %s203, 8
      %s205 = scalar_lea.vmem %s2, %s204
      %s206 = smul.u32 16, %s18
      %s207 = ssub.s32 63, %s206
      %p208 = scmp.lt.s32.totalorder %s207, 16
      %s209 = scalar_select %p208, %s207, 16
      %s210 = smul.u32 128, %s209
      %p211 = scmp.lt.s32.totalorder %s17, 0
      %s212 = scalar_select %p211, %s17, 0
      %p213 = scmp.lt.s32.totalorder %s206, 62
      %s214 = scalar_select %p213, %s206, 62
      %s215 = smul.addr %s212, 63
      %s216 = sadd.s32 %s214, %s215
      %s217 = smul.addr %s216, 8
      %s218 = scalar_lea.vmem %s0, %s217
      %s219 = smul.u32 16, %s18
      %s220 = ssub.s32 63, %s219
      %p221 = scmp.lt.s32.totalorder %s220, 16
      %s222 = scalar_select %p221, %s220, 16
      %s223 = smul.u32 128, %s222
      %s224 = smul.u32 16, %s18
      %s225 = ssub.s32 63, %s224
      %p226 = scmp.lt.s32.totalorder %s225, 16
      %s227 = scalar_select %p226, %s225, 16
      %s228 = smul.u32 128, %s227
      %p229 = scmp.lt.s32.totalorder %s17, 0
      %s230 = scalar_select %p229, %s17, 0
      %p231 = scmp.lt.s32.totalorder %s224, 62
      %s232 = scalar_select %p231, %s224, 62
      %s233 = smul.addr %s230, 63
      %s234 = sadd.s32 %s232, %s233
      %s235 = smul.addr %s234, 8
      %s236 = scalar_lea.vmem %s1, %s235
      %s237 = smul.u32 16, %s18
      %s238 = ssub.s32 63, %s237
      %p239 = scmp.lt.s32.totalorder %s238, 16
      %s240 = scalar_select %p239, %s238, 16
      %s241 = smul.u32 128, %s240
      %p242 = scmp.lt.s32.totalorder %s17, 0
      %s243 = scalar_select %p242, %s17, 0
      %s244 = smul.addr %s243, 8
      %s245 = scalar_lea.vmem %s2, %s244
      %p246 = scmp.eq.s32.totalorder %s18, 0
      // Predicated region
      $region29: #{multi_domain_loss.2} parent=27 // pred_check
        %p247 = pneg %p246
      $region30: #{multi_domain_loss.2} parent=27 // pred_check_branch
        %249 = sbr.rel (%p247) target = $region32
      $region31: #{multi_domain_loss.2} parent=27 // pred_region
        %vm250 = vcmask 7168
        %251 = vst.msk [vmem:[#allocation2] sm:$0xff] %vm250, 0.0
        %252 = vst.msk [vmem:[#allocation3] sm:$0xff] %vm250, 0.0
        %253 = vst.msk [vmem:[#allocation4] sm:$0xff] %vm250, 0.0
      $region32: #{multi_domain_loss.2} parent=27 // pred_fallthru
        _
      %v254 = vld [vmem:[%s218] sm:$0xff]
      %v255 = vld [vmem:[%s218 + $0x8] sm:$0xff]
      %v256 = vld [vmem:[%s218 + $0x10] sm:$0xff]
      %v257 = vld [vmem:[%s218 + $0x18] sm:$0xff]
      %v258 = vld [vmem:[%s218 + $0x20] sm:$0xff]
      %v259 = vld [vmem:[%s218 + $0x28] sm:$0xff]
      %v260 = vld [vmem:[%s218 + $0x30] sm:$0xff]
      %v261 = vld [vmem:[%s218 + $0x38] sm:$0xff]
      %v262 = vld [vmem:[%s218 + $0x40] sm:$0xff]
      %v263 = vld [vmem:[%s218 + $0x48] sm:$0xff]
      %v264 = vld [vmem:[%s218 + $0x50] sm:$0xff]
      %v265 = vld [vmem:[%s218 + $0x58] sm:$0xff]
      %v266 = vld [vmem:[%s218 + $0x60] sm:$0xff]
      %v267 = vld [vmem:[%s218 + $0x68] sm:$0xff]
      %v268 = vld [vmem:[%s218 + $0x70] sm:$0xff]
      %v269 = vld [vmem:[%s218 + $0x78] sm:$0xff]
      %v270 = vld [vmem:[%s236] sm:$0xff]
      %v271 = vld [vmem:[%s236 + $0x8] sm:$0xff]
      %v272 = vld [vmem:[%s236 + $0x10] sm:$0xff]
      %v273 = vld [vmem:[%s236 + $0x18] sm:$0xff]
      %v274 = vld [vmem:[%s236 + $0x20] sm:$0xff]
      %v275 = vld [vmem:[%s236 + $0x28] sm:$0xff]
      %v276 = vld [vmem:[%s236 + $0x30] sm:$0xff]
      %v277 = vld [vmem:[%s236 + $0x38] sm:$0xff]
      %v278 = vld [vmem:[%s236 + $0x40] sm:$0xff]
      %v279 = vld [vmem:[%s236 + $0x48] sm:$0xff]
      %v280 = vld [vmem:[%s236 + $0x50] sm:$0xff]
      %v281 = vld [vmem:[%s236 + $0x58] sm:$0xff]
      %v282 = vld [vmem:[%s236 + $0x60] sm:$0xff]
      %v283 = vld [vmem:[%s236 + $0x68] sm:$0xff]
      %v284 = vld [vmem:[%s236 + $0x70] sm:$0xff]
      %v285 = vld [vmem:[%s236 + $0x78] sm:$0xff]
      %s286 = smul.u32 %s18, 2048
      %v287 = vlaneseq
      %v288 = vand.u32 %v287, 127
      %v289 = vadd.s32 %v288, 128
      %v290 = vadd.s32 %v288, 256
      %v291 = vadd.s32 %v288, 384
      %v292 = vadd.s32 %v288, 512
      %v293 = vadd.s32 %v288, 640
      %v294 = vadd.s32 %v288, 768
      %v295 = vadd.s32 %v288, 896
      %v296 = vadd.s32 %v288, 1024
      %v297 = vadd.s32 %v288, 1152
      %v298 = vadd.s32 %v288, 1280
      %v299 = vadd.s32 %v288, 1408
      %v300 = vadd.s32 %v288, 1536
      %v301 = vadd.s32 %v288, 1664
      %v302 = vadd.s32 %v288, 1792
      %v303 = vadd.s32 %v288, 1920
      %v304 = vstv %s286
      %v305 = vadd.s32 %v304, %v288
      %v306 = vadd.s32 %v304, %v289
      %v307 = vadd.s32 %v304, %v290
      %v308 = vadd.s32 %v304, %v291
      %v309 = vadd.s32 %v304, %v292
      %v310 = vadd.s32 %v304, %v293
      %v311 = vadd.s32 %v304, %v294
      %v312 = vadd.s32 %v304, %v295
      %v313 = vadd.s32 %v304, %v296
      %v314 = vadd.s32 %v304, %v297
      %v315 = vadd.s32 %v304, %v298
      %v316 = vadd.s32 %v304, %v299
      %v317 = vadd.s32 %v304, %v300
      %v318 = vadd.s32 %v304, %v301
      %v319 = vadd.s32 %v304, %v302
      %v320 = vadd.s32 %v304, %v303
      %vm321 = vcmp.lt.s32.totalorder %v305, 8000
      %vm322 = vcmp.lt.s32.totalorder %v306, 8000
      %vm323 = vcmp.lt.s32.totalorder %v307, 8000
      %vm324 = vcmp.lt.s32.totalorder %v308, 8000
      %vm325 = vcmp.lt.s32.totalorder %v309, 8000
      %vm326 = vcmp.lt.s32.totalorder %v310, 8000
      %vm327 = vcmp.lt.s32.totalorder %v311, 8000
      %vm328 = vcmp.lt.s32.totalorder %v312, 8000
      %vm329 = vcmp.lt.s32.totalorder %v313, 8000
      %vm330 = vcmp.lt.s32.totalorder %v314, 8000
      %vm331 = vcmp.lt.s32.totalorder %v315, 8000
      %vm332 = vcmp.lt.s32.totalorder %v316, 8000
      %vm333 = vcmp.lt.s32.totalorder %v317, 8000
      %vm334 = vcmp.lt.s32.totalorder %v318, 8000
      %vm335 = vcmp.lt.s32.totalorder %v319, 8000
      %vm336 = vcmp.lt.s32.totalorder %v320, 8000
      %v337 = vsel %vm321, %v254, 0.0
      %v338 = vsel %vm322, %v255, 0.0
      %v339 = vsel %vm323, %v256, 0.0
      %v340 = vsel %vm324, %v257, 0.0
      %v341 = vsel %vm325, %v258, 0.0
      %v342 = vsel %vm326, %v259, 0.0
      %v343 = vsel %vm327, %v260, 0.0
      %v344 = vsel %vm328, %v261, 0.0
      %v345 = vsel %vm329, %v262, 0.0
      %v346 = vsel %vm330, %v263, 0.0
      %v347 = vsel %vm331, %v264, 0.0
      %v348 = vsel %vm332, %v265, 0.0
      %v349 = vsel %vm333, %v266, 0.0
      %v350 = vsel %vm334, %v267, 0.0
      %v351 = vsel %vm335, %v268, 0.0
      %v352 = vsel %vm336, %v269, 0.0
      %v353 = vsel %vm321, %v270, 0.0
      %v354 = vsel %vm322, %v271, 0.0
      %v355 = vsel %vm323, %v272, 0.0
      %v356 = vsel %vm324, %v273, 0.0
      %v357 = vsel %vm325, %v274, 0.0
      %v358 = vsel %vm326, %v275, 0.0
      %v359 = vsel %vm327, %v276, 0.0
      %v360 = vsel %vm328, %v277, 0.0
      %v361 = vsel %vm329, %v278, 0.0
      %v362 = vsel %vm330, %v279, 0.0
      %v363 = vsel %vm331, %v280, 0.0
      %v364 = vsel %vm332, %v281, 0.0
      %v365 = vsel %vm333, %v282, 0.0
      %v366 = vsel %vm334, %v283, 0.0
      %v367 = vsel %vm335, %v284, 0.0
      %v368 = vsel %vm336, %v285, 0.0
      %v369 = vld [vmem:[#allocation2] sm:$0xff]
      %v370 = vmul.f32 %v337, %v337
      %v371 = vmul.f32 %v338, %v338
      %v372 = vmul.f32 %v339, %v339
      %v373 = vmul.f32 %v340, %v340
      %v374 = vmul.f32 %v341, %v341
      %v375 = vmul.f32 %v342, %v342
      %v376 = vmul.f32 %v343, %v343
      %v377 = vmul.f32 %v344, %v344
      %v378 = vmul.f32 %v345, %v345
      %v379 = vmul.f32 %v346, %v346
      %v380 = vmul.f32 %v347, %v347
      %v381 = vmul.f32 %v348, %v348
      %v382 = vmul.f32 %v349, %v349
      %v383 = vmul.f32 %v350, %v350
      %v384 = vmul.f32 %v351, %v351
      %v385 = vmul.f32 %v352, %v352
      %v386 = vadd.f32 %v370, %v371
      %v387 = vadd.f32 %v386, %v372
      %v388 = vadd.f32 %v387, %v373
      %v389 = vadd.f32 %v388, %v374
      %v390 = vadd.f32 %v389, %v375
      %v391 = vadd.f32 %v390, %v376
      %v392 = vadd.f32 %v391, %v377
      %v393 = vadd.f32 %v392, %v378
      %v394 = vadd.f32 %v393, %v379
      %v395 = vadd.f32 %v394, %v380
      %v396 = vadd.f32 %v395, %v381
      %v397 = vadd.f32 %v396, %v382
      %v398 = vadd.f32 %v397, %v383
      %v399 = vadd.f32 %v398, %v384
      %v400 = vadd.f32 %v399, %v385
      %401 = vadd.xlane.f32.xlu0 %v400
      %v402 = vpop.xlane.xlu0 %401
      %v403 = vadd.f32 %v369, %v402
      %vm404 = vcmask 7168
      %405 = vst.msk [vmem:[#allocation2] sm:$0xff] %vm404, %v403
      %v406 = vld [vmem:[#allocation3] sm:$0xff]
      %v407 = vmul.f32 %v337, %v353
      %v408 = vmul.f32 %v338, %v354
      %v409 = vmul.f32 %v339, %v355
      %v410 = vmul.f32 %v340, %v356
      %v411 = vmul.f32 %v341, %v357
      %v412 = vmul.f32 %v342, %v358
      %v413 = vmul.f32 %v343, %v359
      %v414 = vmul.f32 %v344, %v360
      %v415 = vmul.f32 %v345, %v361
      %v416 = vmul.f32 %v346, %v362
      %v417 = vmul.f32 %v347, %v363
      %v418 = vmul.f32 %v348, %v364
      %v419 = vmul.f32 %v349, %v365
      %v420 = vmul.f32 %v350, %v366
      %v421 = vmul.f32 %v351, %v367
      %v422 = vmul.f32 %v352, %v368
      %v423 = vadd.f32 %v407, %v408
      %v424 = vadd.f32 %v423, %v409
      %v425 = vadd.f32 %v424, %v410
      %v426 = vadd.f32 %v425, %v411
      %v427 = vadd.f32 %v426, %v412
      %v428 = vadd.f32 %v427, %v413
      %v429 = vadd.f32 %v428, %v414
      %v430 = vadd.f32 %v429, %v415
      %v431 = vadd.f32 %v430, %v416
      %v432 = vadd.f32 %v431, %v417
      %v433 = vadd.f32 %v432, %v418
      %v434 = vadd.f32 %v433, %v419
      %v435 = vadd.f32 %v434, %v420
      %v436 = vadd.f32 %v435, %v421
      %v437 = vadd.f32 %v436, %v422
      %438 = vadd.xlane.f32.xlu0 %v437
      %v439 = vpop.xlane.xlu0 %438
      %v440 = vadd.f32 %v406, %v439
      %441 = vst.msk [vmem:[#allocation3] sm:$0xff] %vm404, %v440
      %v442 = vld [vmem:[#allocation4] sm:$0xff]
      %v443 = vmul.f32 %v353, %v353
      %v444 = vmul.f32 %v354, %v354
      %v445 = vmul.f32 %v355, %v355
      %v446 = vmul.f32 %v356, %v356
      %v447 = vmul.f32 %v357, %v357
      %v448 = vmul.f32 %v358, %v358
      %v449 = vmul.f32 %v359, %v359
      %v450 = vmul.f32 %v360, %v360
      %v451 = vmul.f32 %v361, %v361
      %v452 = vmul.f32 %v362, %v362
      %v453 = vmul.f32 %v363, %v363
      %v454 = vmul.f32 %v364, %v364
      %v455 = vmul.f32 %v365, %v365
      %v456 = vmul.f32 %v366, %v366
      %v457 = vmul.f32 %v367, %v367
      %v458 = vmul.f32 %v368, %v368
      %v459 = vadd.f32 %v443, %v444
      %v460 = vadd.f32 %v459, %v445
      %v461 = vadd.f32 %v460, %v446
      %v462 = vadd.f32 %v461, %v447
      %v463 = vadd.f32 %v462, %v448
      %v464 = vadd.f32 %v463, %v449
      %v465 = vadd.f32 %v464, %v450
      %v466 = vadd.f32 %v465, %v451
      %v467 = vadd.f32 %v466, %v452
      %v468 = vadd.f32 %v467, %v453
      %v469 = vadd.f32 %v468, %v454
      %v470 = vadd.f32 %v469, %v455
      %v471 = vadd.f32 %v470, %v456
      %v472 = vadd.f32 %v471, %v457
      %v473 = vadd.f32 %v472, %v458
      %474 = vadd.xlane.f32.xlu0 %v473
      %v475 = vpop.xlane.xlu0 %474
      %v476 = vadd.f32 %v442, %v475
      %477 = vst.msk [vmem:[#allocation4] sm:$0xff] %vm404, %v476
      %p478 = scmp.eq.s32.totalorder %s18, 3
      // Predicated region
      $region33: #{multi_domain_loss.2} parent=27 // pred_check
        %p479 = pneg %p478
      $region34: #{multi_domain_loss.2} parent=27 // pred_check_branch
        %481 = sbr.rel (%p479) target = $region36
      $region35: #{multi_domain_loss.2} parent=27 // pred_region
        %v482 = vld [vmem:[#allocation2] sm:$0xff]
        %v483 = vld [vmem:[#allocation3] sm:$0xff]
        %v484 = vld [vmem:[#allocation4] sm:$0xff]
        %v485 = vadd.f32 %v484, 1e-08
        %v486 = vrcp.pop %v485
        %v487 = vmul.f32 %v483, %v486
        %v488 = vmul.f32 %v487, %v487
        %v489 = vmul.f32 %v488, %v484
        %v490 = vmul.f32 %v487, 2.0
        %v491 = vmul.f32 %v490, %v483
        %v492 = vsub.f32 %v482, %v491
        %v493 = vadd.f32 %v492, %v489
        %v494 = vadd.f32 %v489, 1e-08
        %v495 = vadd.f32 %v493, 1e-08
        %v496 = vrcp.pop %v495
        %v497 = vmul.f32 %v494, %v496
        %v498 = vlog2.pop %v497
        %v499 = vmul.f32 %v498, 0.6931472
        %v500 = vmul.f32 %v499, 0.4342945
        %v501 = vmul.f32 %v500, -10.0
        %502 = vst.msk [vmem:[%s245] sm:$0xff] %vm404, %v501
      $region36: #{multi_domain_loss.2} parent=27 // pred_fallthru
        _
      %p503 = scmp.lt.s32.totalorder %s17, 0
      %s504 = scalar_select %p503, %s17, 0
      %s505 = smul.addr %s504, 8
      %s506 = scalar_lea.vmem %s2, %s505
      // Predicated region
      $region37: #{multi_domain_loss.2} parent=27 // pred_check
        %p507 = pneg %p99
      $region38: #{multi_domain_loss.2} parent=27 // pred_check_branch
        %509 = sbr.rel (%p507) target = $region40
      $region39: #{multi_domain_loss.2} parent=27 // pred_region
        _
      $region40: #{multi_domain_loss.2} parent=27 // pred_fallthru
        _
      // Predicated region
      $region41: #{multi_domain_loss.2} parent=27 // pred_check
        %p510 = pneg %p99
      $region42: #{multi_domain_loss.2} parent=27 // pred_check_branch
        %512 = sbr.rel (%p510) target = $region44
      $region43: #{multi_domain_loss.2} parent=27 // pred_region
        %p513 = scmp.lt.s32.totalorder %s17, 0
        %s514 = scalar_select %p513, %s17, 0
        %s515 = smul.addr %s514, 8
        %s516 = scalar_lea.vmem %s2, %s515
      $region44: #{multi_domain_loss.2} parent=27 // pred_fallthru
        _
    $region28: #{multi_domain_loss.2} parent=5 // pred_fallthru
      _
    %p517 = scmp.le.s32.totalorder 2, %s8
    // Predicated region
    $region45: #{multi_domain_loss.2} parent=5 // pred_check
      %p518 = pneg %p517
    $region46: #{multi_domain_loss.2} parent=5 // pred_check_branch
      %520 = sbr.rel (%p518) target = $region48
    $region47: #{multi_domain_loss.2} parent=5 // pred_region
      %s521 = ssub.s32 %s8, 2
    $region48: #{multi_domain_loss.2} parent=5 // pred_fallthru
      _
  $region6: #{multi_domain_loss.2} parent=0 // loop_footer
    %s12 = sadd.s32 1, %s8
  $region7: #{multi_domain_loss.2} parent=0 // loop_footer_branch
    %7 = sbr.rel target = $region3
  $region8: #{multi_domain_loss.2} parent=0 // loop_exit
    _

// kernel: multi_domain_loss.3
$region0: #{multi_domain_loss.3}
  #allocation0 [shape = 'u32[]', space=smem, size = 0x4, offset = 0x4, fixed_abs, tag = 'smem constant byte address 0x4 - core index']
  #allocation1 [shape = 'u32[144,128]{1,0:T(1,128)}', space=vmem, size = 0x12000, scoped, tag = 'internal scratch']
  #allocation2 [shape = 'f32[1,1]{1,0:T(1,128)}', space=vmem, size = 0x200, scoped, tag = 'scratch operand']
  %s0 = inlined_call_operand.vmem [shape: f32[4,64,1000], index: 0, kind: input, shape index: {}]
  %s1 = inlined_call_operand.vmem [shape: f32[4,64,128], index: 1, kind: input, shape index: {}]
  %s2 = inlined_call_operand.vmem [shape: f32[4,1,1], index: 2, kind: input, shape index: {}]
  %s3 = inlined_call_operand.vmem [shape: f32[1,128], index: 3, kind: input, shape index: {}]
  %s4 = inlined_call_operand.vmem [shape: f32[4,1,1], index: 4, kind: output, shape index: {}]
  %s5 = sld [smem:[#allocation0]]
  $region80: #{multi_domain_loss.3} parent=0
    _
  %s7 = ssub.s32 1, %s5
  %s8 = scalar_select 0, %s7, %s5
  $region1: #{multi_domain_loss.3} parent=0
    #allocation3 [shape = 'u8[262144]{0}', space=vmem, size = 0x40000, scoped, tag = 'input window, operand 0']
    loop: start=0, step=1, limit=10
    $region2: #{multi_domain_loss.3} parent=1 // loop_pre_header
      _
    $region3: #{multi_domain_loss.3} parent=1 // loop_header
      %s10 = sphi 0, %s14
      %p11 = scmp.ge.s32.totalorder %s10, 10
      %s17 = sphi 0, %s29
      %s18 = sphi 0, %s25
      %s19 = sphi 0, %s17
      %s20 = sphi 0, %s18
      %s21 = sphi 0, %s19
      %s22 = sphi 0, %s20
      %s34 = sphi 0, %s36
      %s37 = sphi 0, %s34
      %s38 = sphi 0, %s37
      %s54 = sphi 0, %s38
      %s60 = sphi 0, %s62
      %s63 = sphi 0, %s60
      %s64 = sphi 0, %s63
      %s80 = sphi 0, %s64
      %s86 = sphi 0, %s88
      %s89 = sphi 0, %s86
      %s90 = sphi 0, %s89
      %s106 = sphi 0, %s90
      %s110 = sphi 0, %s110
      %s112 = sphi 0, %s110
      %s113 = sphi 0, %s112
      %s127 = sphi 0, %s113
      %s133 = sphi 0, %s135
      %s136 = sphi 0, %s133
      %s137 = sphi 0, %s136
      %s153 = sphi 0, %s137
    $region4: #{multi_domain_loss.3} parent=1 // loop_header_branch
      %13 = sbr.rel (%p11) target = $region8
    $region5: #{multi_domain_loss.3} parent=1 // loop_body
      %s15 = ssub.s32 %s10, 1
      %s16 = ssub.s32 %s10, 2
      %s23 = sadd.s32 1, %s18
      %p24 = scmp.ge.s32.totalorder %s23, 2
      %s25 = scalar_select %p24, 0, %s23
      %s26 = sadd.s32 1, %s17
      %s27 = scalar_select %p24, %s26, %s17
      %p28 = scmp.ge.s32.totalorder %s27, 4
      %s29 = scalar_select %p28, 0, %s27
      %s30 = ssub.s32 %s17, %s29
      %s31 = ssub.s32 %s18, %s25
      %s32 = sor.u32 %s30, %s31
      %p33 = scmp.eq.s32.totalorder %s32, 0
      %s35 = sadd.s32 %s34, 1
      %s36 = scalar_select %p33, %s34, %s35
      %p39 = pneg %p33
      %p40 = scmp.eq.s32.totalorder %s10, 7
      %p41 = por %p39, %p40
      %p42 = scmp.ne.s32.totalorder %s34, %s37
      %p43 = scmp.eq.s32.totalorder %s10, 0
      %p44 = por %p42, %p43
      %p45 = scmp.ne.s32.totalorder %s34, %s37
      %p46 = scmp.eq.s32.totalorder %s15, 7
      %p47 = por %p45, %p46
      %p48 = scmp.ne.s32.totalorder %s37, %s38
      %p49 = scmp.eq.s32.totalorder %s15, 0
      %p50 = por %p48, %p49
      %p51 = scmp.ne.s32.totalorder %s37, %s38
      %p52 = scmp.eq.s32.totalorder %s16, 7
      %p53 = por %p51, %p52
      %p55 = scmp.ne.s32.totalorder %s38, %s54
      %p56 = scmp.eq.s32.totalorder %s16, 0
      %p57 = por %p55, %p56
      %s58 = ssub.s32 %s17, %s29
      %p59 = scmp.eq.s32.totalorder %s58, 0
      %s61 = sadd.s32 %s60, 1
      %s62 = scalar_select %p59, %s60, %s61
      %p65 = pneg %p59
      %p66 = scmp.eq.s32.totalorder %s10, 7
      %p67 = por %p65, %p66
      %p68 = scmp.ne.s32.totalorder %s60, %s63
      %p69 = scmp.eq.s32.totalorder %s10, 0
      %p70 = por %p68, %p69
      %p71 = scmp.ne.s32.totalorder %s60, %s63
      %p72 = scmp.eq.s32.totalorder %s15, 7
      %p73 = por %p71, %p72
      %p74 = scmp.ne.s32.totalorder %s63, %s64
      %p75 = scmp.eq.s32.totalorder %s15, 0
      %p76 = por %p74, %p75
      %p77 = scmp.ne.s32.totalorder %s63, %s64
      %p78 = scmp.eq.s32.totalorder %s16, 7
      %p79 = por %p77, %p78
      %p81 = scmp.ne.s32.totalorder %s64, %s80
      %p82 = scmp.eq.s32.totalorder %s16, 0
      %p83 = por %p81, %p82
      %s84 = ssub.s32 %s17, %s29
      %p85 = scmp.eq.s32.totalorder %s84, 0
      %s87 = sadd.s32 %s86, 1
      %s88 = scalar_select %p85, %s86, %s87
      %p91 = pneg %p85
      %p92 = scmp.eq.s32.totalorder %s10, 7
      %p93 = por %p91, %p92
      %p94 = scmp.ne.s32.totalorder %s86, %s89
      %p95 = scmp.eq.s32.totalorder %s10, 0
      %p96 = por %p94, %p95
      %p97 = scmp.ne.s32.totalorder %s86, %s89
      %p98 = scmp.eq.s32.totalorder %s15, 7
      %p99 = por %p97, %p98
      %p100 = scmp.ne.s32.totalorder %s89, %s90
      %p101 = scmp.eq.s32.totalorder %s15, 0
      %p102 = por %p100, %p101
      %p103 = scmp.ne.s32.totalorder %s89, %s90
      %p104 = scmp.eq.s32.totalorder %s16, 7
      %p105 = por %p103, %p104
      %p107 = scmp.ne.s32.totalorder %s90, %s106
      %p108 = scmp.eq.s32.totalorder %s16, 0
      %p109 = por %p107, %p108
      %s111 = sadd.s32 %s110, 1
      %p114 = scmp.eq.s32.totalorder %s10, 7
      %p115 = scmp.ne.s32.totalorder %s110, %s112
      %p116 = scmp.eq.s32.totalorder %s10, 0
      %p117 = por %p115, %p116
      %p118 = scmp.ne.s32.totalorder %s110, %s112
      %p119 = scmp.eq.s32.totalorder %s15, 7
      %p120 = por %p118, %p119
      %p121 = scmp.ne.s32.totalorder %s112, %s113
      %p122 = scmp.eq.s32.totalorder %s15, 0
      %p123 = por %p121, %p122
      %p124 = scmp.ne.s32.totalorder %s112, %s113
      %p125 = scmp.eq.s32.totalorder %s16, 7
      %p126 = por %p124, %p125
      %p128 = scmp.ne.s32.totalorder %s113, %s127
      %p129 = scmp.eq.s32.totalorder %s16, 0
      %p130 = por %p128, %p129
      %s131 = ssub.s32 %s17, %s29
      %p132 = scmp.eq.s32.totalorder %s131, 0
      %s134 = sadd.s32 %s133, 1
      %s135 = scalar_select %p132, %s133, %s134
      %p138 = pneg %p132
      %p139 = scmp.eq.s32.totalorder %s10, 7
      %p140 = por %p138, %p139
      %p141 = scmp.ne.s32.totalorder %s133, %s136
      %p142 = scmp.eq.s32.totalorder %s10, 0
      %p143 = por %p141, %p142
      %p144 = scmp.ne.s32.totalorder %s133, %s136
      %p145 = scmp.eq.s32.totalorder %s15, 7
      %p146 = por %p144, %p145
      %p147 = scmp.ne.s32.totalorder %s136, %s137
      %p148 = scmp.eq.s32.totalorder %s15, 0
      %p149 = por %p147, %p148
      %p150 = scmp.ne.s32.totalorder %s136, %s137
      %p151 = scmp.eq.s32.totalorder %s16, 7
      %p152 = por %p150, %p151
      %p154 = scmp.ne.s32.totalorder %s137, %s153
      %p155 = scmp.eq.s32.totalorder %s16, 0
      %p156 = por %p154, %p155
      %p157 = scmp.le.s32.totalorder 1, %s10
      %p158 = scmp.lt.s32.totalorder %s10, 9
      %p159 = pnand %p157, %p158
      %p160 = pneg %p159
      // Predicated region
      $region9: #{multi_domain_loss.3} parent=5 // pred_check
        _
      $region10: #{multi_domain_loss.3} parent=5 // pred_check_branch
        %162 = sbr.rel (%p159) target = $region12
      $region11: #{multi_domain_loss.3} parent=5 // pred_region
        %s163 = ssub.s32 %s10, 1
        // Predicated region
        $region13: #{multi_domain_loss.3} parent=11 // pred_check
          %p164 = pneg %p123
        $region14: #{multi_domain_loss.3} parent=11 // pred_check_branch
          %166 = sbr.rel (%p164) target = $region16
        $region15: #{multi_domain_loss.3} parent=11 // pred_region
          _
        $region16: #{multi_domain_loss.3} parent=11 // pred_fallthru
          _
      $region12: #{multi_domain_loss.3} parent=5 // pred_fallthru
        _
      %p167 = scmp.lt.s32.totalorder %s10, 8
      // Predicated region
      $region17: #{multi_domain_loss.3} parent=5 // pred_check
        %p168 = pneg %p167
      $region18: #{multi_domain_loss.3} parent=5 // pred_check_branch
        %170 = sbr.rel (%p168) target = $region20
      $region19: #{multi_domain_loss.3} parent=5 // pred_region
        // Predicated region
        $region21: #{multi_domain_loss.3} parent=19 // pred_check
          %p171 = pneg %p44
        $region22: #{multi_domain_loss.3} parent=19 // pred_check_branch
          %173 = sbr.rel (%p171) target = $region24
        $region23: #{multi_domain_loss.3} parent=19 // pred_region
          %s174 = sand.u32 %s34, 1
          %s175 = sand.u32 %s34, 1
          %s176 = smul.addr %s175, 256
          %s177 = scalar_lea.vmem [#allocation3], %s176
          %s178 = smul.u32 4, %s18
          %s179 = smul.addr %s17, 64
          %s180 = sadd.s32 %s178, %s179
          %s181 = smul.addr %s180, 8
          %s182 = scalar_lea.vmem %s0, %s181
          // Predicated region
          $region25: #{multi_domain_loss.3} parent=23 // pred_check
            _
          $region26: #{multi_domain_loss.3} parent=23 // pred_check_branch
            %184 = sbr.rel (0) target = $region28
          $region27: #{multi_domain_loss.3} parent=23 // pred_region
            // Predicated region
            $region29: #{multi_domain_loss.3} parent=27 // pred_check
              _
            $region30: #{multi_domain_loss.3} parent=27 // pred_check_branch
              %186 = sbr.rel (0) target = $region32
            $region31: #{multi_domain_loss.3} parent=27 // pred_region
              loop: start=0, step=1, limit=1
              $region33: #{multi_domain_loss.3} parent=31 // loop_pre_header
                _
              $region34: #{multi_domain_loss.3} parent=31 // loop_header
                %s188 = sphi 0, %s192
                %p189 = scmp.ge.s32.totalorder %s188, 1
                %s193 = sphi %s182, %s182
                %s194 = sphi %s177, %s177
              $region35: #{multi_domain_loss.3} parent=31 // loop_header_branch
                %191 = sbr.rel (%p189) target = $region39
              $region36: #{multi_domain_loss.3} parent=31 // loop_body
                %v195 = vld [vmem:[%s193] sm:$0xff]
                %196 = vst [vmem:[%s194] sm:$0xff] %v195
                %v197 = vld [vmem:[%s193 + $0x8] sm:$0xff]
                %198 = vst [vmem:[%s194 + $0x8] sm:$0xff] %v197
                %v199 = vld [vmem:[%s193 + $0x10] sm:$0xff]
                %200 = vst [vmem:[%s194 + $0x10] sm:$0xff] %v199
                %v201 = vld [vmem:[%s193 + $0x18] sm:$0xff]
                %202 = vst [vmem:[%s194 + $0x18] sm:$0xff] %v201
                %v203 = vld [vmem:[%s193 + $0x40] sm:$0xff]
                %204 = vst [vmem:[%s194 + $0x20] sm:$0xff] %v203
                %v205 = vld [vmem:[%s193 + $0x48] sm:$0xff]
                %206 = vst [vmem:[%s194 + $0x28] sm:$0xff] %v205
                %v207 = vld [vmem:[%s193 + $0x50] sm:$0xff]
                %208 = vst [vmem:[%s194 + $0x30] sm:$0xff] %v207
                %v209 = vld [vmem:[%s193 + $0x58] sm:$0xff]
                %210 = vst [vmem:[%s194 + $0x38] sm:$0xff] %v209
                %v211 = vld [vmem:[%s193 + $0x80] sm:$0xff]
                %212 = vst [vmem:[%s194 + $0x40] sm:$0xff] %v211
                %v213 = vld [vmem:[%s193 + $0x88] sm:$0xff]
                %214 = vst [vmem:[%s194 + $0x48] sm:$0xff] %v213
                %v215 = vld [vmem:[%s193 + $0x90] sm:$0xff]
                %216 = vst [vmem:[%s194 + $0x50] sm:$0xff] %v215
                %v217 = vld [vmem:[%s193 + $0x98] sm:$0xff]
                %218 = vst [vmem:[%s194 + $0x58] sm:$0xff] %v217
                %v219 = vld [vmem:[%s193 + $0xc0] sm:$0xff]
                %220 = vst [vmem:[%s194 + $0x60] sm:$0xff] %v219
                %v221 = vld [vmem:[%s193 + $0xc8] sm:$0xff]
                %222 = vst [vmem:[%s194 + $0x68] sm:$0xff] %v221
                %v223 = vld [vmem:[%s193 + $0xd0] sm:$0xff]
                %224 = vst [vmem:[%s194 + $0x70] sm:$0xff] %v223
                %v225 = vld [vmem:[%s193 + $0xd8] sm:$0xff]
                %226 = vst [vmem:[%s194 + $0x78] sm:$0xff] %v225
                %v227 = vld [vmem:[%s193 + $0x100] sm:$0xff]
                %228 = vst [vmem:[%s194 + $0x80] sm:$0xff] %v227
                %v229 = vld [vmem:[%s193 + $0x108] sm:$0xff]
                %230 = vst [vmem:[%s194 + $0x88] sm:$0xff] %v229
                %v231 = vld [vmem:[%s193 + $0x110] sm:$0xff]
                %232 = vst [vmem:[%s194 + $0x90] sm:$0xff] %v231
                %v233 = vld [vmem:[%s193 + $0x118] sm:$0xff]
                %234 = vst [vmem:[%s194 + $0x98] sm:$0xff] %v233
                %v235 = vld [vmem:[%s193 + $0x140] sm:$0xff]
                %236 = vst [vmem:[%s194 + $0xa0] sm:$0xff] %v235
                %v237 = vld [vmem:[%s193 + $0x148] sm:$0xff]
                %238 = vst [vmem:[%s194 + $0xa8] sm:$0xff] %v237
                %v239 = vld [vmem:[%s193 + $0x150] sm:$0xff]
                %240 = vst [vmem:[%s194 + $0xb0] sm:$0xff] %v239
                %v241 = vld [vmem:[%s193 + $0x158] sm:$0xff]
                %242 = vst [vmem:[%s194 + $0xb8] sm:$0xff] %v241
                %v243 = vld [vmem:[%s193 + $0x180] sm:$0xff]
                %244 = vst [vmem:[%s194 + $0xc0] sm:$0xff] %v243
                %v245 = vld [vmem:[%s193 + $0x188] sm:$0xff]
                %246 = vst [vmem:[%s194 + $0xc8] sm:$0xff] %v245
                %v247 = vld [vmem:[%s193 + $0x190] sm:$0xff]
                %248 = vst [vmem:[%s194 + $0xd0] sm:$0xff] %v247
                %v249 = vld [vmem:[%s193 + $0x198] sm:$0xff]
                %250 = vst [vmem:[%s194 + $0xd8] sm:$0xff] %v249
                %v251 = vld [vmem:[%s193 + $0x1c0] sm:$0xff]
                %252 = vst [vmem:[%s194 + $0xe0] sm:$0xff] %v251
                %v253 = vld [vmem:[%s193 + $0x1c8] sm:$0xff]
                %254 = vst [vmem:[%s194 + $0xe8] sm:$0xff] %v253
                %v255 = vld [vmem:[%s193 + $0x1d0] sm:$0xff]
                %256 = vst [vmem:[%s194 + $0xf0] sm:$0xff] %v255
                %v257 = vld [vmem:[%s193 + $0x1d8] sm:$0xff]
                %258 = vst [vmem:[%s194 + $0xf8] sm:$0xff] %v257
              $region37: #{multi_domain_loss.3} parent=31 // loop_footer
                %s192 = sadd.s32 1, %s188
              $region38: #{multi_domain_loss.3} parent=31 // loop_footer_branch
                %187 = sbr.rel target = $region34
              $region39: #{multi_domain_loss.3} parent=31 // loop_exit
                _
            $region32: #{multi_domain_loss.3} parent=27 // pred_fallthru
              _
            // Predicated region
            $region40: #{multi_domain_loss.3} parent=27 // pred_check
              _
            $region41: #{multi_domain_loss.3} parent=27 // pred_check_branch
              %260 = sbr.rel target = $region43
            $region42: #{multi_domain_loss.3} parent=27 // pred_region
              _
            $region43: #{multi_domain_loss.3} parent=27 // pred_fallthru
              _
          $region28: #{multi_domain_loss.3} parent=23 // pred_fallthru
            _
          %261 = vnop
        $region24: #{multi_domain_loss.3} parent=19 // pred_fallthru
          _
        // Predicated region
        $region44: #{multi_domain_loss.3} parent=19 // pred_check
          %p262 = pneg %p70
        $region45: #{multi_domain_loss.3} parent=19 // pred_check_branch
          %264 = sbr.rel (%p262) target = $region47
        $region46: #{multi_domain_loss.3} parent=19 // pred_region
          %p265 = scmp.lt.s32.totalorder %s17, 3
          %s266 = scalar_select %p265, %s17, 3
          %s267 = smul.addr %s266, 8
          %s268 = smul.addr %s267, 8
          %s269 = scalar_lea.vmem %s1, %s268
        $region47: #{multi_domain_loss.3} parent=19 // pred_fallthru
          _
        // Predicated region
        $region48: #{multi_domain_loss.3} parent=19 // pred_check
          %p270 = pneg %p96
        $region49: #{multi_domain_loss.3} parent=19 // pred_check_branch
          %272 = sbr.rel (%p270) target = $region51
        $region50: #{multi_domain_loss.3} parent=19 // pred_region
          %p273 = scmp.lt.s32.totalorder %s17, 3
          %s274 = scalar_select %p273, %s17, 3
          %s275 = scalar_lea.vmem %s2, %s274
        $region51: #{multi_domain_loss.3} parent=19 // pred_fallthru
          _
      $region20: #{multi_domain_loss.3} parent=5 // pred_fallthru
        _
      %p276 = scmp.le.s32.totalorder 1, %s10
      %p277 = scmp.lt.s32.totalorder %s10, 9
      %p278 = pnand %p276, %p277
      %p279 = pneg %p278
      // Predicated region
      $region52: #{multi_domain_loss.3} parent=5 // pred_check
        _
      $region53: #{multi_domain_loss.3} parent=5 // pred_check_branch
        %281 = sbr.rel (%p278) target = $region55
      $region54: #{multi_domain_loss.3} parent=5 // pred_region
        %s282 = ssub.s32 %s10, 1
        %s283 = sand.u32 %s37, 1
        %s284 = sand.u32 %s37, 1
        %s285 = smul.addr %s284, 256
        %s286 = scalar_lea.vmem [#allocation3], %s285
        // Predicated region
        $region56: #{multi_domain_loss.3} parent=54 // pred_check
          %p287 = pneg %p50
        $region57: #{multi_domain_loss.3} parent=54 // pred_check_branch
          %289 = sbr.rel (%p287) target = $region59
        $region58: #{multi_domain_loss.3} parent=54 // pred_region
          _
        $region59: #{multi_domain_loss.3} parent=54 // pred_fallthru
          _
        %s290 = sand.u32 %s37, 1
        %s291 = sand.u32 %s37, 1
        %s292 = smul.addr %s291, 256
        %s293 = scalar_lea.vmem [#allocation3], %s292
        %p294 = pneg %p50
        %p295 = pneg %p47
        %p296 = scmp.lt.s32.totalorder %s19, 3
        %s297 = scalar_select %p296, %s19, 3
        %s298 = smul.addr %s297, 8
        %s299 = smul.addr %s298, 8
        %s300 = scalar_lea.vmem %s1, %s299
        %p301 = pneg %p76
        %p302 = pneg %p73
        %p303 = scmp.lt.s32.totalorder %s19, 3
        %s304 = scalar_select %p303, %s19, 3
        %s305 = scalar_lea.vmem %s2, %s304
        %p306 = pneg %p102
        %p307 = pneg %p99
        %p308 = pneg %p123
        %p309 = pneg %p120
        %p310 = pneg %p149
        %p311 = pneg %p146
        %p312 = scmp.lt.s32.totalorder %s19, 3
        %s313 = scalar_select %p312, %s19, 3
        %s314 = scalar_lea.vmem %s4, %s313
        %s315 = smul.u32 4, %s20
        %p316 = scmp.lt.s32.totalorder %s19, 3
        %s317 = scalar_select %p316, %s19, 3
        %s318 = smul.addr %s317, 8
        %s319 = smul.addr %s318, 8
        %s320 = scalar_lea.vmem %s1, %s319
        %p321 = scmp.lt.s32.totalorder %s19, 3
        %s322 = scalar_select %p321, %s19, 3
        %s323 = scalar_lea.vmem %s2, %s322
        %p324 = scmp.lt.s32.totalorder %s19, 3
        %s325 = scalar_select %p324, %s19, 3
        %s326 = scalar_lea.vmem %s4, %s325
        %p327 = scmp.eq.s32.totalorder %s20, 0
        // Predicated region
        $region60: #{multi_domain_loss.3} parent=54 // pred_check
          %p328 = pneg %p327
        $region61: #{multi_domain_loss.3} parent=54 // pred_check_branch
          %330 = sbr.rel (%p328) target = $region63
        $region62: #{multi_domain_loss.3} parent=54 // pred_region
          %vm331 = vcmask 0
          %332 = vst.msk [vmem:[#allocation2] sm:$0x1] %vm331, 0.0
        $region63: #{multi_domain_loss.3} parent=54 // pred_fallthru
          _
        %v333 = vld [vmem:[%s320] sm:$0xff]
        %v334 = vld [vmem:[%s320 + $0x8] sm:$0xff]
        %v335 = vld [vmem:[%s320 + $0x10] sm:$0xff]
        %v336 = vld [vmem:[%s320 + $0x18] sm:$0xff]
        %v337 = vld [vmem:[%s320 + $0x20] sm:$0xff]
        %v338 = vld [vmem:[%s320 + $0x28] sm:$0xff]
        %v339 = vld [vmem:[%s320 + $0x30] sm:$0xff]
        %v340 = vld [vmem:[%s320 + $0x38] sm:$0xff]
        %v341 = vld [vmem:[%s3] sm:$0x1]
        %v342 = vld [vmem:[%s323] sm:$0x1]
        %s343 = smul.u32 %s20, 512
        %v344 = vld [vmem:[%s286] sm:$0xff]
        %v345 = vld [vmem:[%s286 + $0x20] sm:$0xff]
        %v346 = vld [vmem:[%s286 + $0x40] sm:$0xff]
        %v347 = vld [vmem:[%s286 + $0x60] sm:$0xff]
        %v348 = vld [vmem:[%s286 + $0x80] sm:$0xff]
        %v349 = vld [vmem:[%s286 + $0xa0] sm:$0xff]
        %v350 = vld [vmem:[%s286 + $0xc0] sm:$0xff]
        %v351 = vld [vmem:[%s286 + $0xe0] sm:$0xff]
        %352 = vxpose.xlu0.b32.start [1/16] %v344, 128
        %353 = vxpose.xlu0.b32.cont [2/16] %v345, 128
        %354 = vxpose.xlu0.b32.cont [3/16] %v346, 128
        %355 = vxpose.xlu0.b32.cont [4/16] %v347, 128
        %356 = vxpose.xlu0.b32.cont [5/16] %v348, 128
        %357 = vxpose.xlu0.b32.cont [6/16] %v349, 128
        %358 = vxpose.xlu0.b32.cont [7/16] %v350, 128
        %359 = vxpose.xlu0.b32.cont [8/16] %v351, 128
        %360 = vxpose.xlu0.b32.cont [9/16] 0.0, 128
        %361 = vxpose.xlu0.b32.cont [10/16] 0.0, 128
        %362 = vxpose.xlu0.b32.cont [11/16] 0.0, 128
        %363 = vxpose.xlu0.b32.cont [12/16] 0.0, 128
        %364 = vxpose.xlu0.b32.cont [13/16] 0.0, 128
        %365 = vxpose.xlu0.b32.cont [14/16] 0.0, 128
        %366 = vxpose.xlu0.b32.cont [15/16] 0.0, 128
        %367 = vxpose.xlu0.b32.end [16/16] 0.0, 128
        %v368 = vpop.trf.xlu0
        %v369 = vpop.trf.xlu0
        %v370 = vpop.trf.xlu0
        %v371 = vpop.trf.xlu0
        %v372 = vpop.trf.xlu0
        %v373 = vpop.trf.xlu0
        %v374 = vpop.trf.xlu0
        %v375 = vpop.trf.xlu0
        %v376 = vpop.trf.xlu0
        %v377 = vpop.trf.xlu0
        %v378 = vpop.trf.xlu0
        %v379 = vpop.trf.xlu0
        %v380 = vpop.trf.xlu0
        %v381 = vpop.trf.xlu0
        %v382 = vpop.trf.xlu0
        %v383 = vpop.trf.xlu0
        %vm384 = vcmask 523264
        %v386 = vsel %vm384, %v368, 0
        %v389 = vsel %vm384, %v369, 0
        %v392 = vsel %vm384, %v370, 0
        %v395 = vsel %vm384, %v371, 0
        %v398 = vsel %vm384, %v372, 0
        %v401 = vsel %vm384, %v373, 0
        %v404 = vsel %vm384, %v374, 0
        %v407 = vsel %vm384, %v375, 0
        %v410 = vsel %vm384, %v376, 0
        %v413 = vsel %vm384, %v377, 0
        %v416 = vsel %vm384, %v378, 0
        %v419 = vsel %vm384, %v379, 0
        %v422 = vsel %vm384, %v380, 0
        %v425 = vsel %vm384, %v381, 0
        %v428 = vsel %vm384, %v382, 0
        %v431 = vsel %vm384, %v383, 0
        %433 = vmatprep.subr.mxu0 0.0
        %434 = vmatpush1.msra.mxu0 0.0
        %435 = vmatprep.subr.mxu0 0.0
        %436 = vmatpush1.msra.mxu0 0.0
        %437 = vmatprep.subr.mxu0 0.0
        %438 = vmatpush1.msra.mxu0 0.0
        %439 = vmatprep.subr.mxu0 0.0
        %440 = vmatpush1.msra.mxu0 0.0
        %441 = vmatprep.subr.mxu0 0.0
        %442 = vmatpush1.msra.mxu0 0.0
        %443 = vmatprep.subr.mxu0 0.0
        %444 = vmatpush1.msra.mxu0 0.0
        %445 = vmatprep.subr.mxu0 0.0
        %446 = vmatpush1.msra.mxu0 0.0
        %447 = vmatprep.subr.mxu0 0.0
        %448 = vmatpush1.msra.mxu0 0.0
        %449 = vmatprep.subr.mxu0 0.0
        %450 = vmatpush1.msra.mxu0 %v340
        %451 = vmatprep.subr.mxu0 0.0
        %452 = vmatpush1.msra.mxu0 %v339
        %453 = vmatprep.subr.mxu0 0.0
        %454 = vmatpush1.msra.mxu0 %v338
        %455 = vmatprep.subr.mxu0 0.0
        %456 = vmatpush1.msra.mxu0 %v337
        %457 = vmatprep.subr.mxu0 0.0
        %458 = vmatpush1.msra.mxu0 %v336
        %459 = vmatprep.subr.mxu0 0.0
        %460 = vmatpush1.msra.mxu0 %v335
        %461 = vmatprep.subr.mxu0 0.0
        %462 = vmatpush1.msra.mxu0 %v334
        %463 = vmatprep.subr.mxu0 0.0
        %464 = vmatpush1.msra.mxu0 %v333
        %465 = vmatprep.subr.mxu0 0.0
        %466 = vmatpush2.msra.mxu0 0.0
        %467 = vmatprep.subr.mxu0 0.0
        %468 = vmatpush2.msra.mxu0 0.0
        %469 = vmatprep.subr.mxu0 0.0
        %470 = vmatpush2.msra.mxu0 0.0
        %471 = vmatprep.subr.mxu0 0.0
        %472 = vmatpush2.msra.mxu0 0.0
        %473 = vmatprep.subr.mxu0 0.0
        %474 = vmatpush2.msra.mxu0 0.0
        %475 = vmatprep.subr.mxu0 0.0
        %476 = vmatpush2.msra.mxu0 0.0
        %477 = vmatprep.subr.mxu0 0.0
        %478 = vmatpush2.msra.mxu0 0.0
        %479 = vmatprep.subr.mxu0 0.0
        %480 = vmatpush2.msra.mxu0 0.0
        %481 = vmatprep.subr.mxu0 0.0
        %482 = vmatpush2.msra.mxu0 0.0
        %483 = vmatprep.subr.mxu0 0.0
        %484 = vmatpush2.msra.mxu0 0.0
        %485 = vmatprep.subr.mxu0 0.0
        %486 = vmatpush2.msra.mxu0 0.0
        %487 = vmatprep.subr.mxu0 0.0
        %488 = vmatpush2.msra.mxu0 0.0
        %489 = vmatprep.subr.mxu0 0.0
        %490 = vmatpush2.msra.mxu0 0.0
        %491 = vmatprep.subr.mxu0 0.0
        %492 = vmatpush2.msra.mxu0 0.0
        %493 = vmatprep.subr.mxu0 0.0
        %494 = vmatpush2.msra.mxu0 0.0
        %495 = vmatprep.subr.mxu0 0.0
        %496 = vmatpush2.msra.mxu0 0.0
        %497 = vmatprep.mubr.f32.mxu0 0.0
        %498 = vmatmul.mubr.f32.gmra.mxu0 %v386
        %v499 = vpop.f32.mrf.mxu0
        %v500 = vadd.f32 0.0, %v499
        %v501 = vpop.f32.mrf.mxu0
        %502 = vmatprep.mubr.f32.mxu0 0.0
        %503 = vmatmul.mubr.f32.gmra.mxu0 %v389
        %v504 = vpop.f32.mrf.mxu0
        %v505 = vadd.f32 0.0, %v504
        %v506 = vpop.f32.mrf.mxu0
        %507 = vmatprep.mubr.f32.mxu0 0.0
        %508 = vmatmul.mubr.f32.gmra.mxu0 %v392
        %v509 = vpop.f32.mrf.mxu0
        %v510 = vadd.f32 0.0, %v509
        %v511 = vpop.f32.mrf.mxu0
        %512 = vmatprep.mubr.f32.mxu0 0.0
        %513 = vmatmul.mubr.f32.gmra.mxu0 %v395
        %v514 = vpop.f32.mrf.mxu0
        %v515 = vadd.f32 0.0, %v514
        %v516 = vpop.f32.mrf.mxu0
        %517 = vmatprep.mubr.f32.mxu0 0.0
        %518 = vmatmul.mubr.f32.gmra.mxu0 %v398
        %v519 = vpop.f32.mrf.mxu0
        %v520 = vadd.f32 0.0, %v519
        %v521 = vpop.f32.mrf.mxu0
        %522 = vmatprep.mubr.f32.mxu0 0.0
        %523 = vmatmul.mubr.f32.gmra.mxu0 %v401
        %v524 = vpop.f32.mrf.mxu0
        %v525 = vadd.f32 0.0, %v524
        %v526 = vpop.f32.mrf.mxu0
        %527 = vmatprep.mubr.f32.mxu0 0.0
        %528 = vmatmul.mubr.f32.gmra.mxu0 %v404
        %v529 = vpop.f32.mrf.mxu0
        %v530 = vadd.f32 0.0, %v529
        %v531 = vpop.f32.mrf.mxu0
        %532 = vmatprep.mubr.f32.mxu0 0.0
        %533 = vmatmul.mubr.f32.gmra.mxu0 %v407
        %v534 = vpop.f32.mrf.mxu0
        %v535 = vadd.f32 0.0, %v534
        %v536 = vpop.f32.mrf.mxu0
        %537 = vmatprep.mubr.f32.mxu0 0.0
        %538 = vmatmul.mubr.f32.gmra.mxu0 %v410
        %v539 = vpop.f32.mrf.mxu0
        %v540 = vadd.f32 0.0, %v539
        %v541 = vpop.f32.mrf.mxu0
        %542 = vmatprep.mubr.f32.mxu0 0.0
        %543 = vmatmul.mubr.f32.gmra.mxu0 %v413
        %v544 = vpop.f32.mrf.mxu0
        %v545 = vadd.f32 0.0, %v544
        %v546 = vpop.f32.mrf.mxu0
        %547 = vmatprep.mubr.f32.mxu0 0.0
        %548 = vmatmul.mubr.f32.gmra.mxu0 %v416
        %v549 = vpop.f32.mrf.mxu0
        %v550 = vadd.f32 0.0, %v549
        %v551 = vpop.f32.mrf.mxu0
        %552 = vmatprep.mubr.f32.mxu0 0.0
        %553 = vmatmul.mubr.f32.gmra.mxu0 %v419
        %v554 = vpop.f32.mrf.mxu0
        %v555 = vadd.f32 0.0, %v554
        %v556 = vpop.f32.mrf.mxu0
        %557 = vmatprep.mubr.f32.mxu0 0.0
        %558 = vmatmul.mubr.f32.gmra.mxu0 %v422
        %v559 = vpop.f32.mrf.mxu0
        %v560 = vadd.f32 0.0, %v559
        %v561 = vpop.f32.mrf.mxu0
        %562 = vmatprep.mubr.f32.mxu0 0.0
        %563 = vmatmul.mubr.f32.gmra.mxu0 %v425
        %v564 = vpop.f32.mrf.mxu0
        %v565 = vadd.f32 0.0, %v564
        %v566 = vpop.f32.mrf.mxu0
        %567 = vmatprep.mubr.f32.mxu0 0.0
        %568 = vmatmul.mubr.f32.gmra.mxu0 %v428
        %v569 = vpop.f32.mrf.mxu0
        %v570 = vadd.f32 0.0, %v569
        %v571 = vpop.f32.mrf.mxu0
        %572 = vmatprep.mubr.f32.mxu0 0.0
        %573 = vmatmul.mubr.f32.gmra.mxu0 %v431
        %v574 = vpop.f32.mrf.mxu0
        %v575 = vadd.f32 0.0, %v574
        %v576 = vpop.f32.mrf.mxu0
        %577 = vdwg.mxu0
        %v578 = vmul.f32 %v500, 2.0
        %v579 = vmul.f32 %v505, 2.0
        %v580 = vmul.f32 %v510, 2.0
        %v581 = vmul.f32 %v515, 2.0
        %v582 = vmul.f32 %v520, 2.0
        %v583 = vmul.f32 %v525, 2.0
        %v584 = vmul.f32 %v530, 2.0
        %v585 = vmul.f32 %v535, 2.0
        %v586 = vmul.f32 %v540, 2.0
        %v587 = vmul.f32 %v545, 2.0
        %v588 = vmul.f32 %v550, 2.0
        %v589 = vmul.f32 %v555, 2.0
        %v590 = vmul.f32 %v560, 2.0
        %v591 = vmul.f32 %v565, 2.0
        %v592 = vmul.f32 %v570, 2.0
        %v593 = vmul.f32 %v575, 2.0
        %v595 = vlaneseq
        %v596 = vshrl.u32 %v595, 7
        %v597 = vsub.s32 0, %v596
        %v598 = vrot.slane %v341, %v597
        %v600 = vsub.f32 %v578, %v598
        %v601 = vsub.f32 %v579, %v598
        %v602 = vsub.f32 %v580, %v598
        %v603 = vsub.f32 %v581, %v598
        %v604 = vsub.f32 %v582, %v598
        %v605 = vsub.f32 %v583, %v598
        %v606 = vsub.f32 %v584, %v598
        %v607 = vsub.f32 %v585, %v598
        %v608 = vsub.f32 %v586, %v598
        %v609 = vsub.f32 %v587, %v598
        %v610 = vsub.f32 %v588, %v598
        %v611 = vsub.f32 %v589, %v598
        %v612 = vsub.f32 %v590, %v598
        %v613 = vsub.f32 %v591, %v598
        %v614 = vsub.f32 %v592, %v598
        %v615 = vsub.f32 %v593, %v598
        %616 = vmax.xlane.f32.xlu0 %v600
        %v617 = vpop.xlane.xlu0 %616
        %618 = vmax.xlane.f32.xlu0 %v601
        %v619 = vpop.xlane.xlu0 %618
        %620 = vmax.xlane.f32.xlu0 %v602
        %v621 = vpop.xlane.xlu0 %620
        %622 = vmax.xlane.f32.xlu0 %v603
        %v623 = vpop.xlane.xlu0 %622
        %624 = vmax.xlane.f32.xlu0 %v604
        %v625 = vpop.xlane.xlu0 %624
        %626 = vmax.xlane.f32.xlu0 %v605
        %v627 = vpop.xlane.xlu0 %626
        %628 = vmax.xlane.f32.xlu0 %v606
        %v629 = vpop.xlane.xlu0 %628
        %630 = vmax.xlane.f32.xlu0 %v607
        %v631 = vpop.xlane.xlu0 %630
        %632 = vmax.xlane.f32.xlu0 %v608
        %v633 = vpop.xlane.xlu0 %632
        %634 = vmax.xlane.f32.xlu0 %v609
        %v635 = vpop.xlane.xlu0 %634
        %636 = vmax.xlane.f32.xlu0 %v610
        %v637 = vpop.xlane.xlu0 %636
        %638 = vmax.xlane.f32.xlu0 %v611
        %v639 = vpop.xlane.xlu0 %638
        %640 = vmax.xlane.f32.xlu0 %v612
        %v641 = vpop.xlane.xlu0 %640
        %642 = vmax.xlane.f32.xlu0 %v613
        %v643 = vpop.xlane.xlu0 %642
        %644 = vmax.xlane.f32.xlu0 %v614
        %v645 = vpop.xlane.xlu0 %644
        %646 = vmax.xlane.f32.xlu0 %v615
        %v647 = vpop.xlane.xlu0 %646
        %v648 = vsub.f32 %v600, %v617
        %v649 = vsub.f32 %v601, %v619
        %v650 = vsub.f32 %v602, %v621
        %v651 = vsub.f32 %v603, %v623
        %v652 = vsub.f32 %v604, %v625
        %v653 = vsub.f32 %v605, %v627
        %v654 = vsub.f32 %v606, %v629
        %v655 = vsub.f32 %v607, %v631
        %v656 = vsub.f32 %v608, %v633
        %v657 = vsub.f32 %v609, %v635
        %v658 = vsub.f32 %v610, %v637
        %v659 = vsub.f32 %v611, %v639
        %v660 = vsub.f32 %v612, %v641
        %v661 = vsub.f32 %v613, %v643
        %v662 = vsub.f32 %v614, %v645
        %v663 = vsub.f32 %v615, %v647
        %v664 = vmul.f32 %v648, 1.442695
        %v665 = vpow.pop %v664
        %v666 = vmul.f32 %v649, 1.442695
        %v667 = vpow.pop %v666
        %v668 = vmul.f32 %v650, 1.442695
        %v669 = vpow.pop %v668
        %v670 = vmul.f32 %v651, 1.442695
        %v671 = vpow.pop %v670
        %v672 = vmul.f32 %v652, 1.442695
        %v673 = vpow.pop %v672
        %v674 = vmul.f32 %v653, 1.442695
        %v675 = vpow.pop %v674
        %v676 = vmul.f32 %v654, 1.442695
        %v677 = vpow.pop %v676
        %v678 = vmul.f32 %v655, 1.442695
        %v679 = vpow.pop %v678
        %v680 = vmul.f32 %v656, 1.442695
        %v681 = vpow.pop %v680
        %v682 = vmul.f32 %v657, 1.442695
        %v683 = vpow.pop %v682
        %v684 = vmul.f32 %v658, 1.442695
        %v685 = vpow.pop %v684
        %v686 = vmul.f32 %v659, 1.442695
        %v687 = vpow.pop %v686
        %v688 = vmul.f32 %v660, 1.442695
        %v689 = vpow.pop %v688
        %v690 = vmul.f32 %v661, 1.442695
        %v691 = vpow.pop %v690
        %v692 = vmul.f32 %v662, 1.442695
        %v693 = vpow.pop %v692
        %v694 = vmul.f32 %v663, 1.442695
        %v695 = vpow.pop %v694
        %696 = vadd.xlane.f32.xlu0 %v665
        %v697 = vpop.xlane.xlu0 %696
        %698 = vadd.xlane.f32.xlu0 %v667
        %v699 = vpop.xlane.xlu0 %698
        %700 = vadd.xlane.f32.xlu0 %v669
        %v701 = vpop.xlane.xlu0 %700
        %702 = vadd.xlane.f32.xlu0 %v671
        %v703 = vpop.xlane.xlu0 %702
        %704 = vadd.xlane.f32.xlu0 %v673
        %v705 = vpop.xlane.xlu0 %704
        %706 = vadd.xlane.f32.xlu0 %v675
        %v707 = vpop.xlane.xlu0 %706
        %708 = vadd.xlane.f32.xlu0 %v677
        %v709 = vpop.xlane.xlu0 %708
        %710 = vadd.xlane.f32.xlu0 %v679
        %v711 = vpop.xlane.xlu0 %710
        %712 = vadd.xlane.f32.xlu0 %v681
        %v713 = vpop.xlane.xlu0 %712
        %714 = vadd.xlane.f32.xlu0 %v683
        %v715 = vpop.xlane.xlu0 %714
        %716 = vadd.xlane.f32.xlu0 %v685
        %v717 = vpop.xlane.xlu0 %716
        %718 = vadd.xlane.f32.xlu0 %v687
        %v719 = vpop.xlane.xlu0 %718
        %720 = vadd.xlane.f32.xlu0 %v689
        %v721 = vpop.xlane.xlu0 %720
        %722 = vadd.xlane.f32.xlu0 %v691
        %v723 = vpop.xlane.xlu0 %722
        %724 = vadd.xlane.f32.xlu0 %v693
        %v725 = vpop.xlane.xlu0 %724
        %726 = vadd.xlane.f32.xlu0 %v695
        %v727 = vpop.xlane.xlu0 %726
        %v728 = vlog2.pop %v697
        %v729 = vmul.f32 %v728, 0.6931472
        %v730 = vlog2.pop %v699
        %v731 = vmul.f32 %v730, 0.6931472
        %v732 = vlog2.pop %v701
        %v733 = vmul.f32 %v732, 0.6931472
        %v734 = vlog2.pop %v703
        %v735 = vmul.f32 %v734, 0.6931472
        %v736 = vlog2.pop %v705
        %v737 = vmul.f32 %v736, 0.6931472
        %v738 = vlog2.pop %v707
        %v739 = vmul.f32 %v738, 0.6931472
        %v740 = vlog2.pop %v709
        %v741 = vmul.f32 %v740, 0.6931472
        %v742 = vlog2.pop %v711
        %v743 = vmul.f32 %v742, 0.6931472
        %v744 = vlog2.pop %v713
        %v745 = vmul.f32 %v744, 0.6931472
        %v746 = vlog2.pop %v715
        %v747 = vmul.f32 %v746, 0.6931472
        %v748 = vlog2.pop %v717
        %v749 = vmul.f32 %v748, 0.6931472
        %v750 = vlog2.pop %v719
        %v751 = vmul.f32 %v750, 0.6931472
        %v752 = vlog2.pop %v721
        %v753 = vmul.f32 %v752, 0.6931472
        %v754 = vlog2.pop %v723
        %v755 = vmul.f32 %v754, 0.6931472
        %v756 = vlog2.pop %v725
        %v757 = vmul.f32 %v756, 0.6931472
        %v758 = vlog2.pop %v727
        %v759 = vmul.f32 %v758, 0.6931472
        %v760 = vadd.f32 %v617, %v729
        %v761 = vadd.f32 %v619, %v731
        %v762 = vadd.f32 %v621, %v733
        %v763 = vadd.f32 %v623, %v735
        %v764 = vadd.f32 %v625, %v737
        %v765 = vadd.f32 %v627, %v739
        %v766 = vadd.f32 %v629, %v741
        %v767 = vadd.f32 %v631, %v743
        %v768 = vadd.f32 %v633, %v745
        %v769 = vadd.f32 %v635, %v747
        %v770 = vadd.f32 %v637, %v749
        %v771 = vadd.f32 %v639, %v751
        %v772 = vadd.f32 %v641, %v753
        %v773 = vadd.f32 %v643, %v755
        %v774 = vadd.f32 %v645, %v757
        %v775 = vadd.f32 %v647, %v759
        %v777 = vlaneseq
        %v778 = vshrl.u32 %v777, 7
        %v779 = vsub.s32 0, %v778
        %v780 = vrot.slane %v342, %v779
        %798 = vrot.lane.b32.xlu0 %v578, 112
        %v799 = vpop.permute.xlu0 %798
        %800 = vrot.lane.b32.xlu0 %v579, 112
        %v801 = vpop.permute.xlu0 %800
        %802 = vrot.lane.b32.xlu0 %v580, 112
        %v803 = vpop.permute.xlu0 %802
        %804 = vrot.lane.b32.xlu0 %v581, 112
        %v805 = vpop.permute.xlu0 %804
        %806 = vrot.lane.b32.xlu0 %v582, 112
        %v807 = vpop.permute.xlu0 %806
        %808 = vrot.lane.b32.xlu0 %v583, 112
        %v809 = vpop.permute.xlu0 %808
        %810 = vrot.lane.b32.xlu0 %v584, 112
        %v811 = vpop.permute.xlu0 %810
        %812 = vrot.lane.b32.xlu0 %v585, 112
        %v813 = vpop.permute.xlu0 %812
        %814 = vrot.lane.b32.xlu0 %v586, 112
        %v815 = vpop.permute.xlu0 %814
        %816 = vrot.lane.b32.xlu0 %v587, 112
        %v817 = vpop.permute.xlu0 %816
        %818 = vrot.lane.b32.xlu0 %v588, 112
        %v819 = vpop.permute.xlu0 %818
        %820 = vrot.lane.b32.xlu0 %v589, 112
        %v821 = vpop.permute.xlu0 %820
        %822 = vrot.lane.b32.xlu0 %v590, 112
        %v823 = vpop.permute.xlu0 %822
        %824 = vrot.lane.b32.xlu0 %v591, 112
        %v825 = vpop.permute.xlu0 %824
        %826 = vrot.lane.b32.xlu0 %v592, 112
        %v827 = vpop.permute.xlu0 %826
        %828 = vrot.lane.b32.xlu0 %v593, 112
        %v829 = vpop.permute.xlu0 %828
        %v846 = vsub.f32 %v780, %v799
        %v847 = vsub.f32 %v780, %v801
        %v848 = vsub.f32 %v780, %v803
        %v849 = vsub.f32 %v780, %v805
        %v850 = vsub.f32 %v780, %v807
        %v851 = vsub.f32 %v780, %v809
        %v852 = vsub.f32 %v780, %v811
        %v853 = vsub.f32 %v780, %v813
        %v854 = vsub.f32 %v780, %v815
        %v855 = vsub.f32 %v780, %v817
        %v856 = vsub.f32 %v780, %v819
        %v857 = vsub.f32 %v780, %v821
        %v858 = vsub.f32 %v780, %v823
        %v859 = vsub.f32 %v780, %v825
        %v860 = vsub.f32 %v780, %v827
        %v861 = vsub.f32 %v780, %v829
        %v862 = vadd.f32 %v846, %v760
        %v863 = vadd.f32 %v847, %v761
        %v864 = vadd.f32 %v848, %v762
        %v865 = vadd.f32 %v849, %v763
        %v866 = vadd.f32 %v850, %v764
        %v867 = vadd.f32 %v851, %v765
        %v868 = vadd.f32 %v852, %v766
        %v869 = vadd.f32 %v853, %v767
        %v870 = vadd.f32 %v854, %v768
        %v871 = vadd.f32 %v855, %v769
        %v872 = vadd.f32 %v856, %v770
        %v873 = vadd.f32 %v857, %v771
        %v874 = vadd.f32 %v858, %v772
        %v875 = vadd.f32 %v859, %v773
        %v876 = vadd.f32 %v860, %v774
        %v877 = vadd.f32 %v861, %v775
        %s878 = sadd.s32 %s343, 0
        %v879 = vlaneseq
        %v880 = vshrl.u32 %v879, 7
        %v881 = vadd.s32 %v880, 8
        %v882 = vadd.s32 %v880, 16
        %v883 = vadd.s32 %v880, 24
        %v884 = vadd.s32 %v880, 32
        %v885 = vadd.s32 %v880, 40
        %v886 = vadd.s32 %v880, 48
        %v887 = vadd.s32 %v880, 56
        %v888 = vadd.s32 %v880, 64
        %v889 = vadd.s32 %v880, 72
        %v890 = vadd.s32 %v880, 80
        %v891 = vadd.s32 %v880, 88
        %v892 = vadd.s32 %v880, 96
        %v893 = vadd.s32 %v880, 104
        %v894 = vadd.s32 %v880, 112
        %v895 = vadd.s32 %v880, 120
        %v896 = vstv %s878
        %v897 = vadd.s32 %v896, %v880
        %v898 = vadd.s32 %v896, %v881
        %v899 = vadd.s32 %v896, %v882
        %v900 = vadd.s32 %v896, %v883
        %v901 = vadd.s32 %v896, %v884
        %v902 = vadd.s32 %v896, %v885
        %v903 = vadd.s32 %v896, %v886
        %v904 = vadd.s32 %v896, %v887
        %v905 = vadd.s32 %v896, %v888
        %v906 = vadd.s32 %v896, %v889
        %v907 = vadd.s32 %v896, %v890
        %v908 = vadd.s32 %v896, %v891
        %v909 = vadd.s32 %v896, %v892
        %v910 = vadd.s32 %v896, %v893
        %v911 = vadd.s32 %v896, %v894
        %v912 = vadd.s32 %v896, %v895
        %vm913 = vcmp.lt.s32.totalorder %v897, 1000
        %vm914 = vcmp.lt.s32.totalorder %v898, 1000
        %vm915 = vcmp.lt.s32.totalorder %v899, 1000
        %vm916 = vcmp.lt.s32.totalorder %v900, 1000
        %vm917 = vcmp.lt.s32.totalorder %v901, 1000
        %vm918 = vcmp.lt.s32.totalorder %v902, 1000
        %vm919 = vcmp.lt.s32.totalorder %v903, 1000
        %vm920 = vcmp.lt.s32.totalorder %v904, 1000
        %vm921 = vcmp.lt.s32.totalorder %v905, 1000
        %vm922 = vcmp.lt.s32.totalorder %v906, 1000
        %vm923 = vcmp.lt.s32.totalorder %v907, 1000
        %vm924 = vcmp.lt.s32.totalorder %v908, 1000
        %vm925 = vcmp.lt.s32.totalorder %v909, 1000
        %vm926 = vcmp.lt.s32.totalorder %v910, 1000
        %vm927 = vcmp.lt.s32.totalorder %v911, 1000
        %vm928 = vcmp.lt.s32.totalorder %v912, 1000
        %v929 = vsel %vm913, %v862, 0.0
        %v930 = vsel %vm914, %v863, 0.0
        %v931 = vsel %vm915, %v864, 0.0
        %v932 = vsel %vm916, %v865, 0.0
        %v933 = vsel %vm917, %v866, 0.0
        %v934 = vsel %vm918, %v867, 0.0
        %v935 = vsel %vm919, %v868, 0.0
        %v936 = vsel %vm920, %v869, 0.0
        %v937 = vsel %vm921, %v870, 0.0
        %v938 = vsel %vm922, %v871, 0.0
        %v939 = vsel %vm923, %v872, 0.0
        %v940 = vsel %vm924, %v873, 0.0
        %v941 = vsel %vm925, %v874, 0.0
        %v942 = vsel %vm926, %v875, 0.0
        %v943 = vsel %vm927, %v876, 0.0
        %v944 = vsel %vm928, %v877, 0.0
        %vm945 = vcmask 7168
        %v946 = vsel %vm945, %v929, 0.0
        %v947 = vsel %vm945, %v930, 0.0
        %v948 = vadd.f32 %v946, %v947
        %v949 = vsel %vm945, %v931, 0.0
        %v950 = vadd.f32 %v948, %v949
        %v951 = vsel %vm945, %v932, 0.0
        %v952 = vadd.f32 %v950, %v951
        %v953 = vsel %vm945, %v933, 0.0
        %v954 = vadd.f32 %v952, %v953
        %v955 = vsel %vm945, %v934, 0.0
        %v956 = vadd.f32 %v954, %v955
        %v957 = vsel %vm945, %v935, 0.0
        %v958 = vadd.f32 %v956, %v957
        %v959 = vsel %vm945, %v936, 0.0
        %v960 = vadd.f32 %v958, %v959
        %v961 = vsel %vm945, %v937, 0.0
        %v962 = vadd.f32 %v960, %v961
        %v963 = vsel %vm945, %v938, 0.0
        %v964 = vadd.f32 %v962, %v963
        %v965 = vsel %vm945, %v939, 0.0
        %v966 = vadd.f32 %v964, %v965
        %v967 = vsel %vm945, %v940, 0.0
        %v968 = vadd.f32 %v966, %v967
        %v969 = vsel %vm945, %v941, 0.0
        %v970 = vadd.f32 %v968, %v969
        %v971 = vsel %vm945, %v942, 0.0
        %v972 = vadd.f32 %v970, %v971
        %v973 = vsel %vm945, %v943, 0.0
        %v974 = vadd.f32 %v972, %v973
        %v975 = vsel %vm945, %v944, 0.0
        %v976 = vadd.f32 %v974, %v975
        %977 = vadd.xlane.f32.xlu0 %v976
        %v978 = vpop.xlane.xlu0 %977
        %v979 = vrot.slane %v978, 4
        %v980 = vadd.f32 %v978, %v979
        %v981 = vrot.slane %v980, 2
        %v982 = vadd.f32 %v980, %v981
        %v983 = vrot.slane %v982, 1
        %v984 = vadd.f32 %v982, %v983
        %s985 = vtos %v984
        %s986 = sadd.f32 %s985, 0.0
        %s987 = scalar_lea.vmem %s286, 8 [#allocation3]
        %v988 = vld [vmem:[%s987] sm:$0xff]
        %v989 = vld [vmem:[%s987 + $0x20] sm:$0xff]
        %v990 = vld [vmem:[%s987 + $0x40] sm:$0xff]
        %v991 = vld [vmem:[%s987 + $0x60] sm:$0xff]
        %v992 = vld [vmem:[%s987 + $0x80] sm:$0xff]
        %v993 = vld [vmem:[%s987 + $0xa0] sm:$0xff]
        %v994 = vld [vmem:[%s987 + $0xc0] sm:$0xff]
        %v995 = vld [vmem:[%s987 + $0xe0] sm:$0xff]
        %996 = vxpose.xlu0.b32.start [1/16] %v988, 128
        %997 = vxpose.xlu0.b32.cont [2/16] %v989, 128
        %998 = vxpose.xlu0.b32.cont [3/16] %v990, 128
        %999 = vxpose.xlu0.b32.cont [4/16] %v991, 128
        %1000 = vxpose.xlu0.b32.cont [5/16] %v992, 128
        %1001 = vxpose.xlu0.b32.cont [6/16] %v993, 128
        %1002 = vxpose.xlu0.b32.cont [7/16] %v994, 128
        %1003 = vxpose.xlu0.b32.cont [8/16] %v995, 128
        %1004 = vxpose.xlu0.b32.cont [9/16] 0.0, 128
        %1005 = vxpose.xlu0.b32.cont [10/16] 0.0, 128
        %1006 = vxpose.xlu0.b32.cont [11/16] 0.0, 128
        %1007 = vxpose.xlu0.b32.cont [12/16] 0.0, 128
        %1008 = vxpose.xlu0.b32.cont [13/16] 0.0, 128
        %1009 = vxpose.xlu0.b32.cont [14/16] 0.0, 128
        %1010 = vxpose.xlu0.b32.cont [15/16] 0.0, 128
        %1011 = vxpose.xlu0.b32.end [16/16] 0.0, 128
        %v1012 = vpop.trf.xlu0
        %v1013 = vpop.trf.xlu0
        %v1014 = vpop.trf.xlu0
        %v1015 = vpop.trf.xlu0
        %v1016 = vpop.trf.xlu0
        %v1017 = vpop.trf.xlu0
        %v1018 = vpop.trf.xlu0
        %v1019 = vpop.trf.xlu0
        %v1020 = vpop.trf.xlu0
        %v1021 = vpop.trf.xlu0
        %v1022 = vpop.trf.xlu0
        %v1023 = vpop.trf.xlu0
        %v1024 = vpop.trf.xlu0
        %v1025 = vpop.trf.xlu0
        %v1026 = vpop.trf.xlu0
        %v1027 = vpop.trf.xlu0
        %v1029 = vsel %vm384, %v1012, 0
        %v1032 = vsel %vm384, %v1013, 0
        %v1035 = vsel %vm384, %v1014, 0
        %v1038 = vsel %vm384, %v1015, 0
        %v1041 = vsel %vm384, %v1016, 0
        %v1044 = vsel %vm384, %v1017, 0
        %v1047 = vsel %vm384, %v1018, 0
        %v1050 = vsel %vm384, %v1019, 0
        %v1053 = vsel %vm384, %v1020, 0
        %v1056 = vsel %vm384, %v1021, 0
        %v1059 = vsel %vm384, %v1022, 0
        %v1062 = vsel %vm384, %v1023, 0
        %v1065 = vsel %vm384, %v1024, 0
        %v1068 = vsel %vm384, %v1025, 0
        %v1071 = vsel %vm384, %v1026, 0
        %v1074 = vsel %vm384, %v1027, 0
        %1076 = vmatprep.subr.mxu0 0.0
        %1077 = vmatpush1.msra.mxu0 0.0
        %1078 = vmatprep.subr.mxu0 0.0
        %1079 = vmatpush1.msra.mxu0 0.0
        %1080 = vmatprep.subr.mxu0 0.0
        %1081 = vmatpush1.msra.mxu0 0.0
        %1082 = vmatprep.subr.mxu0 0.0
        %1083 = vmatpush1.msra.mxu0 0.0
        %1084 = vmatprep.subr.mxu0 0.0
        %1085 = vmatpush1.msra.mxu0 0.0
        %1086 = vmatprep.subr.mxu0 0.0
        %1087 = vmatpush1.msra.mxu0 0.0
        %1088 = vmatprep.subr.mxu0 0.0
        %1089 = vmatpush1.msra.mxu0 0.0
        %1090 = vmatprep.subr.mxu0 0.0
        %1091 = vmatpush1.msra.mxu0 0.0
        %1092 = vmatprep.subr.mxu0 0.0
        %1093 = vmatpush1.msra.mxu0 %v340
        %1094 = vmatprep.subr.mxu0 0.0
        %1095 = vmatpush1.msra.mxu0 %v339
        %1096 = vmatprep.subr.mxu0 0.0
        %1097 = vmatpush1.msra.mxu0 %v338
        %1098 = vmatprep.subr.mxu0 0.0
        %1099 = vmatpush1.msra.mxu0 %v337
        %1100 = vmatprep.subr.mxu0 0.0
        %1101 = vmatpush1.msra.mxu0 %v336
        %1102 = vmatprep.subr.mxu0 0.0
        %1103 = vmatpush1.msra.mxu0 %v335
        %1104 = vmatprep.subr.mxu0 0.0
        %1105 = vmatpush1.msra.mxu0 %v334
        %1106 = vmatprep.subr.mxu0 0.0
        %1107 = vmatpush1.msra.mxu0 %v333
        %1108 = vmatprep.subr.mxu0 0.0
        %1109 = vmatpush2.msra.mxu0 0.0
        %1110 = vmatprep.subr.mxu0 0.0
        %1111 = vmatpush2.msra.mxu0 0.0
        %1112 = vmatprep.subr.mxu0 0.0
        %1113 = vmatpush2.msra.mxu0 0.0
        %1114 = vmatprep.subr.mxu0 0.0
        %1115 = vmatpush2.msra.mxu0 0.0
        %1116 = vmatprep.subr.mxu0 0.0
        %1117 = vmatpush2.msra.mxu0 0.0
        %1118 = vmatprep.subr.mxu0 0.0
        %1119 = vmatpush2.msra.mxu0 0.0
        %1120 = vmatprep.subr.mxu0 0.0
        %1121 = vmatpush2.msra.mxu0 0.0
        %1122 = vmatprep.subr.mxu0 0.0
        %1123 = vmatpush2.msra.mxu0 0.0
        %1124 = vmatprep.subr.mxu0 0.0
        %1125 = vmatpush2.msra.mxu0 0.0
        %1126 = vmatprep.subr.mxu0 0.0
        %1127 = vmatpush2.msra.mxu0 0.0
        %1128 = vmatprep.subr.mxu0 0.0
        %1129 = vmatpush2.msra.mxu0 0.0
        %1130 = vmatprep.subr.mxu0 0.0
        %1131 = vmatpush2.msra.mxu0 0.0
        %1132 = vmatprep.subr.mxu0 0.0
        %1133 = vmatpush2.msra.mxu0 0.0
        %1134 = vmatprep.subr.mxu0 0.0
        %1135 = vmatpush2.msra.mxu0 0.0
        %1136 = vmatprep.subr.mxu0 0.0
        %1137 = vmatpush2.msra.mxu0 0.0
        %1138 = vmatprep.subr.mxu0 0.0
        %1139 = vmatpush2.msra.mxu0 0.0
        %1140 = vmatprep.mubr.f32.mxu0 0.0
        %1141 = vmatmul.mubr.f32.gmra.mxu0 %v1029
        %v1142 = vpop.f32.mrf.mxu0
        %v1143 = vadd.f32 0.0, %v1142
        %v1144 = vpop.f32.mrf.mxu0
        %1145 = vmatprep.mubr.f32.mxu0 0.0
        %1146 = vmatmul.mubr.f32.gmra.mxu0 %v1032
        %v1147 = vpop.f32.mrf.mxu0
        %v1148 = vadd.f32 0.0, %v1147
        %v1149 = vpop.f32.mrf.mxu0
        %1150 = vmatprep.mubr.f32.mxu0 0.0
        %1151 = vmatmul.mubr.f32.gmra.mxu0 %v1035
        %v1152 = vpop.f32.mrf.mxu0
        %v1153 = vadd.f32 0.0, %v1152
        %v1154 = vpop.f32.mrf.mxu0
        %1155 = vmatprep.mubr.f32.mxu0 0.0
        %1156 = vmatmul.mubr.f32.gmra.mxu0 %v1038
        %v1157 = vpop.f32.mrf.mxu0
        %v1158 = vadd.f32 0.0, %v1157
        %v1159 = vpop.f32.mrf.mxu0
        %1160 = vmatprep.mubr.f32.mxu0 0.0
        %1161 = vmatmul.mubr.f32.gmra.mxu0 %v1041
        %v1162 = vpop.f32.mrf.mxu0
        %v1163 = vadd.f32 0.0, %v1162
        %v1164 = vpop.f32.mrf.mxu0
        %1165 = vmatprep.mubr.f32.mxu0 0.0
        %1166 = vmatmul.mubr.f32.gmra.mxu0 %v1044
        %v1167 = vpop.f32.mrf.mxu0
        %v1168 = vadd.f32 0.0, %v1167
        %v1169 = vpop.f32.mrf.mxu0
        %1170 = vmatprep.mubr.f32.mxu0 0.0
        %1171 = vmatmul.mubr.f32.gmra.mxu0 %v1047
        %v1172 = vpop.f32.mrf.mxu0
        %v1173 = vadd.f32 0.0, %v1172
        %v1174 = vpop.f32.mrf.mxu0
        %1175 = vmatprep.mubr.f32.mxu0 0.0
        %1176 = vmatmul.mubr.f32.gmra.mxu0 %v1050
        %v1177 = vpop.f32.mrf.mxu0
        %v1178 = vadd.f32 0.0, %v1177
        %v1179 = vpop.f32.mrf.mxu0
        %1180 = vmatprep.mubr.f32.mxu0 0.0
        %1181 = vmatmul.mubr.f32.gmra.mxu0 %v1053
        %v1182 = vpop.f32.mrf.mxu0
        %v1183 = vadd.f32 0.0, %v1182
        %v1184 = vpop.f32.mrf.mxu0
        %1185 = vmatprep.mubr.f32.mxu0 0.0
        %1186 = vmatmul.mubr.f32.gmra.mxu0 %v1056
        %v1187 = vpop.f32.mrf.mxu0
        %v1188 = vadd.f32 0.0, %v1187
        %v1189 = vpop.f32.mrf.mxu0
        %1190 = vmatprep.mubr.f32.mxu0 0.0
        %1191 = vmatmul.mubr.f32.gmra.mxu0 %v1059
        %v1192 = vpop.f32.mrf.mxu0
        %v1193 = vadd.f32 0.0, %v1192
        %v1194 = vpop.f32.mrf.mxu0
        %1195 = vmatprep.mubr.f32.mxu0 0.0
        %1196 = vmatmul.mubr.f32.gmra.mxu0 %v1062
        %v1197 = vpop.f32.mrf.mxu0
        %v1198 = vadd.f32 0.0, %v1197
        %v1199 = vpop.f32.mrf.mxu0
        %1200 = vmatprep.mubr.f32.mxu0 0.0
        %1201 = vmatmul.mubr.f32.gmra.mxu0 %v1065
        %v1202 = vpop.f32.mrf.mxu0
        %v1203 = vadd.f32 0.0, %v1202
        %v1204 = vpop.f32.mrf.mxu0
        %1205 = vmatprep.mubr.f32.mxu0 0.0
        %1206 = vmatmul.mubr.f32.gmra.mxu0 %v1068
        %v1207 = vpop.f32.mrf.mxu0
        %v1208 = vadd.f32 0.0, %v1207
        %v1209 = vpop.f32.mrf.mxu0
        %1210 = vmatprep.mubr.f32.mxu0 0.0
        %1211 = vmatmul.mubr.f32.gmra.mxu0 %v1071
        %v1212 = vpop.f32.mrf.mxu0
        %v1213 = vadd.f32 0.0, %v1212
        %v1214 = vpop.f32.mrf.mxu0
        %1215 = vmatprep.mubr.f32.mxu0 0.0
        %1216 = vmatmul.mubr.f32.gmra.mxu0 %v1074
        %v1217 = vpop.f32.mrf.mxu0
        %v1218 = vadd.f32 0.0, %v1217
        %v1219 = vpop.f32.mrf.mxu0
        %1220 = vdwg.mxu0
        %v1221 = vmul.f32 %v1143, 2.0
        %v1222 = vmul.f32 %v1148, 2.0
        %v1223 = vmul.f32 %v1153, 2.0
        %v1224 = vmul.f32 %v1158, 2.0
        %v1225 = vmul.f32 %v1163, 2.0
        %v1226 = vmul.f32 %v1168, 2.0
        %v1227 = vmul.f32 %v1173, 2.0
        %v1228 = vmul.f32 %v1178, 2.0
        %v1229 = vmul.f32 %v1183, 2.0
        %v1230 = vmul.f32 %v1188, 2.0
        %v1231 = vmul.f32 %v1193, 2.0
        %v1232 = vmul.f32 %v1198, 2.0
        %v1233 = vmul.f32 %v1203, 2.0
        %v1234 = vmul.f32 %v1208, 2.0
        %v1235 = vmul.f32 %v1213, 2.0
        %v1236 = vmul.f32 %v1218, 2.0
        %v1237 = vsub.f32 %v1221, %v598
        %v1238 = vsub.f32 %v1222, %v598
        %v1239 = vsub.f32 %v1223, %v598
        %v1240 = vsub.f32 %v1224, %v598
        %v1241 = vsub.f32 %v1225, %v598
        %v1242 = vsub.f32 %v1226, %v598
        %v1243 = vsub.f32 %v1227, %v598
        %v1244 = vsub.f32 %v1228, %v598
        %v1245 = vsub.f32 %v1229, %v598
        %v1246 = vsub.f32 %v1230, %v598
        %v1247 = vsub.f32 %v1231, %v598
        %v1248 = vsub.f32 %v1232, %v598
        %v1249 = vsub.f32 %v1233, %v598
        %v1250 = vsub.f32 %v1234, %v598
        %v1251 = vsub.f32 %v1235, %v598
        %v1252 = vsub.f32 %v1236, %v598
        %1253 = vmax.xlane.f32.xlu0 %v1237
        %v1254 = vpop.xlane.xlu0 %1253
        %1255 = vmax.xlane.f32.xlu0 %v1238
        %v1256 = vpop.xlane.xlu0 %1255
        %1257 = vmax.xlane.f32.xlu0 %v1239
        %v1258 = vpop.xlane.xlu0 %1257
        %1259 = vmax.xlane.f32.xlu0 %v1240
        %v1260 = vpop.xlane.xlu0 %1259
        %1261 = vmax.xlane.f32.xlu0 %v1241
        %v1262 = vpop.xlane.xlu0 %1261
        %1263 = vmax.xlane.f32.xlu0 %v1242
        %v1264 = vpop.xlane.xlu0 %1263
        %1265 = vmax.xlane.f32.xlu0 %v1243
        %v1266 = vpop.xlane.xlu0 %1265
        %1267 = vmax.xlane.f32.xlu0 %v1244
        %v1268 = vpop.xlane.xlu0 %1267
        %1269 = vmax.xlane.f32.xlu0 %v1245
        %v1270 = vpop.xlane.xlu0 %1269
        %1271 = vmax.xlane.f32.xlu0 %v1246
        %v1272 = vpop.xlane.xlu0 %1271
        %1273 = vmax.xlane.f32.xlu0 %v1247
        %v1274 = vpop.xlane.xlu0 %1273
        %1275 = vmax.xlane.f32.xlu0 %v1248
        %v1276 = vpop.xlane.xlu0 %1275
        %1277 = vmax.xlane.f32.xlu0 %v1249
        %v1278 = vpop.xlane.xlu0 %1277
        %1279 = vmax.xlane.f32.xlu0 %v1250
        %v1280 = vpop.xlane.xlu0 %1279
        %1281 = vmax.xlane.f32.xlu0 %v1251
        %v1282 = vpop.xlane.xlu0 %1281
        %1283 = vmax.xlane.f32.xlu0 %v1252
        %v1284 = vpop.xlane.xlu0 %1283
        %v1285 = vsub.f32 %v1237, %v1254
        %v1286 = vsub.f32 %v1238, %v1256
        %v1287 = vsub.f32 %v1239, %v1258
        %v1288 = vsub.f32 %v1240, %v1260
        %v1289 = vsub.f32 %v1241, %v1262
        %v1290 = vsub.f32 %v1242, %v1264
        %v1291 = vsub.f32 %v1243, %v1266
        %v1292 = vsub.f32 %v1244, %v1268
        %v1293 = vsub.f32 %v1245, %v1270
        %v1294 = vsub.f32 %v1246, %v1272
        %v1295 = vsub.f32 %v1247, %v1274
        %v1296 = vsub.f32 %v1248, %v1276
        %v1297 = vsub.f32 %v1249, %v1278
        %v1298 = vsub.f32 %v1250, %v1280
        %v1299 = vsub.f32 %v1251, %v1282
        %v1300 = vsub.f32 %v1252, %v1284
        %v1301 = vmul.f32 %v1285, 1.442695
        %v1302 = vpow.pop %v1301
        %v1303 = vmul.f32 %v1286, 1.442695
        %v1304 = vpow.pop %v1303
        %v1305 = vmul.f32 %v1287, 1.442695
        %v1306 = vpow.pop %v1305
        %v1307 = vmul.f32 %v1288, 1.442695
        %v1308 = vpow.pop %v1307
        %v1309 = vmul.f32 %v1289, 1.442695
        %v1310 = vpow.pop %v1309
        %v1311 = vmul.f32 %v1290, 1.442695
        %v1312 = vpow.pop %v1311
        %v1313 = vmul.f32 %v1291, 1.442695
        %v1314 = vpow.pop %v1313
        %v1315 = vmul.f32 %v1292, 1.442695
        %v1316 = vpow.pop %v1315
        %v1317 = vmul.f32 %v1293, 1.442695
        %v1318 = vpow.pop %v1317
        %v1319 = vmul.f32 %v1294, 1.442695
        %v1320 = vpow.pop %v1319
        %v1321 = vmul.f32 %v1295, 1.442695
        %v1322 = vpow.pop %v1321
        %v1323 = vmul.f32 %v1296, 1.442695
        %v1324 = vpow.pop %v1323
        %v1325 = vmul.f32 %v1297, 1.442695
        %v1326 = vpow.pop %v1325
        %v1327 = vmul.f32 %v1298, 1.442695
        %v1328 = vpow.pop %v1327
        %v1329 = vmul.f32 %v1299, 1.442695
        %v1330 = vpow.pop %v1329
        %v1331 = vmul.f32 %v1300, 1.442695
        %v1332 = vpow.pop %v1331
        %1333 = vadd.xlane.f32.xlu0 %v1302
        %v1334 = vpop.xlane.xlu0 %1333
        %1335 = vadd.xlane.f32.xlu0 %v1304
        %v1336 = vpop.xlane.xlu0 %1335
        %1337 = vadd.xlane.f32.xlu0 %v1306
        %v1338 = vpop.xlane.xlu0 %1337
        %1339 = vadd.xlane.f32.xlu0 %v1308
        %v1340 = vpop.xlane.xlu0 %1339
        %1341 = vadd.xlane.f32.xlu0 %v1310
        %v1342 = vpop.xlane.xlu0 %1341
        %1343 = vadd.xlane.f32.xlu0 %v1312
        %v1344 = vpop.xlane.xlu0 %1343
        %1345 = vadd.xlane.f32.xlu0 %v1314
        %v1346 = vpop.xlane.xlu0 %1345
        %1347 = vadd.xlane.f32.xlu0 %v1316
        %v1348 = vpop.xlane.xlu0 %1347
        %1349 = vadd.xlane.f32.xlu0 %v1318
        %v1350 = vpop.xlane.xlu0 %1349
        %1351 = vadd.xlane.f32.xlu0 %v1320
        %v1352 = vpop.xlane.xlu0 %1351
        %1353 = vadd.xlane.f32.xlu0 %v1322
        %v1354 = vpop.xlane.xlu0 %1353
        %1355 = vadd.xlane.f32.xlu0 %v1324
        %v1356 = vpop.xlane.xlu0 %1355
        %1357 = vadd.xlane.f32.xlu0 %v1326
        %v1358 = vpop.xlane.xlu0 %1357
        %1359 = vadd.xlane.f32.xlu0 %v1328
        %v1360 = vpop.xlane.xlu0 %1359
        %1361 = vadd.xlane.f32.xlu0 %v1330
        %v1362 = vpop.xlane.xlu0 %1361
        %1363 = vadd.xlane.f32.xlu0 %v1332
        %v1364 = vpop.xlane.xlu0 %1363
        %v1365 = vlog2.pop %v1334
        %v1366 = vmul.f32 %v1365, 0.6931472
        %v1367 = vlog2.pop %v1336
        %v1368 = vmul.f32 %v1367, 0.6931472
        %v1369 = vlog2.pop %v1338
        %v1370 = vmul.f32 %v1369, 0.6931472
        %v1371 = vlog2.pop %v1340
        %v1372 = vmul.f32 %v1371, 0.6931472
        %v1373 = vlog2.pop %v1342
        %v1374 = vmul.f32 %v1373, 0.6931472
        %v1375 = vlog2.pop %v1344
        %v1376 = vmul.f32 %v1375, 0.6931472
        %v1377 = vlog2.pop %v1346
        %v1378 = vmul.f32 %v1377, 0.6931472
        %v1379 = vlog2.pop %v1348
        %v1380 = vmul.f32 %v1379, 0.6931472
        %v1381 = vlog2.pop %v1350
        %v1382 = vmul.f32 %v1381, 0.6931472
        %v1383 = vlog2.pop %v1352
        %v1384 = vmul.f32 %v1383, 0.6931472
        %v1385 = vlog2.pop %v1354
        %v1386 = vmul.f32 %v1385, 0.6931472
        %v1387 = vlog2.pop %v1356
        %v1388 = vmul.f32 %v1387, 0.6931472
        %v1389 = vlog2.pop %v1358
        %v1390 = vmul.f32 %v1389, 0.6931472
        %v1391 = vlog2.pop %v1360
        %v1392 = vmul.f32 %v1391, 0.6931472
        %v1393 = vlog2.pop %v1362
        %v1394 = vmul.f32 %v1393, 0.6931472
        %v1395 = vlog2.pop %v1364
        %v1396 = vmul.f32 %v1395, 0.6931472
        %v1397 = vadd.f32 %v1254, %v1366
        %v1398 = vadd.f32 %v1256, %v1368
        %v1399 = vadd.f32 %v1258, %v1370
        %v1400 = vadd.f32 %v1260, %v1372
        %v1401 = vadd.f32 %v1262, %v1374
        %v1402 = vadd.f32 %v1264, %v1376
        %v1403 = vadd.f32 %v1266, %v1378
        %v1404 = vadd.f32 %v1268, %v1380
        %v1405 = vadd.f32 %v1270, %v1382
        %v1406 = vadd.f32 %v1272, %v1384
        %v1407 = vadd.f32 %v1274, %v1386
        %v1408 = vadd.f32 %v1276, %v1388
        %v1409 = vadd.f32 %v1278, %v1390
        %v1410 = vadd.f32 %v1280, %v1392
        %v1411 = vadd.f32 %v1282, %v1394
        %v1412 = vadd.f32 %v1284, %v1396
        %1429 = vrot.lane.b32.xlu0 %v1221, 112
        %v1430 = vpop.permute.xlu0 %1429
        %1431 = vrot.lane.b32.xlu0 %v1222, 112
        %v1432 = vpop.permute.xlu0 %1431
        %1433 = vrot.lane.b32.xlu0 %v1223, 112
        %v1434 = vpop.permute.xlu0 %1433
        %1435 = vrot.lane.b32.xlu0 %v1224, 112
        %v1436 = vpop.permute.xlu0 %1435
        %1437 = vrot.lane.b32.xlu0 %v1225, 112
        %v1438 = vpop.permute.xlu0 %1437
        %1439 = vrot.lane.b32.xlu0 %v1226, 112
        %v1440 = vpop.permute.xlu0 %1439
        %1441 = vrot.lane.b32.xlu0 %v1227, 112
        %v1442 = vpop.permute.xlu0 %1441
        %1443 = vrot.lane.b32.xlu0 %v1228, 112
        %v1444 = vpop.permute.xlu0 %1443
        %1445 = vrot.lane.b32.xlu0 %v1229, 112
        %v1446 = vpop.permute.xlu0 %1445
        %1447 = vrot.lane.b32.xlu0 %v1230, 112
        %v1448 = vpop.permute.xlu0 %1447
        %1449 = vrot.lane.b32.xlu0 %v1231, 112
        %v1450 = vpop.permute.xlu0 %1449
        %1451 = vrot.lane.b32.xlu0 %v1232, 112
        %v1452 = vpop.permute.xlu0 %1451
        %1453 = vrot.lane.b32.xlu0 %v1233, 112
        %v1454 = vpop.permute.xlu0 %1453
        %1455 = vrot.lane.b32.xlu0 %v1234, 112
        %v1456 = vpop.permute.xlu0 %1455
        %1457 = vrot.lane.b32.xlu0 %v1235, 112
        %v1458 = vpop.permute.xlu0 %1457
        %1459 = vrot.lane.b32.xlu0 %v1236, 112
        %v1460 = vpop.permute.xlu0 %1459
        %v1477 = vsub.f32 %v780, %v1430
        %v1478 = vsub.f32 %v780, %v1432
        %v1479 = vsub.f32 %v780, %v1434
        %v1480 = vsub.f32 %v780, %v1436
        %v1481 = vsub.f32 %v780, %v1438
        %v1482 = vsub.f32 %v780, %v1440
        %v1483 = vsub.f32 %v780, %v1442
        %v1484 = vsub.f32 %v780, %v1444
        %v1485 = vsub.f32 %v780, %v1446
        %v1486 = vsub.f32 %v780, %v1448
        %v1487 = vsub.f32 %v780, %v1450
        %v1488 = vsub.f32 %v780, %v1452
        %v1489 = vsub.f32 %v780, %v1454
        %v1490 = vsub.f32 %v780, %v1456
        %v1491 = vsub.f32 %v780, %v1458
        %v1492 = vsub.f32 %v780, %v1460
        %v1493 = vadd.f32 %v1477, %v1397
        %v1494 = vadd.f32 %v1478, %v1398
        %v1495 = vadd.f32 %v1479, %v1399
        %v1496 = vadd.f32 %v1480, %v1400
        %v1497 = vadd.f32 %v1481, %v1401
        %v1498 = vadd.f32 %v1482, %v1402
        %v1499 = vadd.f32 %v1483, %v1403
        %v1500 = vadd.f32 %v1484, %v1404
        %v1501 = vadd.f32 %v1485, %v1405
        %v1502 = vadd.f32 %v1486, %v1406
        %v1503 = vadd.f32 %v1487, %v1407
        %v1504 = vadd.f32 %v1488, %v1408
        %v1505 = vadd.f32 %v1489, %v1409
        %v1506 = vadd.f32 %v1490, %v1410
        %v1507 = vadd.f32 %v1491, %v1411
        %v1508 = vadd.f32 %v1492, %v1412
        %s1509 = sadd.s32 %s343, 128
        %v1510 = vstv %s1509
        %v1511 = vadd.s32 %v1510, %v880
        %v1512 = vadd.s32 %v1510, %v881
        %v1513 = vadd.s32 %v1510, %v882
        %v1514 = vadd.s32 %v1510, %v883
        %v1515 = vadd.s32 %v1510, %v884
        %v1516 = vadd.s32 %v1510, %v885
        %v1517 = vadd.s32 %v1510, %v886
        %v1518 = vadd.s32 %v1510, %v887
        %v1519 = vadd.s32 %v1510, %v888
        %v1520 = vadd.s32 %v1510, %v889
        %v1521 = vadd.s32 %v1510, %v890
        %v1522 = vadd.s32 %v1510, %v891
        %v1523 = vadd.s32 %v1510, %v892
        %v1524 = vadd.s32 %v1510, %v893
        %v1525 = vadd.s32 %v1510, %v894
        %v1526 = vadd.s32 %v1510, %v895
        %vm1527 = vcmp.lt.s32.totalorder %v1511, 1000
        %vm1528 = vcmp.lt.s32.totalorder %v1512, 1000
        %vm1529 = vcmp.lt.s32.totalorder %v1513, 1000
        %vm1530 = vcmp.lt.s32.totalorder %v1514, 1000
        %vm1531 = vcmp.lt.s32.totalorder %v1515, 1000
        %vm1532 = vcmp.lt.s32.totalorder %v1516, 1000
        %vm1533 = vcmp.lt.s32.totalorder %v1517, 1000
        %vm1534 = vcmp.lt.s32.totalorder %v1518, 1000
        %vm1535 = vcmp.lt.s32.totalorder %v1519, 1000
        %vm1536 = vcmp.lt.s32.totalorder %v1520, 1000
        %vm1537 = vcmp.lt.s32.totalorder %v1521, 1000
        %vm1538 = vcmp.lt.s32.totalorder %v1522, 1000
        %vm1539 = vcmp.lt.s32.totalorder %v1523, 1000
        %vm1540 = vcmp.lt.s32.totalorder %v1524, 1000
        %vm1541 = vcmp.lt.s32.totalorder %v1525, 1000
        %vm1542 = vcmp.lt.s32.totalorder %v1526, 1000
        %v1543 = vsel %vm1527, %v1493, 0.0
        %v1544 = vsel %vm1528, %v1494, 0.0
        %v1545 = vsel %vm1529, %v1495, 0.0
        %v1546 = vsel %vm1530, %v1496, 0.0
        %v1547 = vsel %vm1531, %v1497, 0.0
        %v1548 = vsel %vm1532, %v1498, 0.0
        %v1549 = vsel %vm1533, %v1499, 0.0
        %v1550 = vsel %vm1534, %v1500, 0.0
        %v1551 = vsel %vm1535, %v1501, 0.0
        %v1552 = vsel %vm1536, %v1502, 0.0
        %v1553 = vsel %vm1537, %v1503, 0.0
        %v1554 = vsel %vm1538, %v1504, 0.0
        %v1555 = vsel %vm1539, %v1505, 0.0
        %v1556 = vsel %vm1540, %v1506, 0.0
        %v1557 = vsel %vm1541, %v1507, 0.0
        %v1558 = vsel %vm1542, %v1508, 0.0
        %v1559 = vsel %vm945, %v1543, 0.0
        %v1560 = vsel %vm945, %v1544, 0.0
        %v1561 = vadd.f32 %v1559, %v1560
        %v1562 = vsel %vm945, %v1545, 0.0
        %v1563 = vadd.f32 %v1561, %v1562
        %v1564 = vsel %vm945, %v1546, 0.0
        %v1565 = vadd.f32 %v1563, %v1564
        %v1566 = vsel %vm945, %v1547, 0.0
        %v1567 = vadd.f32 %v1565, %v1566
        %v1568 = vsel %vm945, %v1548, 0.0
        %v1569 = vadd.f32 %v1567, %v1568
        %v1570 = vsel %vm945, %v1549, 0.0
        %v1571 = vadd.f32 %v1569, %v1570
        %v1572 = vsel %vm945, %v1550, 0.0
        %v1573 = vadd.f32 %v1571, %v1572
        %v1574 = vsel %vm945, %v1551, 0.0
        %v1575 = vadd.f32 %v1573, %v1574
        %v1576 = vsel %vm945, %v1552, 0.0
        %v1577 = vadd.f32 %v1575, %v1576
        %v1578 = vsel %vm945, %v1553, 0.0
        %v1579 = vadd.f32 %v1577, %v1578
        %v1580 = vsel %vm945, %v1554, 0.0
        %v1581 = vadd.f32 %v1579, %v1580
        %v1582 = vsel %vm945, %v1555, 0.0
        %v1583 = vadd.f32 %v1581, %v1582
        %v1584 = vsel %vm945, %v1556, 0.0
        %v1585 = vadd.f32 %v1583, %v1584
        %v1586 = vsel %vm945, %v1557, 0.0
        %v1587 = vadd.f32 %v1585, %v1586
        %v1588 = vsel %vm945, %v1558, 0.0
        %v1589 = vadd.f32 %v1587, %v1588
        %1590 = vadd.xlane.f32.xlu0 %v1589
        %v1591 = vpop.xlane.xlu0 %1590
        %v1592 = vrot.slane %v1591, 4
        %v1593 = vadd.f32 %v1591, %v1592
        %v1594 = vrot.slane %v1593, 2
        %v1595 = vadd.f32 %v1593, %v1594
        %v1596 = vrot.slane %v1595, 1
        %v1597 = vadd.f32 %v1595, %v1596
        %s1598 = vtos %v1597
        %s1599 = sadd.f32 %s986, %s1598
        %s1600 = scalar_lea.vmem %s286, 16 [#allocation3]
        %v1601 = vld [vmem:[%s1600] sm:$0xff]
        %v1602 = vld [vmem:[%s1600 + $0x20] sm:$0xff]
        %v1603 = vld [vmem:[%s1600 + $0x40] sm:$0xff]
        %v1604 = vld [vmem:[%s1600 + $0x60] sm:$0xff]
        %v1605 = vld [vmem:[%s1600 + $0x80] sm:$0xff]
        %v1606 = vld [vmem:[%s1600 + $0xa0] sm:$0xff]
        %v1607 = vld [vmem:[%s1600 + $0xc0] sm:$0xff]
        %v1608 = vld [vmem:[%s1600 + $0xe0] sm:$0xff]
        %1609 = vxpose.xlu0.b32.start [1/16] %v1601, 128
        %1610 = vxpose.xlu0.b32.cont [2/16] %v1602, 128
        %1611 = vxpose.xlu0.b32.cont [3/16] %v1603, 128
        %1612 = vxpose.xlu0.b32.cont [4/16] %v1604, 128
        %1613 = vxpose.xlu0.b32.cont [5/16] %v1605, 128
        %1614 = vxpose.xlu0.b32.cont [6/16] %v1606, 128
        %1615 = vxpose.xlu0.b32.cont [7/16] %v1607, 128
        %1616 = vxpose.xlu0.b32.cont [8/16] %v1608, 128
        %1617 = vxpose.xlu0.b32.cont [9/16] 0.0, 128
        %1618 = vxpose.xlu0.b32.cont [10/16] 0.0, 128
        %1619 = vxpose.xlu0.b32.cont [11/16] 0.0, 128
        %1620 = vxpose.xlu0.b32.cont [12/16] 0.0, 128
        %1621 = vxpose.xlu0.b32.cont [13/16] 0.0, 128
        %1622 = vxpose.xlu0.b32.cont [14/16] 0.0, 128
        %1623 = vxpose.xlu0.b32.cont [15/16] 0.0, 128
        %1624 = vxpose.xlu0.b32.end [16/16] 0.0, 128
        %v1625 = vpop.trf.xlu0
        %v1626 = vpop.trf.xlu0
        %v1627 = vpop.trf.xlu0
        %v1628 = vpop.trf.xlu0
        %v1629 = vpop.trf.xlu0
        %v1630 = vpop.trf.xlu0
        %v1631 = vpop.trf.xlu0
        %v1632 = vpop.trf.xlu0
        %v1633 = vpop.trf.xlu0
        %v1634 = vpop.trf.xlu0
        %v1635 = vpop.trf.xlu0
        %v1636 = vpop.trf.xlu0
        %v1637 = vpop.trf.xlu0
        %v1638 = vpop.trf.xlu0
        %v1639 = vpop.trf.xlu0
        %v1640 = vpop.trf.xlu0
        %v1642 = vsel %vm384, %v1625, 0
        %v1645 = vsel %vm384, %v1626, 0
        %v1648 = vsel %vm384, %v1627, 0
        %v1651 = vsel %vm384, %v1628, 0
        %v1654 = vsel %vm384, %v1629, 0
        %v1657 = vsel %vm384, %v1630, 0
        %v1660 = vsel %vm384, %v1631, 0
        %v1663 = vsel %vm384, %v1632, 0
        %v1666 = vsel %vm384, %v1633, 0
        %v1669 = vsel %vm384, %v1634, 0
        %v1672 = vsel %vm384, %v1635, 0
        %v1675 = vsel %vm384, %v1636, 0
        %v1678 = vsel %vm384, %v1637, 0
        %v1681 = vsel %vm384, %v1638, 0
        %v1684 = vsel %vm384, %v1639, 0
        %v1687 = vsel %vm384, %v1640, 0
        %1689 = vmatprep.subr.mxu0 0.0
        %1690 = vmatpush1.msra.mxu0 0.0
        %1691 = vmatprep.subr.mxu0 0.0
        %1692 = vmatpush1.msra.mxu0 0.0
        %1693 = vmatprep.subr.mxu0 0.0
        %1694 = vmatpush1.msra.mxu0 0.0
        %1695 = vmatprep.subr.mxu0 0.0
        %1696 = vmatpush1.msra.mxu0 0.0
        %1697 = vmatprep.subr.mxu0 0.0
        %1698 = vmatpush1.msra.mxu0 0.0
        %1699 = vmatprep.subr.mxu0 0.0
        %1700 = vmatpush1.msra.mxu0 0.0
        %1701 = vmatprep.subr.mxu0 0.0
        %1702 = vmatpush1.msra.mxu0 0.0
        %1703 = vmatprep.subr.mxu0 0.0
        %1704 = vmatpush1.msra.mxu0 0.0
        %1705 = vmatprep.subr.mxu0 0.0
        %1706 = vmatpush1.msra.mxu0 %v340
        %1707 = vmatprep.subr.mxu0 0.0
        %1708 = vmatpush1.msra.mxu0 %v339
        %1709 = vmatprep.subr.mxu0 0.0
        %1710 = vmatpush1.msra.mxu0 %v338
        %1711 = vmatprep.subr.mxu0 0.0
        %1712 = vmatpush1.msra.mxu0 %v337
        %1713 = vmatprep.subr.mxu0 0.0
        %1714 = vmatpush1.msra.mxu0 %v336
        %1715 = vmatprep.subr.mxu0 0.0
        %1716 = vmatpush1.msra.mxu0 %v335
        %1717 = vmatprep.subr.mxu0 0.0
        %1718 = vmatpush1.msra.mxu0 %v334
        %1719 = vmatprep.subr.mxu0 0.0
        %1720 = vmatpush1.msra.mxu0 %v333
        %1721 = vmatprep.subr.mxu0 0.0
        %1722 = vmatpush2.msra.mxu0 0.0
        %1723 = vmatprep.subr.mxu0 0.0
        %1724 = vmatpush2.msra.mxu0 0.0
        %1725 = vmatprep.subr.mxu0 0.0
        %1726 = vmatpush2.msra.mxu0 0.0
        %1727 = vmatprep.subr.mxu0 0.0
        %1728 = vmatpush2.msra.mxu0 0.0
        %1729 = vmatprep.subr.mxu0 0.0
        %1730 = vmatpush2.msra.mxu0 0.0
        %1731 = vmatprep.subr.mxu0 0.0
        %1732 = vmatpush2.msra.mxu0 0.0
        %1733 = vmatprep.subr.mxu0 0.0
        %1734 = vmatpush2.msra.mxu0 0.0
        %1735 = vmatprep.subr.mxu0 0.0
        %1736 = vmatpush2.msra.mxu0 0.0
        %1737 = vmatprep.subr.mxu0 0.0
        %1738 = vmatpush2.msra.mxu0 0.0
        %1739 = vmatprep.subr.mxu0 0.0
        %1740 = vmatpush2.msra.mxu0 0.0
        %1741 = vmatprep.subr.mxu0 0.0
        %1742 = vmatpush2.msra.mxu0 0.0
        %1743 = vmatprep.subr.mxu0 0.0
        %1744 = vmatpush2.msra.mxu0 0.0
        %1745 = vmatprep.subr.mxu0 0.0
        %1746 = vmatpush2.msra.mxu0 0.0
        %1747 = vmatprep.subr.mxu0 0.0
        %1748 = vmatpush2.msra.mxu0 0.0
        %1749 = vmatprep.subr.mxu0 0.0
        %1750 = vmatpush2.msra.mxu0 0.0
        %1751 = vmatprep.subr.mxu0 0.0
        %1752 = vmatpush2.msra.mxu0 0.0
        %1753 = vmatprep.mubr.f32.mxu0 0.0
        %1754 = vmatmul.mubr.f32.gmra.mxu0 %v1642
        %v1755 = vpop.f32.mrf.mxu0
        %v1756 = vadd.f32 0.0, %v1755
        %v1757 = vpop.f32.mrf.mxu0
        %1758 = vmatprep.mubr.f32.mxu0 0.0
        %1759 = vmatmul.mubr.f32.gmra.mxu0 %v1645
        %v1760 = vpop.f32.mrf.mxu0
        %v1761 = vadd.f32 0.0, %v1760
        %v1762 = vpop.f32.mrf.mxu0
        %1763 = vmatprep.mubr.f32.mxu0 0.0
        %1764 = vmatmul.mubr.f32.gmra.mxu0 %v1648
        %v1765 = vpop.f32.mrf.mxu0
        %v1766 = vadd.f32 0.0, %v1765
        %v1767 = vpop.f32.mrf.mxu0
        %1768 = vmatprep.mubr.f32.mxu0 0.0
        %1769 = vmatmul.mubr.f32.gmra.mxu0 %v1651
        %v1770 = vpop.f32.mrf.mxu0
        %v1771 = vadd.f32 0.0, %v1770
        %v1772 = vpop.f32.mrf.mxu0
        %1773 = vmatprep.mubr.f32.mxu0 0.0
        %1774 = vmatmul.mubr.f32.gmra.mxu0 %v1654
        %v1775 = vpop.f32.mrf.mxu0
        %v1776 = vadd.f32 0.0, %v1775
        %v1777 = vpop.f32.mrf.mxu0
        %1778 = vmatprep.mubr.f32.mxu0 0.0
        %1779 = vmatmul.mubr.f32.gmra.mxu0 %v1657
        %v1780 = vpop.f32.mrf.mxu0
        %v1781 = vadd.f32 0.0, %v1780
        %v1782 = vpop.f32.mrf.mxu0
        %1783 = vmatprep.mubr.f32.mxu0 0.0
        %1784 = vmatmul.mubr.f32.gmra.mxu0 %v1660
        %v1785 = vpop.f32.mrf.mxu0
        %v1786 = vadd.f32 0.0, %v1785
        %v1787 = vpop.f32.mrf.mxu0
        %1788 = vmatprep.mubr.f32.mxu0 0.0
        %1789 = vmatmul.mubr.f32.gmra.mxu0 %v1663
        %v1790 = vpop.f32.mrf.mxu0
        %v1791 = vadd.f32 0.0, %v1790
        %v1792 = vpop.f32.mrf.mxu0
        %1793 = vmatprep.mubr.f32.mxu0 0.0
        %1794 = vmatmul.mubr.f32.gmra.mxu0 %v1666
        %v1795 = vpop.f32.mrf.mxu0
        %v1796 = vadd.f32 0.0, %v1795
        %v1797 = vpop.f32.mrf.mxu0
        %1798 = vmatprep.mubr.f32.mxu0 0.0
        %1799 = vmatmul.mubr.f32.gmra.mxu0 %v1669
        %v1800 = vpop.f32.mrf.mxu0
        %v1801 = vadd.f32 0.0, %v1800
        %v1802 = vpop.f32.mrf.mxu0
        %1803 = vmatprep.mubr.f32.mxu0 0.0
        %1804 = vmatmul.mubr.f32.gmra.mxu0 %v1672
        %v1805 = vpop.f32.mrf.mxu0
        %v1806 = vadd.f32 0.0, %v1805
        %v1807 = vpop.f32.mrf.mxu0
        %1808 = vmatprep.mubr.f32.mxu0 0.0
        %1809 = vmatmul.mubr.f32.gmra.mxu0 %v1675
        %v1810 = vpop.f32.mrf.mxu0
        %v1811 = vadd.f32 0.0, %v1810
        %v1812 = vpop.f32.mrf.mxu0
        %1813 = vmatprep.mubr.f32.mxu0 0.0
        %1814 = vmatmul.mubr.f32.gmra.mxu0 %v1678
        %v1815 = vpop.f32.mrf.mxu0
        %v1816 = vadd.f32 0.0, %v1815
        %v1817 = vpop.f32.mrf.mxu0
        %1818 = vmatprep.mubr.f32.mxu0 0.0
        %1819 = vmatmul.mubr.f32.gmra.mxu0 %v1681
        %v1820 = vpop.f32.mrf.mxu0
        %v1821 = vadd.f32 0.0, %v1820
        %v1822 = vpop.f32.mrf.mxu0
        %1823 = vmatprep.mubr.f32.mxu0 0.0
        %1824 = vmatmul.mubr.f32.gmra.mxu0 %v1684
        %v1825 = vpop.f32.mrf.mxu0
        %v1826 = vadd.f32 0.0, %v1825
        %v1827 = vpop.f32.mrf.mxu0
        %1828 = vmatprep.mubr.f32.mxu0 0.0
        %1829 = vmatmul.mubr.f32.gmra.mxu0 %v1687
        %v1830 = vpop.f32.mrf.mxu0
        %v1831 = vadd.f32 0.0, %v1830
        %v1832 = vpop.f32.mrf.mxu0
        %1833 = vdwg.mxu0
        %v1834 = vmul.f32 %v1756, 2.0
        %v1835 = vmul.f32 %v1761, 2.0
        %v1836 = vmul.f32 %v1766, 2.0
        %v1837 = vmul.f32 %v1771, 2.0
        %v1838 = vmul.f32 %v1776, 2.0
        %v1839 = vmul.f32 %v1781, 2.0
        %v1840 = vmul.f32 %v1786, 2.0
        %v1841 = vmul.f32 %v1791, 2.0
        %v1842 = vmul.f32 %v1796, 2.0
        %v1843 = vmul.f32 %v1801, 2.0
        %v1844 = vmul.f32 %v1806, 2.0
        %v1845 = vmul.f32 %v1811, 2.0
        %v1846 = vmul.f32 %v1816, 2.0
        %v1847 = vmul.f32 %v1821, 2.0
        %v1848 = vmul.f32 %v1826, 2.0
        %v1849 = vmul.f32 %v1831, 2.0
        %v1850 = vsub.f32 %v1834, %v598
        %v1851 = vsub.f32 %v1835, %v598
        %v1852 = vsub.f32 %v1836, %v598
        %v1853 = vsub.f32 %v1837, %v598
        %v1854 = vsub.f32 %v1838, %v598
        %v1855 = vsub.f32 %v1839, %v598
        %v1856 = vsub.f32 %v1840, %v598
        %v1857 = vsub.f32 %v1841, %v598
        %v1858 = vsub.f32 %v1842, %v598
        %v1859 = vsub.f32 %v1843, %v598
        %v1860 = vsub.f32 %v1844, %v598
        %v1861 = vsub.f32 %v1845, %v598
        %v1862 = vsub.f32 %v1846, %v598
        %v1863 = vsub.f32 %v1847, %v598
        %v1864 = vsub.f32 %v1848, %v598
        %v1865 = vsub.f32 %v1849, %v598
        %1866 = vmax.xlane.f32.xlu0 %v1850
        %v1867 = vpop.xlane.xlu0 %1866
        %1868 = vmax.xlane.f32.xlu0 %v1851
        %v1869 = vpop.xlane.xlu0 %1868
        %1870 = vmax.xlane.f32.xlu0 %v1852
        %v1871 = vpop.xlane.xlu0 %1870
        %1872 = vmax.xlane.f32.xlu0 %v1853
        %v1873 = vpop.xlane.xlu0 %1872
        %1874 = vmax.xlane.f32.xlu0 %v1854
        %v1875 = vpop.xlane.xlu0 %1874
        %1876 = vmax.xlane.f32.xlu0 %v1855
        %v1877 = vpop.xlane.xlu0 %1876
        %1878 = vmax.xlane.f32.xlu0 %v1856
        %v1879 = vpop.xlane.xlu0 %1878
        %1880 = vmax.xlane.f32.xlu0 %v1857
        %v1881 = vpop.xlane.xlu0 %1880
        %1882 = vmax.xlane.f32.xlu0 %v1858
        %v1883 = vpop.xlane.xlu0 %1882
        %1884 = vmax.xlane.f32.xlu0 %v1859
        %v1885 = vpop.xlane.xlu0 %1884
        %1886 = vmax.xlane.f32.xlu0 %v1860
        %v1887 = vpop.xlane.xlu0 %1886
        %1888 = vmax.xlane.f32.xlu0 %v1861
        %v1889 = vpop.xlane.xlu0 %1888
        %1890 = vmax.xlane.f32.xlu0 %v1862
        %v1891 = vpop.xlane.xlu0 %1890
        %1892 = vmax.xlane.f32.xlu0 %v1863
        %v1893 = vpop.xlane.xlu0 %1892
        %1894 = vmax.xlane.f32.xlu0 %v1864
        %v1895 = vpop.xlane.xlu0 %1894
        %1896 = vmax.xlane.f32.xlu0 %v1865
        %v1897 = vpop.xlane.xlu0 %1896
        %v1898 = vsub.f32 %v1850, %v1867
        %v1899 = vsub.f32 %v1851, %v1869
        %v1900 = vsub.f32 %v1852, %v1871
        %v1901 = vsub.f32 %v1853, %v1873
        %v1902 = vsub.f32 %v1854, %v1875
        %v1903 = vsub.f32 %v1855, %v1877
        %v1904 = vsub.f32 %v1856, %v1879
        %v1905 = vsub.f32 %v1857, %v1881
        %v1906 = vsub.f32 %v1858, %v1883
        %v1907 = vsub.f32 %v1859, %v1885
        %v1908 = vsub.f32 %v1860, %v1887
        %v1909 = vsub.f32 %v1861, %v1889
        %v1910 = vsub.f32 %v1862, %v1891
        %v1911 = vsub.f32 %v1863, %v1893
        %v1912 = vsub.f32 %v1864, %v1895
        %v1913 = vsub.f32 %v1865, %v1897
        %v1914 = vmul.f32 %v1898, 1.442695
        %v1915 = vpow.pop %v1914
        %v1916 = vmul.f32 %v1899, 1.442695
        %v1917 = vpow.pop %v1916
        %v1918 = vmul.f32 %v1900, 1.442695
        %v1919 = vpow.pop %v1918
        %v1920 = vmul.f32 %v1901, 1.442695
        %v1921 = vpow.pop %v1920
        %v1922 = vmul.f32 %v1902, 1.442695
        %v1923 = vpow.pop %v1922
        %v1924 = vmul.f32 %v1903, 1.442695
        %v1925 = vpow.pop %v1924
        %v1926 = vmul.f32 %v1904, 1.442695
        %v1927 = vpow.pop %v1926
        %v1928 = vmul.f32 %v1905, 1.442695
        %v1929 = vpow.pop %v1928
        %v1930 = vmul.f32 %v1906, 1.442695
        %v1931 = vpow.pop %v1930
        %v1932 = vmul.f32 %v1907, 1.442695
        %v1933 = vpow.pop %v1932
        %v1934 = vmul.f32 %v1908, 1.442695
        %v1935 = vpow.pop %v1934
        %v1936 = vmul.f32 %v1909, 1.442695
        %v1937 = vpow.pop %v1936
        %v1938 = vmul.f32 %v1910, 1.442695
        %v1939 = vpow.pop %v1938
        %v1940 = vmul.f32 %v1911, 1.442695
        %v1941 = vpow.pop %v1940
        %v1942 = vmul.f32 %v1912, 1.442695
        %v1943 = vpow.pop %v1942
        %v1944 = vmul.f32 %v1913, 1.442695
        %v1945 = vpow.pop %v1944
        %1946 = vadd.xlane.f32.xlu0 %v1915
        %v1947 = vpop.xlane.xlu0 %1946
        %1948 = vadd.xlane.f32.xlu0 %v1917
        %v1949 = vpop.xlane.xlu0 %1948
        %1950 = vadd.xlane.f32.xlu0 %v1919
        %v1951 = vpop.xlane.xlu0 %1950
        %1952 = vadd.xlane.f32.xlu0 %v1921
        %v1953 = vpop.xlane.xlu0 %1952
        %1954 = vadd.xlane.f32.xlu0 %v1923
        %v1955 = vpop.xlane.xlu0 %1954
        %1956 = vadd.xlane.f32.xlu0 %v1925
        %v1957 = vpop.xlane.xlu0 %1956
        %1958 = vadd.xlane.f32.xlu0 %v1927
        %v1959 = vpop.xlane.xlu0 %1958
        %1960 = vadd.xlane.f32.xlu0 %v1929
        %v1961 = vpop.xlane.xlu0 %1960
        %1962 = vadd.xlane.f32.xlu0 %v1931
        %v1963 = vpop.xlane.xlu0 %1962
        %1964 = vadd.xlane.f32.xlu0 %v1933
        %v1965 = vpop.xlane.xlu0 %1964
        %1966 = vadd.xlane.f32.xlu0 %v1935
        %v1967 = vpop.xlane.xlu0 %1966
        %1968 = vadd.xlane.f32.xlu0 %v1937
        %v1969 = vpop.xlane.xlu0 %1968
        %1970 = vadd.xlane.f32.xlu0 %v1939
        %v1971 = vpop.xlane.xlu0 %1970
        %1972 = vadd.xlane.f32.xlu0 %v1941
        %v1973 = vpop.xlane.xlu0 %1972
        %1974 = vadd.xlane.f32.xlu0 %v1943
        %v1975 = vpop.xlane.xlu0 %1974
        %1976 = vadd.xlane.f32.xlu0 %v1945
        %v1977 = vpop.xlane.xlu0 %1976
        %v1978 = vlog2.pop %v1947
        %v1979 = vmul.f32 %v1978, 0.6931472
        %v1980 = vlog2.pop %v1949
        %v1981 = vmul.f32 %v1980, 0.6931472
        %v1982 = vlog2.pop %v1951
        %v1983 = vmul.f32 %v1982, 0.6931472
        %v1984 = vlog2.pop %v1953
        %v1985 = vmul.f32 %v1984, 0.6931472
        %v1986 = vlog2.pop %v1955
        %v1987 = vmul.f32 %v1986, 0.6931472
        %v1988 = vlog2.pop %v1957
        %v1989 = vmul.f32 %v1988, 0.6931472
        %v1990 = vlog2.pop %v1959
        %v1991 = vmul.f32 %v1990, 0.6931472
        %v1992 = vlog2.pop %v1961
        %v1993 = vmul.f32 %v1992, 0.6931472
        %v1994 = vlog2.pop %v1963
        %v1995 = vmul.f32 %v1994, 0.6931472
        %v1996 = vlog2.pop %v1965
        %v1997 = vmul.f32 %v1996, 0.6931472
        %v1998 = vlog2.pop %v1967
        %v1999 = vmul.f32 %v1998, 0.6931472
        %v2000 = vlog2.pop %v1969
        %v2001 = vmul.f32 %v2000, 0.6931472
        %v2002 = vlog2.pop %v1971
        %v2003 = vmul.f32 %v2002, 0.6931472
        %v2004 = vlog2.pop %v1973
        %v2005 = vmul.f32 %v2004, 0.6931472
        %v2006 = vlog2.pop %v1975
        %v2007 = vmul.f32 %v2006, 0.6931472
        %v2008 = vlog2.pop %v1977
        %v2009 = vmul.f32 %v2008, 0.6931472
        %v2010 = vadd.f32 %v1867, %v1979
        %v2011 = vadd.f32 %v1869, %v1981
        %v2012 = vadd.f32 %v1871, %v1983
        %v2013 = vadd.f32 %v1873, %v1985
        %v2014 = vadd.f32 %v1875, %v1987
        %v2015 = vadd.f32 %v1877, %v1989
        %v2016 = vadd.f32 %v1879, %v1991
        %v2017 = vadd.f32 %v1881, %v1993
        %v2018 = vadd.f32 %v1883, %v1995
        %v2019 = vadd.f32 %v1885, %v1997
        %v2020 = vadd.f32 %v1887, %v1999
        %v2021 = vadd.f32 %v1889, %v2001
        %v2022 = vadd.f32 %v1891, %v2003
        %v2023 = vadd.f32 %v1893, %v2005
        %v2024 = vadd.f32 %v1895, %v2007
        %v2025 = vadd.f32 %v1897, %v2009
        %2042 = vrot.lane.b32.xlu0 %v1834, 112
        %v2043 = vpop.permute.xlu0 %2042
        %2044 = vrot.lane.b32.xlu0 %v1835, 112
        %v2045 = vpop.permute.xlu0 %2044
        %2046 = vrot.lane.b32.xlu0 %v1836, 112
        %v2047 = vpop.permute.xlu0 %2046
        %2048 = vrot.lane.b32.xlu0 %v1837, 112
        %v2049 = vpop.permute.xlu0 %2048
        %2050 = vrot.lane.b32.xlu0 %v1838, 112
        %v2051 = vpop.permute.xlu0 %2050
        %2052 = vrot.lane.b32.xlu0 %v1839, 112
        %v2053 = vpop.permute.xlu0 %2052
        %2054 = vrot.lane.b32.xlu0 %v1840, 112
        %v2055 = vpop.permute.xlu0 %2054
        %2056 = vrot.lane.b32.xlu0 %v1841, 112
        %v2057 = vpop.permute.xlu0 %2056
        %2058 = vrot.lane.b32.xlu0 %v1842, 112
        %v2059 = vpop.permute.xlu0 %2058
        %2060 = vrot.lane.b32.xlu0 %v1843, 112
        %v2061 = vpop.permute.xlu0 %2060
        %2062 = vrot.lane.b32.xlu0 %v1844, 112
        %v2063 = vpop.permute.xlu0 %2062
        %2064 = vrot.lane.b32.xlu0 %v1845, 112
        %v2065 = vpop.permute.xlu0 %2064
        %2066 = vrot.lane.b32.xlu0 %v1846, 112
        %v2067 = vpop.permute.xlu0 %2066
        %2068 = vrot.lane.b32.xlu0 %v1847, 112
        %v2069 = vpop.permute.xlu0 %2068
        %2070 = vrot.lane.b32.xlu0 %v1848, 112
        %v2071 = vpop.permute.xlu0 %2070
        %2072 = vrot.lane.b32.xlu0 %v1849, 112
        %v2073 = vpop.permute.xlu0 %2072
        %v2090 = vsub.f32 %v780, %v2043
        %v2091 = vsub.f32 %v780, %v2045
        %v2092 = vsub.f32 %v780, %v2047
        %v2093 = vsub.f32 %v780, %v2049
        %v2094 = vsub.f32 %v780, %v2051
        %v2095 = vsub.f32 %v780, %v2053
        %v2096 = vsub.f32 %v780, %v2055
        %v2097 = vsub.f32 %v780, %v2057
        %v2098 = vsub.f32 %v780, %v2059
        %v2099 = vsub.f32 %v780, %v2061
        %v2100 = vsub.f32 %v780, %v2063
        %v2101 = vsub.f32 %v780, %v2065
        %v2102 = vsub.f32 %v780, %v2067
        %v2103 = vsub.f32 %v780, %v2069
        %v2104 = vsub.f32 %v780, %v2071
        %v2105 = vsub.f32 %v780, %v2073
        %v2106 = vadd.f32 %v2090, %v2010
        %v2107 = vadd.f32 %v2091, %v2011
        %v2108 = vadd.f32 %v2092, %v2012
        %v2109 = vadd.f32 %v2093, %v2013
        %v2110 = vadd.f32 %v2094, %v2014
        %v2111 = vadd.f32 %v2095, %v2015
        %v2112 = vadd.f32 %v2096, %v2016
        %v2113 = vadd.f32 %v2097, %v2017
        %v2114 = vadd.f32 %v2098, %v2018
        %v2115 = vadd.f32 %v2099, %v2019
        %v2116 = vadd.f32 %v2100, %v2020
        %v2117 = vadd.f32 %v2101, %v2021
        %v2118 = vadd.f32 %v2102, %v2022
        %v2119 = vadd.f32 %v2103, %v2023
        %v2120 = vadd.f32 %v2104, %v2024
        %v2121 = vadd.f32 %v2105, %v2025
        %s2122 = sadd.s32 %s343, 256
        %v2123 = vstv %s2122
        %v2124 = vadd.s32 %v2123, %v880
        %v2125 = vadd.s32 %v2123, %v881
        %v2126 = vadd.s32 %v2123, %v882
        %v2127 = vadd.s32 %v2123, %v883
        %v2128 = vadd.s32 %v2123, %v884
        %v2129 = vadd.s32 %v2123, %v885
        %v2130 = vadd.s32 %v2123, %v886
        %v2131 = vadd.s32 %v2123, %v887
        %v2132 = vadd.s32 %v2123, %v888
        %v2133 = vadd.s32 %v2123, %v889
        %v2134 = vadd.s32 %v2123, %v890
        %v2135 = vadd.s32 %v2123, %v891
        %v2136 = vadd.s32 %v2123, %v892
        %v2137 = vadd.s32 %v2123, %v893
        %v2138 = vadd.s32 %v2123, %v894
        %v2139 = vadd.s32 %v2123, %v895
        %vm2140 = vcmp.lt.s32.totalorder %v2124, 1000
        %vm2141 = vcmp.lt.s32.totalorder %v2125, 1000
        %vm2142 = vcmp.lt.s32.totalorder %v2126, 1000
        %vm2143 = vcmp.lt.s32.totalorder %v2127, 1000
        %vm2144 = vcmp.lt.s32.totalorder %v2128, 1000
        %vm2145 = vcmp.lt.s32.totalorder %v2129, 1000
        %vm2146 = vcmp.lt.s32.totalorder %v2130, 1000
        %vm2147 = vcmp.lt.s32.totalorder %v2131, 1000
        %vm2148 = vcmp.lt.s32.totalorder %v2132, 1000
        %vm2149 = vcmp.lt.s32.totalorder %v2133, 1000
        %vm2150 = vcmp.lt.s32.totalorder %v2134, 1000
        %vm2151 = vcmp.lt.s32.totalorder %v2135, 1000
        %vm2152 = vcmp.lt.s32.totalorder %v2136, 1000
        %vm2153 = vcmp.lt.s32.totalorder %v2137, 1000
        %vm2154 = vcmp.lt.s32.totalorder %v2138, 1000
        %vm2155 = vcmp.lt.s32.totalorder %v2139, 1000
        %v2156 = vsel %vm2140, %v2106, 0.0
        %v2157 = vsel %vm2141, %v2107, 0.0
        %v2158 = vsel %vm2142, %v2108, 0.0
        %v2159 = vsel %vm2143, %v2109, 0.0
        %v2160 = vsel %vm2144, %v2110, 0.0
        %v2161 = vsel %vm2145, %v2111, 0.0
        %v2162 = vsel %vm2146, %v2112, 0.0
        %v2163 = vsel %vm2147, %v2113, 0.0
        %v2164 = vsel %vm2148, %v2114, 0.0
        %v2165 = vsel %vm2149, %v2115, 0.0
        %v2166 = vsel %vm2150, %v2116, 0.0
        %v2167 = vsel %vm2151, %v2117, 0.0
        %v2168 = vsel %vm2152, %v2118, 0.0
        %v2169 = vsel %vm2153, %v2119, 0.0
        %v2170 = vsel %vm2154, %v2120, 0.0
        %v2171 = vsel %vm2155, %v2121, 0.0
        %v2172 = vsel %vm945, %v2156, 0.0
        %v2173 = vsel %vm945, %v2157, 0.0
        %v2174 = vadd.f32 %v2172, %v2173
        %v2175 = vsel %vm945, %v2158, 0.0
        %v2176 = vadd.f32 %v2174, %v2175
        %v2177 = vsel %vm945, %v2159, 0.0
        %v2178 = vadd.f32 %v2176, %v2177
        %v2179 = vsel %vm945, %v2160, 0.0
        %v2180 = vadd.f32 %v2178, %v2179
        %v2181 = vsel %vm945, %v2161, 0.0
        %v2182 = vadd.f32 %v2180, %v2181
        %v2183 = vsel %vm945, %v2162, 0.0
        %v2184 = vadd.f32 %v2182, %v2183
        %v2185 = vsel %vm945, %v2163, 0.0
        %v2186 = vadd.f32 %v2184, %v2185
        %v2187 = vsel %vm945, %v2164, 0.0
        %v2188 = vadd.f32 %v2186, %v2187
        %v2189 = vsel %vm945, %v2165, 0.0
        %v2190 = vadd.f32 %v2188, %v2189
        %v2191 = vsel %vm945, %v2166, 0.0
        %v2192 = vadd.f32 %v2190, %v2191
        %v2193 = vsel %vm945, %v2167, 0.0
        %v2194 = vadd.f32 %v2192, %v2193
        %v2195 = vsel %vm945, %v2168, 0.0
        %v2196 = vadd.f32 %v2194, %v2195
        %v2197 = vsel %vm945, %v2169, 0.0
        %v2198 = vadd.f32 %v2196, %v2197
        %v2199 = vsel %vm945, %v2170, 0.0
        %v2200 = vadd.f32 %v2198, %v2199
        %v2201 = vsel %vm945, %v2171, 0.0
        %v2202 = vadd.f32 %v2200, %v2201
        %2203 = vadd.xlane.f32.xlu0 %v2202
        %v2204 = vpop.xlane.xlu0 %2203
        %v2205 = vrot.slane %v2204, 4
        %v2206 = vadd.f32 %v2204, %v2205
        %v2207 = vrot.slane %v2206, 2
        %v2208 = vadd.f32 %v2206, %v2207
        %v2209 = vrot.slane %v2208, 1
        %v2210 = vadd.f32 %v2208, %v2209
        %s2211 = vtos %v2210
        %s2212 = sadd.f32 %s1599, %s2211
        %s2213 = scalar_lea.vmem %s286, 24 [#allocation3]
        %v2214 = vld [vmem:[%s2213] sm:$0xff]
        %v2215 = vld [vmem:[%s2213 + $0x20] sm:$0xff]
        %v2216 = vld [vmem:[%s2213 + $0x40] sm:$0xff]
        %v2217 = vld [vmem:[%s2213 + $0x60] sm:$0xff]
        %v2218 = vld [vmem:[%s2213 + $0x80] sm:$0xff]
        %v2219 = vld [vmem:[%s2213 + $0xa0] sm:$0xff]
        %v2220 = vld [vmem:[%s2213 + $0xc0] sm:$0xff]
        %v2221 = vld [vmem:[%s2213 + $0xe0] sm:$0xff]
        %2222 = vxpose.xlu0.b32.start [1/16] %v2214, 128
        %2223 = vxpose.xlu0.b32.cont [2/16] %v2215, 128
        %2224 = vxpose.xlu0.b32.cont [3/16] %v2216, 128
        %2225 = vxpose.xlu0.b32.cont [4/16] %v2217, 128
        %2226 = vxpose.xlu0.b32.cont [5/16] %v2218, 128
        %2227 = vxpose.xlu0.b32.cont [6/16] %v2219, 128
        %2228 = vxpose.xlu0.b32.cont [7/16] %v2220, 128
        %2229 = vxpose.xlu0.b32.cont [8/16] %v2221, 128
        %2230 = vxpose.xlu0.b32.cont [9/16] 0.0, 128
        %2231 = vxpose.xlu0.b32.cont [10/16] 0.0, 128
        %2232 = vxpose.xlu0.b32.cont [11/16] 0.0, 128
        %2233 = vxpose.xlu0.b32.cont [12/16] 0.0, 128
        %2234 = vxpose.xlu0.b32.cont [13/16] 0.0, 128
        %2235 = vxpose.xlu0.b32.cont [14/16] 0.0, 128
        %2236 = vxpose.xlu0.b32.cont [15/16] 0.0, 128
        %2237 = vxpose.xlu0.b32.end [16/16] 0.0, 128
        %v2238 = vpop.trf.xlu0
        %v2239 = vpop.trf.xlu0
        %v2240 = vpop.trf.xlu0
        %v2241 = vpop.trf.xlu0
        %v2242 = vpop.trf.xlu0
        %v2243 = vpop.trf.xlu0
        %v2244 = vpop.trf.xlu0
        %v2245 = vpop.trf.xlu0
        %v2246 = vpop.trf.xlu0
        %v2247 = vpop.trf.xlu0
        %v2248 = vpop.trf.xlu0
        %v2249 = vpop.trf.xlu0
        %v2250 = vpop.trf.xlu0
        %v2251 = vpop.trf.xlu0
        %v2252 = vpop.trf.xlu0
        %v2253 = vpop.trf.xlu0
        %v2255 = vsel %vm384, %v2238, 0
        %v2258 = vsel %vm384, %v2239, 0
        %v2261 = vsel %vm384, %v2240, 0
        %v2264 = vsel %vm384, %v2241, 0
        %v2267 = vsel %vm384, %v2242, 0
        %v2270 = vsel %vm384, %v2243, 0
        %v2273 = vsel %vm384, %v2244, 0
        %v2276 = vsel %vm384, %v2245, 0
        %v2279 = vsel %vm384, %v2246, 0
        %v2282 = vsel %vm384, %v2247, 0
        %v2285 = vsel %vm384, %v2248, 0
        %v2288 = vsel %vm384, %v2249, 0
        %v2291 = vsel %vm384, %v2250, 0
        %v2294 = vsel %vm384, %v2251, 0
        %v2297 = vsel %vm384, %v2252, 0
        %v2300 = vsel %vm384, %v2253, 0
        %2302 = vmatprep.subr.mxu0 0.0
        %2303 = vmatpush1.msra.mxu0 0.0
        %2304 = vmatprep.subr.mxu0 0.0
        %2305 = vmatpush1.msra.mxu0 0.0
        %2306 = vmatprep.subr.mxu0 0.0
        %2307 = vmatpush1.msra.mxu0 0.0
        %2308 = vmatprep.subr.mxu0 0.0
        %2309 = vmatpush1.msra.mxu0 0.0
        %2310 = vmatprep.subr.mxu0 0.0
        %2311 = vmatpush1.msra.mxu0 0.0
        %2312 = vmatprep.subr.mxu0 0.0
        %2313 = vmatpush1.msra.mxu0 0.0
        %2314 = vmatprep.subr.mxu0 0.0
        %2315 = vmatpush1.msra.mxu0 0.0
        %2316 = vmatprep.subr.mxu0 0.0
        %2317 = vmatpush1.msra.mxu0 0.0
        %2318 = vmatprep.subr.mxu0 0.0
        %2319 = vmatpush1.msra.mxu0 %v340
        %2320 = vmatprep.subr.mxu0 0.0
        %2321 = vmatpush1.msra.mxu0 %v339
        %2322 = vmatprep.subr.mxu0 0.0
        %2323 = vmatpush1.msra.mxu0 %v338
        %2324 = vmatprep.subr.mxu0 0.0
        %2325 = vmatpush1.msra.mxu0 %v337
        %2326 = vmatprep.subr.mxu0 0.0
        %2327 = vmatpush1.msra.mxu0 %v336
        %2328 = vmatprep.subr.mxu0 0.0
        %2329 = vmatpush1.msra.mxu0 %v335
        %2330 = vmatprep.subr.mxu0 0.0
        %2331 = vmatpush1.msra.mxu0 %v334
        %2332 = vmatprep.subr.mxu0 0.0
        %2333 = vmatpush1.msra.mxu0 %v333
        %2334 = vmatprep.subr.mxu0 0.0
        %2335 = vmatpush2.msra.mxu0 0.0
        %2336 = vmatprep.subr.mxu0 0.0
        %2337 = vmatpush2.msra.mxu0 0.0
        %2338 = vmatprep.subr.mxu0 0.0
        %2339 = vmatpush2.msra.mxu0 0.0
        %2340 = vmatprep.subr.mxu0 0.0
        %2341 = vmatpush2.msra.mxu0 0.0
        %2342 = vmatprep.subr.mxu0 0.0
        %2343 = vmatpush2.msra.mxu0 0.0
        %2344 = vmatprep.subr.mxu0 0.0
        %2345 = vmatpush2.msra.mxu0 0.0
        %2346 = vmatprep.subr.mxu0 0.0
        %2347 = vmatpush2.msra.mxu0 0.0
        %2348 = vmatprep.subr.mxu0 0.0
        %2349 = vmatpush2.msra.mxu0 0.0
        %2350 = vmatprep.subr.mxu0 0.0
        %2351 = vmatpush2.msra.mxu0 0.0
        %2352 = vmatprep.subr.mxu0 0.0
        %2353 = vmatpush2.msra.mxu0 0.0
        %2354 = vmatprep.subr.mxu0 0.0
        %2355 = vmatpush2.msra.mxu0 0.0
        %2356 = vmatprep.subr.mxu0 0.0
        %2357 = vmatpush2.msra.mxu0 0.0
        %2358 = vmatprep.subr.mxu0 0.0
        %2359 = vmatpush2.msra.mxu0 0.0
        %2360 = vmatprep.subr.mxu0 0.0
        %2361 = vmatpush2.msra.mxu0 0.0
        %2362 = vmatprep.subr.mxu0 0.0
        %2363 = vmatpush2.msra.mxu0 0.0
        %2364 = vmatprep.subr.mxu0 0.0
        %2365 = vmatpush2.msra.mxu0 0.0
        %2366 = vmatprep.mubr.f32.mxu0 0.0
        %2367 = vmatmul.mubr.f32.gmra.mxu0 %v2255
        %v2368 = vpop.f32.mrf.mxu0
        %v2369 = vadd.f32 0.0, %v2368
        %v2370 = vpop.f32.mrf.mxu0
        %2371 = vmatprep.mubr.f32.mxu0 0.0
        %2372 = vmatmul.mubr.f32.gmra.mxu0 %v2258
        %v2373 = vpop.f32.mrf.mxu0
        %v2374 = vadd.f32 0.0, %v2373
        %v2375 = vpop.f32.mrf.mxu0
        %2376 = vmatprep.mubr.f32.mxu0 0.0
        %2377 = vmatmul.mubr.f32.gmra.mxu0 %v2261
        %v2378 = vpop.f32.mrf.mxu0
        %v2379 = vadd.f32 0.0, %v2378
        %v2380 = vpop.f32.mrf.mxu0
        %2381 = vmatprep.mubr.f32.mxu0 0.0
        %2382 = vmatmul.mubr.f32.gmra.mxu0 %v2264
        %v2383 = vpop.f32.mrf.mxu0
        %v2384 = vadd.f32 0.0, %v2383
        %v2385 = vpop.f32.mrf.mxu0
        %2386 = vmatprep.mubr.f32.mxu0 0.0
        %2387 = vmatmul.mubr.f32.gmra.mxu0 %v2267
        %v2388 = vpop.f32.mrf.mxu0
        %v2389 = vadd.f32 0.0, %v2388
        %v2390 = vpop.f32.mrf.mxu0
        %2391 = vmatprep.mubr.f32.mxu0 0.0
        %2392 = vmatmul.mubr.f32.gmra.mxu0 %v2270
        %v2393 = vpop.f32.mrf.mxu0
        %v2394 = vadd.f32 0.0, %v2393
        %v2395 = vpop.f32.mrf.mxu0
        %2396 = vmatprep.mubr.f32.mxu0 0.0
        %2397 = vmatmul.mubr.f32.gmra.mxu0 %v2273
        %v2398 = vpop.f32.mrf.mxu0
        %v2399 = vadd.f32 0.0, %v2398
        %v2400 = vpop.f32.mrf.mxu0
        %2401 = vmatprep.mubr.f32.mxu0 0.0
        %2402 = vmatmul.mubr.f32.gmra.mxu0 %v2276
        %v2403 = vpop.f32.mrf.mxu0
        %v2404 = vadd.f32 0.0, %v2403
        %v2405 = vpop.f32.mrf.mxu0
        %2406 = vmatprep.mubr.f32.mxu0 0.0
        %2407 = vmatmul.mubr.f32.gmra.mxu0 %v2279
        %v2408 = vpop.f32.mrf.mxu0
        %v2409 = vadd.f32 0.0, %v2408
        %v2410 = vpop.f32.mrf.mxu0
        %2411 = vmatprep.mubr.f32.mxu0 0.0
        %2412 = vmatmul.mubr.f32.gmra.mxu0 %v2282
        %v2413 = vpop.f32.mrf.mxu0
        %v2414 = vadd.f32 0.0, %v2413
        %v2415 = vpop.f32.mrf.mxu0
        %2416 = vmatprep.mubr.f32.mxu0 0.0
        %2417 = vmatmul.mubr.f32.gmra.mxu0 %v2285
        %v2418 = vpop.f32.mrf.mxu0
        %v2419 = vadd.f32 0.0, %v2418
        %v2420 = vpop.f32.mrf.mxu0
        %2421 = vmatprep.mubr.f32.mxu0 0.0
        %2422 = vmatmul.mubr.f32.gmra.mxu0 %v2288
        %v2423 = vpop.f32.mrf.mxu0
        %v2424 = vadd.f32 0.0, %v2423
        %v2425 = vpop.f32.mrf.mxu0
        %2426 = vmatprep.mubr.f32.mxu0 0.0
        %2427 = vmatmul.mubr.f32.gmra.mxu0 %v2291
        %v2428 = vpop.f32.mrf.mxu0
        %v2429 = vadd.f32 0.0, %v2428
        %v2430 = vpop.f32.mrf.mxu0
        %2431 = vmatprep.mubr.f32.mxu0 0.0
        %2432 = vmatmul.mubr.f32.gmra.mxu0 %v2294
        %v2433 = vpop.f32.mrf.mxu0
        %v2434 = vadd.f32 0.0, %v2433
        %v2435 = vpop.f32.mrf.mxu0
        %2436 = vmatprep.mubr.f32.mxu0 0.0
        %2437 = vmatmul.mubr.f32.gmra.mxu0 %v2297
        %v2438 = vpop.f32.mrf.mxu0
        %v2439 = vadd.f32 0.0, %v2438
        %v2440 = vpop.f32.mrf.mxu0
        %2441 = vmatprep.mubr.f32.mxu0 0.0
        %2442 = vmatmul.mubr.f32.gmra.mxu0 %v2300
        %v2443 = vpop.f32.mrf.mxu0
        %v2444 = vadd.f32 0.0, %v2443
        %v2445 = vpop.f32.mrf.mxu0
        %2446 = vdwg.mxu0
        %v2447 = vmul.f32 %v2369, 2.0
        %v2448 = vmul.f32 %v2374, 2.0
        %v2449 = vmul.f32 %v2379, 2.0
        %v2450 = vmul.f32 %v2384, 2.0
        %v2451 = vmul.f32 %v2389, 2.0
        %v2452 = vmul.f32 %v2394, 2.0
        %v2453 = vmul.f32 %v2399, 2.0
        %v2454 = vmul.f32 %v2404, 2.0
        %v2455 = vmul.f32 %v2409, 2.0
        %v2456 = vmul.f32 %v2414, 2.0
        %v2457 = vmul.f32 %v2419, 2.0
        %v2458 = vmul.f32 %v2424, 2.0
        %v2459 = vmul.f32 %v2429, 2.0
        %v2460 = vmul.f32 %v2434, 2.0
        %v2461 = vmul.f32 %v2439, 2.0
        %v2462 = vmul.f32 %v2444, 2.0
        %v2463 = vsub.f32 %v2447, %v598
        %v2464 = vsub.f32 %v2448, %v598
        %v2465 = vsub.f32 %v2449, %v598
        %v2466 = vsub.f32 %v2450, %v598
        %v2467 = vsub.f32 %v2451, %v598
        %v2468 = vsub.f32 %v2452, %v598
        %v2469 = vsub.f32 %v2453, %v598
        %v2470 = vsub.f32 %v2454, %v598
        %v2471 = vsub.f32 %v2455, %v598
        %v2472 = vsub.f32 %v2456, %v598
        %v2473 = vsub.f32 %v2457, %v598
        %v2474 = vsub.f32 %v2458, %v598
        %v2475 = vsub.f32 %v2459, %v598
        %v2476 = vsub.f32 %v2460, %v598
        %v2477 = vsub.f32 %v2461, %v598
        %v2478 = vsub.f32 %v2462, %v598
        %2479 = vmax.xlane.f32.xlu0 %v2463
        %v2480 = vpop.xlane.xlu0 %2479
        %2481 = vmax.xlane.f32.xlu0 %v2464
        %v2482 = vpop.xlane.xlu0 %2481
        %2483 = vmax.xlane.f32.xlu0 %v2465
        %v2484 = vpop.xlane.xlu0 %2483
        %2485 = vmax.xlane.f32.xlu0 %v2466
        %v2486 = vpop.xlane.xlu0 %2485
        %2487 = vmax.xlane.f32.xlu0 %v2467
        %v2488 = vpop.xlane.xlu0 %2487
        %2489 = vmax.xlane.f32.xlu0 %v2468
        %v2490 = vpop.xlane.xlu0 %2489
        %2491 = vmax.xlane.f32.xlu0 %v2469
        %v2492 = vpop.xlane.xlu0 %2491
        %2493 = vmax.xlane.f32.xlu0 %v2470
        %v2494 = vpop.xlane.xlu0 %2493
        %2495 = vmax.xlane.f32.xlu0 %v2471
        %v2496 = vpop.xlane.xlu0 %2495
        %2497 = vmax.xlane.f32.xlu0 %v2472
        %v2498 = vpop.xlane.xlu0 %2497
        %2499 = vmax.xlane.f32.xlu0 %v2473
        %v2500 = vpop.xlane.xlu0 %2499
        %2501 = vmax.xlane.f32.xlu0 %v2474
        %v2502 = vpop.xlane.xlu0 %2501
        %2503 = vmax.xlane.f32.xlu0 %v2475
        %v2504 = vpop.xlane.xlu0 %2503
        %2505 = vmax.xlane.f32.xlu0 %v2476
        %v2506 = vpop.xlane.xlu0 %2505
        %2507 = vmax.xlane.f32.xlu0 %v2477
        %v2508 = vpop.xlane.xlu0 %2507
        %2509 = vmax.xlane.f32.xlu0 %v2478
        %v2510 = vpop.xlane.xlu0 %2509
        %v2511 = vsub.f32 %v2463, %v2480
        %v2512 = vsub.f32 %v2464, %v2482
        %v2513 = vsub.f32 %v2465, %v2484
        %v2514 = vsub.f32 %v2466, %v2486
        %v2515 = vsub.f32 %v2467, %v2488
        %v2516 = vsub.f32 %v2468, %v2490
        %v2517 = vsub.f32 %v2469, %v2492
        %v2518 = vsub.f32 %v2470, %v2494
        %v2519 = vsub.f32 %v2471, %v2496
        %v2520 = vsub.f32 %v2472, %v2498
        %v2521 = vsub.f32 %v2473, %v2500
        %v2522 = vsub.f32 %v2474, %v2502
        %v2523 = vsub.f32 %v2475, %v2504
        %v2524 = vsub.f32 %v2476, %v2506
        %v2525 = vsub.f32 %v2477, %v2508
        %v2526 = vsub.f32 %v2478, %v2510
        %v2527 = vmul.f32 %v2511, 1.442695
        %v2528 = vpow.pop %v2527
        %v2529 = vmul.f32 %v2512, 1.442695
        %v2530 = vpow.pop %v2529
        %v2531 = vmul.f32 %v2513, 1.442695
        %v2532 = vpow.pop %v2531
        %v2533 = vmul.f32 %v2514, 1.442695
        %v2534 = vpow.pop %v2533
        %v2535 = vmul.f32 %v2515, 1.442695
        %v2536 = vpow.pop %v2535
        %v2537 = vmul.f32 %v2516, 1.442695
        %v2538 = vpow.pop %v2537
        %v2539 = vmul.f32 %v2517, 1.442695
        %v2540 = vpow.pop %v2539
        %v2541 = vmul.f32 %v2518, 1.442695
        %v2542 = vpow.pop %v2541
        %v2543 = vmul.f32 %v2519, 1.442695
        %v2544 = vpow.pop %v2543
        %v2545 = vmul.f32 %v2520, 1.442695
        %v2546 = vpow.pop %v2545
        %v2547 = vmul.f32 %v2521, 1.442695
        %v2548 = vpow.pop %v2547
        %v2549 = vmul.f32 %v2522, 1.442695
        %v2550 = vpow.pop %v2549
        %v2551 = vmul.f32 %v2523, 1.442695
        %v2552 = vpow.pop %v2551
        %v2553 = vmul.f32 %v2524, 1.442695
        %v2554 = vpow.pop %v2553
        %v2555 = vmul.f32 %v2525, 1.442695
        %v2556 = vpow.pop %v2555
        %v2557 = vmul.f32 %v2526, 1.442695
        %v2558 = vpow.pop %v2557
        %2559 = vadd.xlane.f32.xlu0 %v2528
        %v2560 = vpop.xlane.xlu0 %2559
        %2561 = vadd.xlane.f32.xlu0 %v2530
        %v2562 = vpop.xlane.xlu0 %2561
        %2563 = vadd.xlane.f32.xlu0 %v2532
        %v2564 = vpop.xlane.xlu0 %2563
        %2565 = vadd.xlane.f32.xlu0 %v2534
        %v2566 = vpop.xlane.xlu0 %2565
        %2567 = vadd.xlane.f32.xlu0 %v2536
        %v2568 = vpop.xlane.xlu0 %2567
        %2569 = vadd.xlane.f32.xlu0 %v2538
        %v2570 = vpop.xlane.xlu0 %2569
        %2571 = vadd.xlane.f32.xlu0 %v2540
        %v2572 = vpop.xlane.xlu0 %2571
        %2573 = vadd.xlane.f32.xlu0 %v2542
        %v2574 = vpop.xlane.xlu0 %2573
        %2575 = vadd.xlane.f32.xlu0 %v2544
        %v2576 = vpop.xlane.xlu0 %2575
        %2577 = vadd.xlane.f32.xlu0 %v2546
        %v2578 = vpop.xlane.xlu0 %2577
        %2579 = vadd.xlane.f32.xlu0 %v2548
        %v2580 = vpop.xlane.xlu0 %2579
        %2581 = vadd.xlane.f32.xlu0 %v2550
        %v2582 = vpop.xlane.xlu0 %2581
        %2583 = vadd.xlane.f32.xlu0 %v2552
        %v2584 = vpop.xlane.xlu0 %2583
        %2585 = vadd.xlane.f32.xlu0 %v2554
        %v2586 = vpop.xlane.xlu0 %2585
        %2587 = vadd.xlane.f32.xlu0 %v2556
        %v2588 = vpop.xlane.xlu0 %2587
        %2589 = vadd.xlane.f32.xlu0 %v2558
        %v2590 = vpop.xlane.xlu0 %2589
        %v2591 = vlog2.pop %v2560
        %v2592 = vmul.f32 %v2591, 0.6931472
        %v2593 = vlog2.pop %v2562
        %v2594 = vmul.f32 %v2593, 0.6931472
        %v2595 = vlog2.pop %v2564
        %v2596 = vmul.f32 %v2595, 0.6931472
        %v2597 = vlog2.pop %v2566
        %v2598 = vmul.f32 %v2597, 0.6931472
        %v2599 = vlog2.pop %v2568
        %v2600 = vmul.f32 %v2599, 0.6931472
        %v2601 = vlog2.pop %v2570
        %v2602 = vmul.f32 %v2601, 0.6931472
        %v2603 = vlog2.pop %v2572
        %v2604 = vmul.f32 %v2603, 0.6931472
        %v2605 = vlog2.pop %v2574
        %v2606 = vmul.f32 %v2605, 0.6931472
        %v2607 = vlog2.pop %v2576
        %v2608 = vmul.f32 %v2607, 0.6931472
        %v2609 = vlog2.pop %v2578
        %v2610 = vmul.f32 %v2609, 0.6931472
        %v2611 = vlog2.pop %v2580
        %v2612 = vmul.f32 %v2611, 0.6931472
        %v2613 = vlog2.pop %v2582
        %v2614 = vmul.f32 %v2613, 0.6931472
        %v2615 = vlog2.pop %v2584
        %v2616 = vmul.f32 %v2615, 0.6931472
        %v2617 = vlog2.pop %v2586
        %v2618 = vmul.f32 %v2617, 0.6931472
        %v2619 = vlog2.pop %v2588
        %v2620 = vmul.f32 %v2619, 0.6931472
        %v2621 = vlog2.pop %v2590
        %v2622 = vmul.f32 %v2621, 0.6931472
        %v2623 = vadd.f32 %v2480, %v2592
        %v2624 = vadd.f32 %v2482, %v2594
        %v2625 = vadd.f32 %v2484, %v2596
        %v2626 = vadd.f32 %v2486, %v2598
        %v2627 = vadd.f32 %v2488, %v2600
        %v2628 = vadd.f32 %v2490, %v2602
        %v2629 = vadd.f32 %v2492, %v2604
        %v2630 = vadd.f32 %v2494, %v2606
        %v2631 = vadd.f32 %v2496, %v2608
        %v2632 = vadd.f32 %v2498, %v2610
        %v2633 = vadd.f32 %v2500, %v2612
        %v2634 = vadd.f32 %v2502, %v2614
        %v2635 = vadd.f32 %v2504, %v2616
        %v2636 = vadd.f32 %v2506, %v2618
        %v2637 = vadd.f32 %v2508, %v2620
        %v2638 = vadd.f32 %v2510, %v2622
        %2655 = vrot.lane.b32.xlu0 %v2447, 112
        %v2656 = vpop.permute.xlu0 %2655
        %2657 = vrot.lane.b32.xlu0 %v2448, 112
        %v2658 = vpop.permute.xlu0 %2657
        %2659 = vrot.lane.b32.xlu0 %v2449, 112
        %v2660 = vpop.permute.xlu0 %2659
        %2661 = vrot.lane.b32.xlu0 %v2450, 112
        %v2662 = vpop.permute.xlu0 %2661
        %2663 = vrot.lane.b32.xlu0 %v2451, 112
        %v2664 = vpop.permute.xlu0 %2663
        %2665 = vrot.lane.b32.xlu0 %v2452, 112
        %v2666 = vpop.permute.xlu0 %2665
        %2667 = vrot.lane.b32.xlu0 %v2453, 112
        %v2668 = vpop.permute.xlu0 %2667
        %2669 = vrot.lane.b32.xlu0 %v2454, 112
        %v2670 = vpop.permute.xlu0 %2669
        %2671 = vrot.lane.b32.xlu0 %v2455, 112
        %v2672 = vpop.permute.xlu0 %2671
        %2673 = vrot.lane.b32.xlu0 %v2456, 112
        %v2674 = vpop.permute.xlu0 %2673
        %2675 = vrot.lane.b32.xlu0 %v2457, 112
        %v2676 = vpop.permute.xlu0 %2675
        %2677 = vrot.lane.b32.xlu0 %v2458, 112
        %v2678 = vpop.permute.xlu0 %2677
        %2679 = vrot.lane.b32.xlu0 %v2459, 112
        %v2680 = vpop.permute.xlu0 %2679
        %2681 = vrot.lane.b32.xlu0 %v2460, 112
        %v2682 = vpop.permute.xlu0 %2681
        %2683 = vrot.lane.b32.xlu0 %v2461, 112
        %v2684 = vpop.permute.xlu0 %2683
        %2685 = vrot.lane.b32.xlu0 %v2462, 112
        %v2686 = vpop.permute.xlu0 %2685
        %v2703 = vsub.f32 %v780, %v2656
        %v2704 = vsub.f32 %v780, %v2658
        %v2705 = vsub.f32 %v780, %v2660
        %v2706 = vsub.f32 %v780, %v2662
        %v2707 = vsub.f32 %v780, %v2664
        %v2708 = vsub.f32 %v780, %v2666
        %v2709 = vsub.f32 %v780, %v2668
        %v2710 = vsub.f32 %v780, %v2670
        %v2711 = vsub.f32 %v780, %v2672
        %v2712 = vsub.f32 %v780, %v2674
        %v2713 = vsub.f32 %v780, %v2676
        %v2714 = vsub.f32 %v780, %v2678
        %v2715 = vsub.f32 %v780, %v2680
        %v2716 = vsub.f32 %v780, %v2682
        %v2717 = vsub.f32 %v780, %v2684
        %v2718 = vsub.f32 %v780, %v2686
        %v2719 = vadd.f32 %v2703, %v2623
        %v2720 = vadd.f32 %v2704, %v2624
        %v2721 = vadd.f32 %v2705, %v2625
        %v2722 = vadd.f32 %v2706, %v2626
        %v2723 = vadd.f32 %v2707, %v2627
        %v2724 = vadd.f32 %v2708, %v2628
        %v2725 = vadd.f32 %v2709, %v2629
        %v2726 = vadd.f32 %v2710, %v2630
        %v2727 = vadd.f32 %v2711, %v2631
        %v2728 = vadd.f32 %v2712, %v2632
        %v2729 = vadd.f32 %v2713, %v2633
        %v2730 = vadd.f32 %v2714, %v2634
        %v2731 = vadd.f32 %v2715, %v2635
        %v2732 = vadd.f32 %v2716, %v2636
        %v2733 = vadd.f32 %v2717, %v2637
        %v2734 = vadd.f32 %v2718, %v2638
        %s2735 = sadd.s32 %s343, 384
        %v2736 = vstv %s2735
        %v2737 = vadd.s32 %v2736, %v880
        %v2738 = vadd.s32 %v2736, %v881
        %v2739 = vadd.s32 %v2736, %v882
        %v2740 = vadd.s32 %v2736, %v883
        %v2741 = vadd.s32 %v2736, %v884
        %v2742 = vadd.s32 %v2736, %v885
        %v2743 = vadd.s32 %v2736, %v886
        %v2744 = vadd.s32 %v2736, %v887
        %v2745 = vadd.s32 %v2736, %v888
        %v2746 = vadd.s32 %v2736, %v889
        %v2747 = vadd.s32 %v2736, %v890
        %v2748 = vadd.s32 %v2736, %v891
        %v2749 = vadd.s32 %v2736, %v892
        %v2750 = vadd.s32 %v2736, %v893
        %v2751 = vadd.s32 %v2736, %v894
        %v2752 = vadd.s32 %v2736, %v895
        %vm2753 = vcmp.lt.s32.totalorder %v2737, 1000
        %vm2754 = vcmp.lt.s32.totalorder %v2738, 1000
        %vm2755 = vcmp.lt.s32.totalorder %v2739, 1000
        %vm2756 = vcmp.lt.s32.totalorder %v2740, 1000
        %vm2757 = vcmp.lt.s32.totalorder %v2741, 1000
        %vm2758 = vcmp.lt.s32.totalorder %v2742, 1000
        %vm2759 = vcmp.lt.s32.totalorder %v2743, 1000
        %vm2760 = vcmp.lt.s32.totalorder %v2744, 1000
        %vm2761 = vcmp.lt.s32.totalorder %v2745, 1000
        %vm2762 = vcmp.lt.s32.totalorder %v2746, 1000
        %vm2763 = vcmp.lt.s32.totalorder %v2747, 1000
        %vm2764 = vcmp.lt.s32.totalorder %v2748, 1000
        %vm2765 = vcmp.lt.s32.totalorder %v2749, 1000
        %vm2766 = vcmp.lt.s32.totalorder %v2750, 1000
        %vm2767 = vcmp.lt.s32.totalorder %v2751, 1000
        %vm2768 = vcmp.lt.s32.totalorder %v2752, 1000
        %v2769 = vsel %vm2753, %v2719, 0.0
        %v2770 = vsel %vm2754, %v2720, 0.0
        %v2771 = vsel %vm2755, %v2721, 0.0
        %v2772 = vsel %vm2756, %v2722, 0.0
        %v2773 = vsel %vm2757, %v2723, 0.0
        %v2774 = vsel %vm2758, %v2724, 0.0
        %v2775 = vsel %vm2759, %v2725, 0.0
        %v2776 = vsel %vm2760, %v2726, 0.0
        %v2777 = vsel %vm2761, %v2727, 0.0
        %v2778 = vsel %vm2762, %v2728, 0.0
        %v2779 = vsel %vm2763, %v2729, 0.0
        %v2780 = vsel %vm2764, %v2730, 0.0
        %v2781 = vsel %vm2765, %v2731, 0.0
        %v2782 = vsel %vm2766, %v2732, 0.0
        %v2783 = vsel %vm2767, %v2733, 0.0
        %v2784 = vsel %vm2768, %v2734, 0.0
        %v2785 = vsel %vm945, %v2769, 0.0
        %v2786 = vsel %vm945, %v2770, 0.0
        %v2787 = vadd.f32 %v2785, %v2786
        %v2788 = vsel %vm945, %v2771, 0.0
        %v2789 = vadd.f32 %v2787, %v2788
        %v2790 = vsel %vm945, %v2772, 0.0
        %v2791 = vadd.f32 %v2789, %v2790
        %v2792 = vsel %vm945, %v2773, 0.0
        %v2793 = vadd.f32 %v2791, %v2792
        %v2794 = vsel %vm945, %v2774, 0.0
        %v2795 = vadd.f32 %v2793, %v2794
        %v2796 = vsel %vm945, %v2775, 0.0
        %v2797 = vadd.f32 %v2795, %v2796
        %v2798 = vsel %vm945, %v2776, 0.0
        %v2799 = vadd.f32 %v2797, %v2798
        %v2800 = vsel %vm945, %v2777, 0.0
        %v2801 = vadd.f32 %v2799, %v2800
        %v2802 = vsel %vm945, %v2778, 0.0
        %v2803 = vadd.f32 %v2801, %v2802
        %v2804 = vsel %vm945, %v2779, 0.0
        %v2805 = vadd.f32 %v2803, %v2804
        %v2806 = vsel %vm945, %v2780, 0.0
        %v2807 = vadd.f32 %v2805, %v2806
        %v2808 = vsel %vm945, %v2781, 0.0
        %v2809 = vadd.f32 %v2807, %v2808
        %v2810 = vsel %vm945, %v2782, 0.0
        %v2811 = vadd.f32 %v2809, %v2810
        %v2812 = vsel %vm945, %v2783, 0.0
        %v2813 = vadd.f32 %v2811, %v2812
        %v2814 = vsel %vm945, %v2784, 0.0
        %v2815 = vadd.f32 %v2813, %v2814
        %2816 = vadd.xlane.f32.xlu0 %v2815
        %v2817 = vpop.xlane.xlu0 %2816
        %v2818 = vrot.slane %v2817, 4
        %v2819 = vadd.f32 %v2817, %v2818
        %v2820 = vrot.slane %v2819, 2
        %v2821 = vadd.f32 %v2819, %v2820
        %v2822 = vrot.slane %v2821, 1
        %v2823 = vadd.f32 %v2821, %v2822
        %s2824 = vtos %v2823
        %s2825 = sadd.f32 %s2212, %s2824
        %v2826 = vld [vmem:[#allocation2] sm:$0x1]
        %v2827 = vstv %s2825
        %v2828 = vadd.f32 %v2826, %v2827
        %vm2829 = vcmask 0
        %2830 = vst.msk [vmem:[#allocation2] sm:$0x1] %vm2829, %v2828
        %p2831 = scmp.eq.s32.totalorder %s20, 1
        // Predicated region
        $region64: #{multi_domain_loss.3} parent=54 // pred_check
          %p2832 = pneg %p2831
        $region65: #{multi_domain_loss.3} parent=54 // pred_check_branch
          %2834 = sbr.rel (%p2832) target = $region67
        $region66: #{multi_domain_loss.3} parent=54 // pred_region
          %v2835 = vld [vmem:[#allocation2] sm:$0x1]
          %v2836 = vmul.f32 %v2835, 0.001
          %2837 = vst.msk [vmem:[%s326] sm:$0x1] %vm2829, %v2836
        $region67: #{multi_domain_loss.3} parent=54 // pred_fallthru
          _
        %p2838 = scmp.lt.s32.totalorder %s19, 3
        %s2839 = scalar_select %p2838, %s19, 3
        %s2840 = scalar_lea.vmem %s4, %s2839
        // Predicated region
        $region68: #{multi_domain_loss.3} parent=54 // pred_check
          %p2841 = pneg %p146
        $region69: #{multi_domain_loss.3} parent=54 // pred_check_branch
          %2843 = sbr.rel (%p2841) target = $region71
        $region70: #{multi_domain_loss.3} parent=54 // pred_region
          _
        $region71: #{multi_domain_loss.3} parent=54 // pred_fallthru
          _
      $region55: #{multi_domain_loss.3} parent=5 // pred_fallthru
        _
      %p2844 = scmp.le.s32.totalorder 2, %s10
      // Predicated region
      $region72: #{multi_domain_loss.3} parent=5 // pred_check
        %p2845 = pneg %p2844
      $region73: #{multi_domain_loss.3} parent=5 // pred_check_branch
        %2847 = sbr.rel (%p2845) target = $region75
      $region74: #{multi_domain_loss.3} parent=5 // pred_region
        %s2848 = ssub.s32 %s10, 2
        // Predicated region
        $region76: #{multi_domain_loss.3} parent=74 // pred_check
          %p2849 = pneg %p152
        $region77: #{multi_domain_loss.3} parent=74 // pred_check_branch
          %2851 = sbr.rel (%p2849) target = $region79
        $region78: #{multi_domain_loss.3} parent=74 // pred_region
          %p2852 = scmp.lt.s32.totalorder %s21, 3
          %s2853 = scalar_select %p2852, %s21, 3
          %s2854 = scalar_lea.vmem %s4, %s2853
        $region79: #{multi_domain_loss.3} parent=74 // pred_fallthru
          _
      $region75: #{multi_domain_loss.3} parent=5 // pred_fallthru
        _
    $region6: #{multi_domain_loss.3} parent=1 // loop_footer
      %s14 = sadd.s32 1, %s10
    $region7: #{multi_domain_loss.3} parent=1 // loop_footer_branch
      %9 = sbr.rel target = $region3
    $region8: #{multi_domain_loss.3} parent=1 // loop_exit
      _

</llo_original>
